<compile_context>
chip_gen: v6e
topology: v6e:2x2x1
jax: 0.10.0
libtpu: 0.0.40
codegen_flags: <defaults>
</compile_context>

<pallas_src>
import math
import functools

import jax
import jax.numpy as jnp
from jax.experimental import pallas as pl
from jax.experimental.pallas import tpu as pltpu


# -----------------------------------------------------------------------------
# Kernel: one (batch-block, layer) grid step of the decoder stack
# -----------------------------------------------------------------------------
def _decoder_layer_kernel(nhead, mm_dtype,
                          x_ref, pos_ref,
                          a_wq, a_bq, a_wkv, a_bkv, a_wo, a_bo,
                          ff_w1, ff_b1, ff_w2, ff_b2,
                          ln_w, ln_b,
                          out_ref,
                          x_scr, mem_scr):
    Bb, S, D = x_ref.shape
    H = nhead
    Dh = D // H
    M = Bb * S                      # batch folded into the matmul M dimension
    f32 = jnp.float32
    layer = pl.program_id(1)
    n_layers = pl.num_programs(1)

    def _ln(v, g, b, eps=1e-5):
        mu = jnp.mean(v, axis=-1, keepdims=True)
        c = v - mu
        var = jnp.mean(c * c, axis=-1, keepdims=True)
        return c * jax.lax.rsqrt(var + eps) * g + b

    def _softmax(s):                # exact softmax (f32 in / f32 out)
        m = jnp.max(s, axis=-1, keepdims=True)
        e = jnp.exp(s - m)
        return e / jnp.sum(e, axis=-1, keepdims=True)

    def _mha(q_src_mm, kv_src_mm, i):
        # Fused, lane-dense projections: one (M,D)x(D,D) for Q and one
        # (M,D)x(D,2D) for K|V.  1/sqrt(Dh) is already folded into Wq/bq.
        q = jnp.dot(q_src_mm, a_wq[0, i], preferred_element_type=f32) + a_bq[0, i]
        kv = jnp.dot(kv_src_mm, a_wkv[0, i], preferred_element_type=f32) + a_bkv[0, i]
        ctx = []
        # Per-head score/context: the K=Dh contraction is intrinsically narrow,
        # so this small (nhead) Python loop only affects dispatch count.
        # TODO(synk): batch heads via a (Bb*H, S, Dh) fold once the required
        # 4-D transpose/relayout is worth it at production shapes.
        for h in range(H):
            qh = q[:, h * Dh:(h + 1) * Dh].reshape(Bb, S, Dh).astype(mm_dtype)
            kh = kv[:, h * Dh:(h + 1) * Dh].reshape(Bb, S, Dh).astype(mm_dtype)
            vh = kv[:, D + h * Dh:D + (h + 1) * Dh].reshape(Bb, S, Dh).astype(mm_dtype)
            s = jnp.einsum('bqd,bkd->bqk', qh, kh, preferred_element_type=f32)
            p = _softmax(s).astype(mm_dtype)
            oh = jnp.einsum('bqk,bkd->bqd', p, vh, preferred_element_type=f32)
            ctx.append(oh.reshape(M, Dh))
        ctx = jnp.concatenate(ctx, axis=-1).astype(mm_dtype)       # (M, D)
        # Fused output projection: single (M,D)x(D,D) matmul.
        return jnp.dot(ctx, a_wo[0, i], preferred_element_type=f32) + a_bo[0, i]

    # Layer 0: build tgt = memory + pos_embed[:S]; keep the f32 residual stream
    # and the fixed cross-attention memory resident in VMEM scratch across l.
    @pl.when(layer == 0)
    def _():
        x0 = (x_ref[...].astype(f32) + pos_ref[...].astype(f32)).reshape(M, D)
        x_scr[...] = x0
        mem_scr[...] = x0.astype(mm_dtype)

    x = x_scr[...]

    # --- self-attention + add & norm (norm_first=False) ---
    x_mm = x.astype(mm_dtype)
    sa = _mha(x_mm, x_mm, 0)
    x = _ln(x + sa, ln_w[0, 0], ln_b[0, 0])

    # --- cross-attention over the fixed memory + add & norm ---
    ca = _mha(x.astype(mm_dtype), mem_scr[...], 1)
    x = _ln(x + ca, ln_w[0, 1], ln_b[0, 1])

    # --- ReLU FFN + add & norm ---
    h1 = jnp.maximum(
        jnp.dot(x.astype(mm_dtype), ff_w1[0], preferred_element_type=f32) + ff_b1[0],
        0.0)
    ffo = jnp.dot(h1.astype(mm_dtype), ff_w2[0], preferred_element_type=f32) + ff_b2[0]
    x = _ln(x + ffo, ln_w[0, 2], ln_b[0, 2])

    x_scr[...] = x

    @pl.when(layer == n_layers - 1)
    def _():
        out_ref[...] = x.reshape(Bb, S, D).astype(out_ref.dtype)


# -----------------------------------------------------------------------------
# pallas_call wrapper
# -----------------------------------------------------------------------------
def _layer_block_spec(arr):
    """One layer's weight slab per grid step, indexed by the (inner) layer axis.
    Default double-buffering prefetches layer l+1 weights behind layer l."""
    nd = arr.ndim
    block = (1,) + tuple(arr.shape[1:])
    return pl.BlockSpec(block, lambda b, l, _nd=nd: (l,) + (0,) * (_nd - 1))


def _num_tensorcores():
    # v7x has 2 TensorCores per chip; v5e/v6e have 1.  On single-core chips the
    # grid is a sequential loop, so splitting the batch only shrinks M.
    try:
        kind = jax.devices()[0].device_kind.lower()
    except Exception:
        return 1
    return 2 if "v7" in kind else 1


def semantic_decoder_forward(memory, pos_embed, params, *, nhead, num_layers,
                             matmul_dtype=jnp.bfloat16, batch_blocks=None):
    B, S, D = memory.shape
    assert S <= pos_embed.shape[0], "seq_len exceeds max_seq_len"
    assert D % nhead == 0

    nb = _num_tensorcores() if batch_blocks is None else batch_blocks
    nb = max(1, min(nb, B))
    while B % nb != 0:
        nb -= 1
    Bb = B // nb

    pos = pos_embed[:S]
    weight_names = ["attn_wq", "attn_bq", "attn_wkv", "attn_bkv", "attn_wo",
                    "attn_bo", "ff_w1", "ff_b1", "ff_w2", "ff_b2", "ln_w", "ln_b"]
    weights = [params[k] for k in weight_names]
    F = params["ff_w1"].shape[-1]

    act_spec = pl.BlockSpec((Bb, S, D), lambda b, l: (b, 0, 0))
    pos_spec = pl.BlockSpec((S, D), lambda b, l: (0, 0))
    in_specs = [act_spec, pos_spec] + [_layer_block_spec(w) for w in weights]

    # Explicit VMEM budget: double-buffered activation/pos/output blocks, a
    # double-buffered single-layer weight slab, the f32+bf16 residual scratch,
    # and a generous allowance for traced temporaries (QKV, scores, FFN hidden).
    itemsize = jnp.dtype(matmul_dtype).itemsize
    per_layer_w = sum(math.prod(w.shape[1:]) * w.dtype.itemsize for w in weights)
    act_bytes = Bb * S * D * memory.dtype.itemsize
    pos_bytes = S * D * pos.dtype.itemsize
    scratch_bytes = Bb * S * D * (4 + itemsize)
    interm_bytes = Bb * S * (3 * D + F) * 4 * 3 + Bb * S * S * 4 * 2
    vmem_limit = (4 * act_bytes + 2 * pos_bytes + 2 * per_layer_w
                  + scratch_bytes + interm_bytes + (8 << 20))
    vmem_limit = int(max(32 << 20, min(vmem_limit, 64 << 20)))  # valid on v5e/v6e/v7x

    kernel = functools.partial(_decoder_layer_kernel, nhead, matmul_dtype)
    return pl.pallas_call(
        kernel,
        out_shape=jax.ShapeDtypeStruct((B, S, D), memory.dtype),
        grid_spec=pltpu.PrefetchScalarGridSpec(
            num_scalar_prefetch=0,
            grid=(nb, num_layers),
            in_specs=in_specs,
            out_specs=act_spec,
            scratch_shapes=[pltpu.VMEM((Bb * S, D), jnp.float32),   # residual x
                            pltpu.VMEM((Bb * S, D), matmul_dtype)]),  # fixed memory
        compiler_params=pltpu.CompilerParams(
            dimension_semantics=("parallel", "arbitrary"),
            vmem_limit_bytes=vmem_limit),
    )(memory, pos, *weights)


# -----------------------------------------------------------------------------
# Parameter construction: PyTorch layout -> kernel layout (host side, one time)
# -----------------------------------------------------------------------------
def _init_stacked_params(key, num_layers, D, F, H, matmul_dtype):
    """Synthetic weights in PyTorch layout, converted to the kernel layout:
    pre-transposed for `x @ W`, Q scale folded, [self, cross] stacked per layer."""
    Dh = D // H
    scale = 1.0 / math.sqrt(Dh)
    f32 = jnp.float32
    s = 0.02
    names = ["attn_wq", "attn_bq", "attn_wkv", "attn_bkv", "attn_wo", "attn_bo",
             "ff_w1", "ff_b1", "ff_w2", "ff_b2"]
    acc = {k: [] for k in names}

    def rnd(k, shape):
        return jax.random.normal(k, shape, f32) * s

    def attn(ks):
        in_w, in_b = rnd(ks[0], (3 * D, D)), rnd(ks[1], (3 * D,))
        out_w, out_b = rnd(ks[2], (D, D)), rnd(ks[3], (D,))
        wq = in_w[:D].T * scale               # fold 1/sqrt(Dh) into Q projection
        bq = (in_b[:D] * scale).reshape(1, D)
        wkv = in_w[D:].T                      # (D, 2D), columns [K | V]
        bkv = in_b[D:].reshape(1, 2 * D)
        return wq, bq, wkv, bkv, out_w.T, out_b.reshape(1, D)

    for lk in jax.random.split(key, num_layers):
        ks = jax.random.split(lk, 12)
        sa = attn(ks[0:4])
        ca = attn(ks[4:8])
        for idx, name in enumerate(["attn_wq", "attn_bq", "attn_wkv",
                                    "attn_bkv", "attn_wo", "attn_bo"]):
            acc[name].append(jnp.stack([sa[idx], ca[idx]]))   # [self, cross]
        w1, b1 = rnd(ks[8], (F, D)), rnd(ks[9], (F,))
        w2, b2 = rnd(ks[10], (D, F)), rnd(ks[11], (D,))
        acc["ff_w1"].append(w1.T)                             # (D, F)
        acc["ff_b1"].append(b1.reshape(1, F))
        acc["ff_w2"].append(w2.T)                             # (F, D)
        acc["ff_b2"].append(b2.reshape(1, D))

    params = {k: jnp.stack(v) for k, v in acc.items()}
    # Matmul weights stored in the MXU dtype; biases / LayerNorm params stay f32.
    for k in ["attn_wq", "attn_wkv", "attn_wo", "ff_w1", "ff_w2"]:
        params[k] = params[k].astype(matmul_dtype)
    params["ln_w"] = jnp.ones((num_layers, 3, 1, D), f32)
    params["ln_b"] = jnp.zeros((num_layers, 3, 1, D), f32)
    return params


# -----------------------------------------------------------------------------
# Model wrapper
# -----------------------------------------------------------------------------
class SemanticDecoderPallas:
    """Pallas TPU port of SemanticDecoder.forward (returns [B, S, input_dim],
    matching the PyTorch module whose forward returns the raw decoder output)."""

    def __init__(self, input_dim, vocab_size, ffn_dim=2024, max_seq_len=64,
                 nhead=4, num_layers=4, pad_token_id=0, key=None,
                 matmul_dtype=jnp.bfloat16, batch_blocks=None):
        assert input_dim % nhead == 0
        self.vocab_size = vocab_size          # unused by forward (as in PyTorch)
        self.pad_token_id = pad_token_id
        self.nhead = nhead
        self.num_layers = num_layers
        self.matmul_dtype = matmul_dtype
        self.batch_blocks = batch_blocks      # None -> auto: 2 on v7x, else 1
        key = jax.random.PRNGKey(0) if key is None else key
        kpos, kw = jax.random.split(key)
        self.pos_embed = jax.random.normal(kpos, (max_seq_len, input_dim), jnp.float32)
        self.params = _init_stacked_params(kw, num_layers, input_dim, ffn_dim,
                                           nhead, matmul_dtype)

    def __call__(self, memory, input_lengths=None, memory_key_padding_mask=None):
        # TODO(synk): memory_key_padding_mask / input_lengths not implemented
        # (only the default masks=None path of the PyTorch forward is reproduced).
        # TODO(synk): optional lane-padding of D/F to multiples of 128 (with a
        # masked LayerNorm) is left out to keep exact semantics at arbitrary D.
        return semantic_decoder_forward(
            memory, self.pos_embed, self.params,
            nhead=self.nhead, num_layers=self.num_layers,
            matmul_dtype=self.matmul_dtype, batch_blocks=self.batch_blocks)


# -----------------------------------------------------------------------------
# Demo
# -----------------------------------------------------------------------------
if __name__ == "__main__":
    key = jax.random.PRNGKey(0)
    B, S, D = 2, 8, 32
    model = SemanticDecoderPallas(input_dim=D, vocab_size=100, ffn_dim=64,
                                  max_seq_len=16, nhead=4, num_layers=2, key=key)
    memory = jax.random.normal(jax.random.fold_in(key, 999), (B, S, D), jnp.float32)
    out = model(memory)
    jax.block_until_ready(out)
    assert out.shape == (B, S, D) and out.dtype == jnp.float32
    assert bool(jnp.all(jnp.isfinite(out)))
    print("KERNEL_OK")
</pallas_src>

<mosaic_0001>
module attributes {stable_mosaic.version = 11 : i64} {
  func.func @_decoder_layer_kernel(%arg0: i32, %arg1: i32, %arg2: memref<2x8x32xf32, #tpu.memory_space<vmem>>, %arg3: memref<8x32xf32, #tpu.memory_space<vmem>>, %arg4: memref<1x2x32x32xbf16, #tpu.memory_space<vmem>>, %arg5: memref<1x2x1x32xf32, #tpu.memory_space<vmem>>, %arg6: memref<1x2x32x64xbf16, #tpu.memory_space<vmem>>, %arg7: memref<1x2x1x64xf32, #tpu.memory_space<vmem>>, %arg8: memref<1x2x32x32xbf16, #tpu.memory_space<vmem>>, %arg9: memref<1x2x1x32xf32, #tpu.memory_space<vmem>>, %arg10: memref<1x32x64xbf16, #tpu.memory_space<vmem>>, %arg11: memref<1x1x64xf32, #tpu.memory_space<vmem>>, %arg12: memref<1x64x32xbf16, #tpu.memory_space<vmem>>, %arg13: memref<1x1x32xf32, #tpu.memory_space<vmem>>, %arg14: memref<1x3x1x32xf32, #tpu.memory_space<vmem>>, %arg15: memref<1x3x1x32xf32, #tpu.memory_space<vmem>>, %arg16: memref<2x8x32xf32, #tpu.memory_space<vmem>>, %arg17: memref<16x32xf32, #tpu.memory_space<vmem>>, %arg18: memref<16x32xbf16, #tpu.memory_space<vmem>>) attributes {dimension_semantics = [#tpu.dimension_semantics<parallel>, #tpu.dimension_semantics<arbitrary>], iteration_bounds = array<i64: 1, 2>, scalar_prefetch = 0 : i64, scratch_operands = 2 : i64, tpu.core_type = #tpu.core_type<tc>, window_params = [{transform_indices = @transform_0, window_bounds = array<i64: 2, 8, 32>}, {pipeline_mode = #tpu.pipeline_mode<synchronous>, transform_indices = @transform_1, window_bounds = array<i64: 8, 32>}, {transform_indices = @transform_2, window_bounds = array<i64: 1, 2, 32, 32>}, {transform_indices = @transform_3, window_bounds = array<i64: 1, 2, 1, 32>}, {transform_indices = @transform_4, window_bounds = array<i64: 1, 2, 32, 64>}, {transform_indices = @transform_5, window_bounds = array<i64: 1, 2, 1, 64>}, {transform_indices = @transform_6, window_bounds = array<i64: 1, 2, 32, 32>}, {transform_indices = @transform_7, window_bounds = array<i64: 1, 2, 1, 32>}, {transform_indices = @transform_8, window_bounds = array<i64: 1, 32, 64>}, {transform_indices = @transform_9, window_bounds = array<i64: 1, 1, 64>}, {transform_indices = @transform_10, window_bounds = array<i64: 1, 64, 32>}, {transform_indices = @transform_11, window_bounds = array<i64: 1, 1, 32>}, {transform_indices = @transform_12, window_bounds = array<i64: 1, 3, 1, 32>}, {transform_indices = @transform_13, window_bounds = array<i64: 1, 3, 1, 32>}, {transform_indices = @transform_14, window_bounds = array<i64: 2, 8, 32>}]} {
    %c0_i32 = arith.constant 0 : i32
    %0 = arith.cmpi eq, %arg1, %c0_i32 : i32
    %1 = arith.extui %0 : i1 to i32
    %c0_i32_0 = arith.constant 0 : i32
    %2 = arith.cmpi ne, %1, %c0_i32_0 : i32
    scf.if %2 {
      %c0_144 = arith.constant 0 : index
      %c0_145 = arith.constant 0 : index
      %c0_146 = arith.constant 0 : index
      %326 = vector.load %arg2[%c0_144, %c0_145, %c0_146] : memref<2x8x32xf32, #tpu.memory_space<vmem>>, vector<2x8x32xf32>
      %c0_147 = arith.constant 0 : index
      %c0_148 = arith.constant 0 : index
      %327 = vector.load %arg3[%c0_147, %c0_148] : memref<8x32xf32, #tpu.memory_space<vmem>>, vector<8x32xf32>
      %328 = vector.shape_cast %327 : vector<8x32xf32> to vector<1x8x32xf32>
      %329 = vector.broadcast %328 : vector<1x8x32xf32> to vector<2x8x32xf32>
      %330 = arith.addf %326, %329 : vector<2x8x32xf32>
      %331 = vector.shape_cast %330 : vector<2x8x32xf32> to vector<16x32xf32>
      %c0_149 = arith.constant 0 : index
      %c0_150 = arith.constant 0 : index
      %332 = vector.load %arg17[%c0_149, %c0_150] : memref<16x32xf32, #tpu.memory_space<vmem>>, vector<16x32xf32>
      tpu.vector_store %arg17[%c0_149, %c0_150], %331 {strides = array<i32>} : memref<16x32xf32, #tpu.memory_space<vmem>>, vector<16x32xf32>,
      %333 = arith.truncf %331 : vector<16x32xf32> to vector<16x32xbf16>
      %c0_151 = arith.constant 0 : index
      %c0_152 = arith.constant 0 : index
      %334 = vector.load %arg18[%c0_151, %c0_152] : memref<16x32xbf16, #tpu.memory_space<vmem>>, vector<16x32xbf16>
      tpu.vector_store %arg18[%c0_151, %c0_152], %333 {strides = array<i32>} : memref<16x32xbf16, #tpu.memory_space<vmem>>, vector<16x32xbf16>,
    } else {
    }
    %c0 = arith.constant 0 : index
    %c0_1 = arith.constant 0 : index
    %3 = vector.load %arg17[%c0, %c0_1] : memref<16x32xf32, #tpu.memory_space<vmem>>, vector<16x32xf32>
    %4 = arith.truncf %3 : vector<16x32xf32> to vector<16x32xbf16>
    %c0_2 = arith.constant 0 : index
    %c0_3 = arith.constant 0 : index
    %c0_4 = arith.constant 0 : index
    %c0_5 = arith.constant 0 : index
    %5 = vector.load %arg4[%c0_2, %c0_3, %c0_4, %c0_5] : memref<1x2x32x32xbf16, #tpu.memory_space<vmem>>, vector<1x1x32x32xbf16>
    %6 = vector.shape_cast %5 : vector<1x1x32x32xbf16> to vector<32x32xbf16>
    %cst = arith.constant dense<0.000000e+00> : vector<16x32xf32>
    %7 = tpu.matmul %4, %6, %cst {dimension_numbers = #tpu.dot_dimension_numbers<[1], [0], [0], [1], [0, 0, 1, 1], [], []>} : vector<16x32xbf16>, vector<32x32xbf16>, vector<16x32xf32> -> vector<16x32xf32>
    %c0_6 = arith.constant 0 : index
    %c0_7 = arith.constant 0 : index
    %c0_8 = arith.constant 0 : index
    %c0_9 = arith.constant 0 : index
    %8 = vector.load %arg5[%c0_6, %c0_7, %c0_8, %c0_9] : memref<1x2x1x32xf32, #tpu.memory_space<vmem>>, vector<1x1x1x32xf32>
    %9 = vector.shape_cast %8 : vector<1x1x1x32xf32> to vector<1x32xf32>
    %10 = vector.broadcast %9 : vector<1x32xf32> to vector<16x32xf32>
    %11 = arith.addf %7, %10 : vector<16x32xf32>
    %c0_10 = arith.constant 0 : index
    %c0_11 = arith.constant 0 : index
    %c0_12 = arith.constant 0 : index
    %c0_13 = arith.constant 0 : index
    %12 = vector.load %arg6[%c0_10, %c0_11, %c0_12, %c0_13] : memref<1x2x32x64xbf16, #tpu.memory_space<vmem>>, vector<1x1x32x64xbf16>
    %13 = vector.shape_cast %12 : vector<1x1x32x64xbf16> to vector<32x64xbf16>
    %cst_14 = arith.constant dense<0.000000e+00> : vector<16x64xf32>
    %14 = tpu.matmul %4, %13, %cst_14 {dimension_numbers = #tpu.dot_dimension_numbers<[1], [0], [0], [1], [0, 0, 1, 1], [], []>} : vector<16x32xbf16>, vector<32x64xbf16>, vector<16x64xf32> -> vector<16x64xf32>
    %c0_15 = arith.constant 0 : index
    %c0_16 = arith.constant 0 : index
    %c0_17 = arith.constant 0 : index
    %c0_18 = arith.constant 0 : index
    %15 = vector.load %arg7[%c0_15, %c0_16, %c0_17, %c0_18] : memref<1x2x1x64xf32, #tpu.memory_space<vmem>>, vector<1x1x1x64xf32>
    %16 = vector.shape_cast %15 : vector<1x1x1x64xf32> to vector<1x64xf32>
    %17 = vector.broadcast %16 : vector<1x64xf32> to vector<16x64xf32>
    %18 = arith.addf %14, %17 : vector<16x64xf32>
    %19 = vector.extract_strided_slice %11 {offsets = [0, 0], sizes = [16, 8], strides = [1, 1]} : vector<16x32xf32> to vector<16x8xf32>
    %20 = vector.shape_cast %19 : vector<16x8xf32> to vector<2x8x8xf32>
    %21 = arith.truncf %20 : vector<2x8x8xf32> to vector<2x8x8xbf16>
    %22 = vector.extract_strided_slice %18 {offsets = [0, 0], sizes = [16, 8], strides = [1, 1]} : vector<16x64xf32> to vector<16x8xf32>
    %23 = vector.shape_cast %22 : vector<16x8xf32> to vector<2x8x8xf32>
    %24 = arith.truncf %23 : vector<2x8x8xf32> to vector<2x8x8xbf16>
    %25 = vector.extract_strided_slice %18 {offsets = [0, 32], sizes = [16, 8], strides = [1, 1]} : vector<16x64xf32> to vector<16x8xf32>
    %26 = vector.shape_cast %25 : vector<16x8xf32> to vector<2x8x8xf32>
    %27 = arith.truncf %26 : vector<2x8x8xf32> to vector<2x8x8xbf16>
    "tpu.trace_start"() <{level = 10 : i32, message = "bqd,bkd->bqk"}> : () -> ()
    %cst_19 = arith.constant dense<0.000000e+00> : vector<2x8x8xf32>
    %28 = tpu.matmul %21, %24, %cst_19 {dimension_numbers = #tpu.dot_dimension_numbers<[2], [2], [1], [1], [0, 0, 0, 1, 1, 1], [0], [0]>} : vector<2x8x8xbf16>, vector<2x8x8xbf16>, vector<2x8x8xf32> -> vector<2x8x8xf32>
    "tpu.trace_stop"() : () -> ()
    %cst_20 = arith.constant dense<0xFF800000> : vector<2x8xf32>
    %29 = vector.multi_reduction <maximumf>, %28, %cst_20 [2] : vector<2x8x8xf32> to vector<2x8xf32>
    %30 = vector.shape_cast %29 : vector<2x8xf32> to vector<2x8x1xf32>
    %31 = vector.broadcast %30 : vector<2x8x1xf32> to vector<2x8x8xf32>
    %32 = arith.subf %28, %31 : vector<2x8x8xf32>
    %33 = math.exp %32 : vector<2x8x8xf32>
    %cst_21 = arith.constant dense<0.000000e+00> : vector<2x8xf32>
    %34 = vector.multi_reduction <add>, %33, %cst_21 [2] : vector<2x8x8xf32> to vector<2x8xf32>
    %35 = vector.shape_cast %34 : vector<2x8xf32> to vector<2x8x1xf32>
    %36 = vector.broadcast %35 : vector<2x8x1xf32> to vector<2x8x8xf32>
    %37 = arith.divf %33, %36 : vector<2x8x8xf32>
    %38 = arith.truncf %37 : vector<2x8x8xf32> to vector<2x8x8xbf16>
    "tpu.trace_start"() <{level = 10 : i32, message = "bqk,bkd->bqd"}> : () -> ()
    %cst_22 = arith.constant dense<0.000000e+00> : vector<2x8x8xf32>
    %39 = tpu.matmul %38, %27, %cst_22 {dimension_numbers = #tpu.dot_dimension_numbers<[2], [1], [1], [2], [0, 0, 0, 1, 1, 2], [0], [0]>} : vector<2x8x8xbf16>, vector<2x8x8xbf16>, vector<2x8x8xf32> -> vector<2x8x8xf32>
    "tpu.trace_stop"() : () -> ()
    %40 = vector.shape_cast %39 : vector<2x8x8xf32> to vector<16x8xf32>
    %41 = vector.extract_strided_slice %11 {offsets = [0, 8], sizes = [16, 8], strides = [1, 1]} : vector<16x32xf32> to vector<16x8xf32>
    %42 = vector.shape_cast %41 : vector<16x8xf32> to vector<2x8x8xf32>
    %43 = arith.truncf %42 : vector<2x8x8xf32> to vector<2x8x8xbf16>
    %44 = vector.extract_strided_slice %18 {offsets = [0, 8], sizes = [16, 8], strides = [1, 1]} : vector<16x64xf32> to vector<16x8xf32>
    %45 = vector.shape_cast %44 : vector<16x8xf32> to vector<2x8x8xf32>
    %46 = arith.truncf %45 : vector<2x8x8xf32> to vector<2x8x8xbf16>
    %47 = vector.extract_strided_slice %18 {offsets = [0, 40], sizes = [16, 8], strides = [1, 1]} : vector<16x64xf32> to vector<16x8xf32>
    %48 = vector.shape_cast %47 : vector<16x8xf32> to vector<2x8x8xf32>
    %49 = arith.truncf %48 : vector<2x8x8xf32> to vector<2x8x8xbf16>
    "tpu.trace_start"() <{level = 10 : i32, message = "bqd,bkd->bqk"}> : () -> ()
    %cst_23 = arith.constant dense<0.000000e+00> : vector<2x8x8xf32>
    %50 = tpu.matmul %43, %46, %cst_23 {dimension_numbers = #tpu.dot_dimension_numbers<[2], [2], [1], [1], [0, 0, 0, 1, 1, 1], [0], [0]>} : vector<2x8x8xbf16>, vector<2x8x8xbf16>, vector<2x8x8xf32> -> vector<2x8x8xf32>
    "tpu.trace_stop"() : () -> ()
    %cst_24 = arith.constant dense<0xFF800000> : vector<2x8xf32>
    %51 = vector.multi_reduction <maximumf>, %50, %cst_24 [2] : vector<2x8x8xf32> to vector<2x8xf32>
    %52 = vector.shape_cast %51 : vector<2x8xf32> to vector<2x8x1xf32>
    %53 = vector.broadcast %52 : vector<2x8x1xf32> to vector<2x8x8xf32>
    %54 = arith.subf %50, %53 : vector<2x8x8xf32>
    %55 = math.exp %54 : vector<2x8x8xf32>
    %cst_25 = arith.constant dense<0.000000e+00> : vector<2x8xf32>
    %56 = vector.multi_reduction <add>, %55, %cst_25 [2] : vector<2x8x8xf32> to vector<2x8xf32>
    %57 = vector.shape_cast %56 : vector<2x8xf32> to vector<2x8x1xf32>
    %58 = vector.broadcast %57 : vector<2x8x1xf32> to vector<2x8x8xf32>
    %59 = arith.divf %55, %58 : vector<2x8x8xf32>
    %60 = arith.truncf %59 : vector<2x8x8xf32> to vector<2x8x8xbf16>
    "tpu.trace_start"() <{level = 10 : i32, message = "bqk,bkd->bqd"}> : () -> ()
    %cst_26 = arith.constant dense<0.000000e+00> : vector<2x8x8xf32>
    %61 = tpu.matmul %60, %49, %cst_26 {dimension_numbers = #tpu.dot_dimension_numbers<[2], [1], [1], [2], [0, 0, 0, 1, 1, 2], [0], [0]>} : vector<2x8x8xbf16>, vector<2x8x8xbf16>, vector<2x8x8xf32> -> vector<2x8x8xf32>
    "tpu.trace_stop"() : () -> ()
    %62 = vector.shape_cast %61 : vector<2x8x8xf32> to vector<16x8xf32>
    %63 = vector.extract_strided_slice %11 {offsets = [0, 16], sizes = [16, 8], strides = [1, 1]} : vector<16x32xf32> to vector<16x8xf32>
    %64 = vector.shape_cast %63 : vector<16x8xf32> to vector<2x8x8xf32>
    %65 = arith.truncf %64 : vector<2x8x8xf32> to vector<2x8x8xbf16>
    %66 = vector.extract_strided_slice %18 {offsets = [0, 16], sizes = [16, 8], strides = [1, 1]} : vector<16x64xf32> to vector<16x8xf32>
    %67 = vector.shape_cast %66 : vector<16x8xf32> to vector<2x8x8xf32>
    %68 = arith.truncf %67 : vector<2x8x8xf32> to vector<2x8x8xbf16>
    %69 = vector.extract_strided_slice %18 {offsets = [0, 48], sizes = [16, 8], strides = [1, 1]} : vector<16x64xf32> to vector<16x8xf32>
    %70 = vector.shape_cast %69 : vector<16x8xf32> to vector<2x8x8xf32>
    %71 = arith.truncf %70 : vector<2x8x8xf32> to vector<2x8x8xbf16>
    "tpu.trace_start"() <{level = 10 : i32, message = "bqd,bkd->bqk"}> : () -> ()
    %cst_27 = arith.constant dense<0.000000e+00> : vector<2x8x8xf32>
    %72 = tpu.matmul %65, %68, %cst_27 {dimension_numbers = #tpu.dot_dimension_numbers<[2], [2], [1], [1], [0, 0, 0, 1, 1, 1], [0], [0]>} : vector<2x8x8xbf16>, vector<2x8x8xbf16>, vector<2x8x8xf32> -> vector<2x8x8xf32>
    "tpu.trace_stop"() : () -> ()
    %cst_28 = arith.constant dense<0xFF800000> : vector<2x8xf32>
    %73 = vector.multi_reduction <maximumf>, %72, %cst_28 [2] : vector<2x8x8xf32> to vector<2x8xf32>
    %74 = vector.shape_cast %73 : vector<2x8xf32> to vector<2x8x1xf32>
    %75 = vector.broadcast %74 : vector<2x8x1xf32> to vector<2x8x8xf32>
    %76 = arith.subf %72, %75 : vector<2x8x8xf32>
    %77 = math.exp %76 : vector<2x8x8xf32>
    %cst_29 = arith.constant dense<0.000000e+00> : vector<2x8xf32>
    %78 = vector.multi_reduction <add>, %77, %cst_29 [2] : vector<2x8x8xf32> to vector<2x8xf32>
    %79 = vector.shape_cast %78 : vector<2x8xf32> to vector<2x8x1xf32>
    %80 = vector.broadcast %79 : vector<2x8x1xf32> to vector<2x8x8xf32>
    %81 = arith.divf %77, %80 : vector<2x8x8xf32>
    %82 = arith.truncf %81 : vector<2x8x8xf32> to vector<2x8x8xbf16>
    "tpu.trace_start"() <{level = 10 : i32, message = "bqk,bkd->bqd"}> : () -> ()
    %cst_30 = arith.constant dense<0.000000e+00> : vector<2x8x8xf32>
    %83 = tpu.matmul %82, %71, %cst_30 {dimension_numbers = #tpu.dot_dimension_numbers<[2], [1], [1], [2], [0, 0, 0, 1, 1, 2], [0], [0]>} : vector<2x8x8xbf16>, vector<2x8x8xbf16>, vector<2x8x8xf32> -> vector<2x8x8xf32>
    "tpu.trace_stop"() : () -> ()
    %84 = vector.shape_cast %83 : vector<2x8x8xf32> to vector<16x8xf32>
    %85 = vector.extract_strided_slice %11 {offsets = [0, 24], sizes = [16, 8], strides = [1, 1]} : vector<16x32xf32> to vector<16x8xf32>
    %86 = vector.shape_cast %85 : vector<16x8xf32> to vector<2x8x8xf32>
    %87 = arith.truncf %86 : vector<2x8x8xf32> to vector<2x8x8xbf16>
    %88 = vector.extract_strided_slice %18 {offsets = [0, 24], sizes = [16, 8], strides = [1, 1]} : vector<16x64xf32> to vector<16x8xf32>
    %89 = vector.shape_cast %88 : vector<16x8xf32> to vector<2x8x8xf32>
    %90 = arith.truncf %89 : vector<2x8x8xf32> to vector<2x8x8xbf16>
    %91 = vector.extract_strided_slice %18 {offsets = [0, 56], sizes = [16, 8], strides = [1, 1]} : vector<16x64xf32> to vector<16x8xf32>
    %92 = vector.shape_cast %91 : vector<16x8xf32> to vector<2x8x8xf32>
    %93 = arith.truncf %92 : vector<2x8x8xf32> to vector<2x8x8xbf16>
    "tpu.trace_start"() <{level = 10 : i32, message = "bqd,bkd->bqk"}> : () -> ()
    %cst_31 = arith.constant dense<0.000000e+00> : vector<2x8x8xf32>
    %94 = tpu.matmul %87, %90, %cst_31 {dimension_numbers = #tpu.dot_dimension_numbers<[2], [2], [1], [1], [0, 0, 0, 1, 1, 1], [0], [0]>} : vector<2x8x8xbf16>, vector<2x8x8xbf16>, vector<2x8x8xf32> -> vector<2x8x8xf32>
    "tpu.trace_stop"() : () -> ()
    %cst_32 = arith.constant dense<0xFF800000> : vector<2x8xf32>
    %95 = vector.multi_reduction <maximumf>, %94, %cst_32 [2] : vector<2x8x8xf32> to vector<2x8xf32>
    %96 = vector.shape_cast %95 : vector<2x8xf32> to vector<2x8x1xf32>
    %97 = vector.broadcast %96 : vector<2x8x1xf32> to vector<2x8x8xf32>
    %98 = arith.subf %94, %97 : vector<2x8x8xf32>
    %99 = math.exp %98 : vector<2x8x8xf32>
    %cst_33 = arith.constant dense<0.000000e+00> : vector<2x8xf32>
    %100 = vector.multi_reduction <add>, %99, %cst_33 [2] : vector<2x8x8xf32> to vector<2x8xf32>
    %101 = vector.shape_cast %100 : vector<2x8xf32> to vector<2x8x1xf32>
    %102 = vector.broadcast %101 : vector<2x8x1xf32> to vector<2x8x8xf32>
    %103 = arith.divf %99, %102 : vector<2x8x8xf32>
    %104 = arith.truncf %103 : vector<2x8x8xf32> to vector<2x8x8xbf16>
    "tpu.trace_start"() <{level = 10 : i32, message = "bqk,bkd->bqd"}> : () -> ()
    %cst_34 = arith.constant dense<0.000000e+00> : vector<2x8x8xf32>
    %105 = tpu.matmul %104, %93, %cst_34 {dimension_numbers = #tpu.dot_dimension_numbers<[2], [1], [1], [2], [0, 0, 0, 1, 1, 2], [0], [0]>} : vector<2x8x8xbf16>, vector<2x8x8xbf16>, vector<2x8x8xf32> -> vector<2x8x8xf32>
    "tpu.trace_stop"() : () -> ()
    %106 = vector.shape_cast %105 : vector<2x8x8xf32> to vector<16x8xf32>
    %107 = tpu.concatenate %40, %62, %84, %106 in 1 : vector<16x8xf32>, vector<16x8xf32>, vector<16x8xf32>, vector<16x8xf32> -> vector<16x32xf32>
    %108 = arith.truncf %107 : vector<16x32xf32> to vector<16x32xbf16>
    %c0_35 = arith.constant 0 : index
    %c0_36 = arith.constant 0 : index
    %c0_37 = arith.constant 0 : index
    %c0_38 = arith.constant 0 : index
    %109 = vector.load %arg8[%c0_35, %c0_36, %c0_37, %c0_38] : memref<1x2x32x32xbf16, #tpu.memory_space<vmem>>, vector<1x1x32x32xbf16>
    %110 = vector.shape_cast %109 : vector<1x1x32x32xbf16> to vector<32x32xbf16>
    %cst_39 = arith.constant dense<0.000000e+00> : vector<16x32xf32>
    %111 = tpu.matmul %108, %110, %cst_39 {dimension_numbers = #tpu.dot_dimension_numbers<[1], [0], [0], [1], [0, 0, 1, 1], [], []>} : vector<16x32xbf16>, vector<32x32xbf16>, vector<16x32xf32> -> vector<16x32xf32>
    %c0_40 = arith.constant 0 : index
    %c0_41 = arith.constant 0 : index
    %c0_42 = arith.constant 0 : index
    %c0_43 = arith.constant 0 : index
    %112 = vector.load %arg9[%c0_40, %c0_41, %c0_42, %c0_43] : memref<1x2x1x32xf32, #tpu.memory_space<vmem>>, vector<1x1x1x32xf32>
    %113 = vector.shape_cast %112 : vector<1x1x1x32xf32> to vector<1x32xf32>
    %114 = vector.broadcast %113 : vector<1x32xf32> to vector<16x32xf32>
    %115 = arith.addf %111, %114 : vector<16x32xf32>
    %116 = arith.addf %3, %115 : vector<16x32xf32>
    %c0_44 = arith.constant 0 : index
    %c0_45 = arith.constant 0 : index
    %c0_46 = arith.constant 0 : index
    %c0_47 = arith.constant 0 : index
    %117 = vector.load %arg14[%c0_44, %c0_45, %c0_46, %c0_47] : memref<1x3x1x32xf32, #tpu.memory_space<vmem>>, vector<1x1x1x32xf32>
    %118 = vector.shape_cast %117 : vector<1x1x1x32xf32> to vector<1x32xf32>
    %c0_48 = arith.constant 0 : index
    %c0_49 = arith.constant 0 : index
    %c0_50 = arith.constant 0 : index
    %c0_51 = arith.constant 0 : index
    %119 = vector.load %arg15[%c0_48, %c0_49, %c0_50, %c0_51] : memref<1x3x1x32xf32, #tpu.memory_space<vmem>>, vector<1x1x1x32xf32>
    %120 = vector.shape_cast %119 : vector<1x1x1x32xf32> to vector<1x32xf32>
    %cst_52 = arith.constant dense<0.000000e+00> : vector<16xf32>
    %121 = vector.multi_reduction <add>, %116, %cst_52 [1] : vector<16x32xf32> to vector<16xf32>
    %122 = vector.shape_cast %121 : vector<16xf32> to vector<16x1xf32>
    %cst_53 = arith.constant 3.200000e+01 : f32
    %123 = vector.broadcast %cst_53 : f32 to vector<16x1xf32>
    %124 = arith.divf %122, %123 : vector<16x1xf32>
    %125 = vector.broadcast %124 : vector<16x1xf32> to vector<16x32xf32>
    %126 = arith.subf %116, %125 : vector<16x32xf32>
    %127 = arith.mulf %126, %126 : vector<16x32xf32>
    %cst_54 = arith.constant dense<0.000000e+00> : vector<16xf32>
    %128 = vector.multi_reduction <add>, %127, %cst_54 [1] : vector<16x32xf32> to vector<16xf32>
    %129 = vector.shape_cast %128 : vector<16xf32> to vector<16x1xf32>
    %cst_55 = arith.constant 3.200000e+01 : f32
    %130 = vector.broadcast %cst_55 : f32 to vector<16x1xf32>
    %131 = arith.divf %129, %130 : vector<16x1xf32>
    %cst_56 = arith.constant 9.99999974E-6 : f32
    %132 = vector.broadcast %cst_56 : f32 to vector<16x1xf32>
    %133 = arith.addf %131, %132 : vector<16x1xf32>
    %134 = math.rsqrt %133 : vector<16x1xf32>
    %135 = vector.broadcast %134 : vector<16x1xf32> to vector<16x32xf32>
    %136 = arith.mulf %126, %135 : vector<16x32xf32>
    %137 = vector.broadcast %118 : vector<1x32xf32> to vector<16x32xf32>
    %138 = arith.mulf %136, %137 : vector<16x32xf32>
    %139 = vector.broadcast %120 : vector<1x32xf32> to vector<16x32xf32>
    %140 = arith.addf %138, %139 : vector<16x32xf32>
    %141 = arith.truncf %140 : vector<16x32xf32> to vector<16x32xbf16>
    %c0_57 = arith.constant 0 : index
    %c0_58 = arith.constant 0 : index
    %142 = vector.load %arg18[%c0_57, %c0_58] : memref<16x32xbf16, #tpu.memory_space<vmem>>, vector<16x32xbf16>
    %c0_59 = arith.constant 0 : index
    %c1 = arith.constant 1 : index
    %c0_60 = arith.constant 0 : index
    %c0_61 = arith.constant 0 : index
    %143 = vector.load %arg4[%c0_59, %c1, %c0_60, %c0_61] : memref<1x2x32x32xbf16, #tpu.memory_space<vmem>>, vector<1x1x32x32xbf16>
    %144 = vector.shape_cast %143 : vector<1x1x32x32xbf16> to vector<32x32xbf16>
    %cst_62 = arith.constant dense<0.000000e+00> : vector<16x32xf32>
    %145 = tpu.matmul %141, %144, %cst_62 {dimension_numbers = #tpu.dot_dimension_numbers<[1], [0], [0], [1], [0, 0, 1, 1], [], []>} : vector<16x32xbf16>, vector<32x32xbf16>, vector<16x32xf32> -> vector<16x32xf32>
    %c0_63 = arith.constant 0 : index
    %c1_64 = arith.constant 1 : index
    %c0_65 = arith.constant 0 : index
    %c0_66 = arith.constant 0 : index
    %146 = vector.load %arg5[%c0_63, %c1_64, %c0_65, %c0_66] : memref<1x2x1x32xf32, #tpu.memory_space<vmem>>, vector<1x1x1x32xf32>
    %147 = vector.shape_cast %146 : vector<1x1x1x32xf32> to vector<1x32xf32>
    %148 = vector.broadcast %147 : vector<1x32xf32> to vector<16x32xf32>
    %149 = arith.addf %145, %148 : vector<16x32xf32>
    %c0_67 = arith.constant 0 : index
    %c1_68 = arith.constant 1 : index
    %c0_69 = arith.constant 0 : index
    %c0_70 = arith.constant 0 : index
    %150 = vector.load %arg6[%c0_67, %c1_68, %c0_69, %c0_70] : memref<1x2x32x64xbf16, #tpu.memory_space<vmem>>, vector<1x1x32x64xbf16>
    %151 = vector.shape_cast %150 : vector<1x1x32x64xbf16> to vector<32x64xbf16>
    %cst_71 = arith.constant dense<0.000000e+00> : vector<16x64xf32>
    %152 = tpu.matmul %142, %151, %cst_71 {dimension_numbers = #tpu.dot_dimension_numbers<[1], [0], [0], [1], [0, 0, 1, 1], [], []>} : vector<16x32xbf16>, vector<32x64xbf16>, vector<16x64xf32> -> vector<16x64xf32>
    %c0_72 = arith.constant 0 : index
    %c1_73 = arith.constant 1 : index
    %c0_74 = arith.constant 0 : index
    %c0_75 = arith.constant 0 : index
    %153 = vector.load %arg7[%c0_72, %c1_73, %c0_74, %c0_75] : memref<1x2x1x64xf32, #tpu.memory_space<vmem>>, vector<1x1x1x64xf32>
    %154 = vector.shape_cast %153 : vector<1x1x1x64xf32> to vector<1x64xf32>
    %155 = vector.broadcast %154 : vector<1x64xf32> to vector<16x64xf32>
    %156 = arith.addf %152, %155 : vector<16x64xf32>
    %157 = vector.extract_strided_slice %149 {offsets = [0, 0], sizes = [16, 8], strides = [1, 1]} : vector<16x32xf32> to vector<16x8xf32>
    %158 = vector.shape_cast %157 : vector<16x8xf32> to vector<2x8x8xf32>
    %159 = arith.truncf %158 : vector<2x8x8xf32> to vector<2x8x8xbf16>
    %160 = vector.extract_strided_slice %156 {offsets = [0, 0], sizes = [16, 8], strides = [1, 1]} : vector<16x64xf32> to vector<16x8xf32>
    %161 = vector.shape_cast %160 : vector<16x8xf32> to vector<2x8x8xf32>
    %162 = arith.truncf %161 : vector<2x8x8xf32> to vector<2x8x8xbf16>
    %163 = vector.extract_strided_slice %156 {offsets = [0, 32], sizes = [16, 8], strides = [1, 1]} : vector<16x64xf32> to vector<16x8xf32>
    %164 = vector.shape_cast %163 : vector<16x8xf32> to vector<2x8x8xf32>
    %165 = arith.truncf %164 : vector<2x8x8xf32> to vector<2x8x8xbf16>
    "tpu.trace_start"() <{level = 10 : i32, message = "bqd,bkd->bqk"}> : () -> ()
    %cst_76 = arith.constant dense<0.000000e+00> : vector<2x8x8xf32>
    %166 = tpu.matmul %159, %162, %cst_76 {dimension_numbers = #tpu.dot_dimension_numbers<[2], [2], [1], [1], [0, 0, 0, 1, 1, 1], [0], [0]>} : vector<2x8x8xbf16>, vector<2x8x8xbf16>, vector<2x8x8xf32> -> vector<2x8x8xf32>
    "tpu.trace_stop"() : () -> ()
    %cst_77 = arith.constant dense<0xFF800000> : vector<2x8xf32>
    %167 = vector.multi_reduction <maximumf>, %166, %cst_77 [2] : vector<2x8x8xf32> to vector<2x8xf32>
    %168 = vector.shape_cast %167 : vector<2x8xf32> to vector<2x8x1xf32>
    %169 = vector.broadcast %168 : vector<2x8x1xf32> to vector<2x8x8xf32>
    %170 = arith.subf %166, %169 : vector<2x8x8xf32>
    %171 = math.exp %170 : vector<2x8x8xf32>
    %cst_78 = arith.constant dense<0.000000e+00> : vector<2x8xf32>
    %172 = vector.multi_reduction <add>, %171, %cst_78 [2] : vector<2x8x8xf32> to vector<2x8xf32>
    %173 = vector.shape_cast %172 : vector<2x8xf32> to vector<2x8x1xf32>
    %174 = vector.broadcast %173 : vector<2x8x1xf32> to vector<2x8x8xf32>
    %175 = arith.divf %171, %174 : vector<2x8x8xf32>
    %176 = arith.truncf %175 : vector<2x8x8xf32> to vector<2x8x8xbf16>
    "tpu.trace_start"() <{level = 10 : i32, message = "bqk,bkd->bqd"}> : () -> ()
    %cst_79 = arith.constant dense<0.000000e+00> : vector<2x8x8xf32>
    %177 = tpu.matmul %176, %165, %cst_79 {dimension_numbers = #tpu.dot_dimension_numbers<[2], [1], [1], [2], [0, 0, 0, 1, 1, 2], [0], [0]>} : vector<2x8x8xbf16>, vector<2x8x8xbf16>, vector<2x8x8xf32> -> vector<2x8x8xf32>
    "tpu.trace_stop"() : () -> ()
    %178 = vector.shape_cast %177 : vector<2x8x8xf32> to vector<16x8xf32>
    %179 = vector.extract_strided_slice %149 {offsets = [0, 8], sizes = [16, 8], strides = [1, 1]} : vector<16x32xf32> to vector<16x8xf32>
    %180 = vector.shape_cast %179 : vector<16x8xf32> to vector<2x8x8xf32>
    %181 = arith.truncf %180 : vector<2x8x8xf32> to vector<2x8x8xbf16>
    %182 = vector.extract_strided_slice %156 {offsets = [0, 8], sizes = [16, 8], strides = [1, 1]} : vector<16x64xf32> to vector<16x8xf32>
    %183 = vector.shape_cast %182 : vector<16x8xf32> to vector<2x8x8xf32>
    %184 = arith.truncf %183 : vector<2x8x8xf32> to vector<2x8x8xbf16>
    %185 = vector.extract_strided_slice %156 {offsets = [0, 40], sizes = [16, 8], strides = [1, 1]} : vector<16x64xf32> to vector<16x8xf32>
    %186 = vector.shape_cast %185 : vector<16x8xf32> to vector<2x8x8xf32>
    %187 = arith.truncf %186 : vector<2x8x8xf32> to vector<2x8x8xbf16>
    "tpu.trace_start"() <{level = 10 : i32, message = "bqd,bkd->bqk"}> : () -> ()
    %cst_80 = arith.constant dense<0.000000e+00> : vector<2x8x8xf32>
    %188 = tpu.matmul %181, %184, %cst_80 {dimension_numbers = #tpu.dot_dimension_numbers<[2], [2], [1], [1], [0, 0, 0, 1, 1, 1], [0], [0]>} : vector<2x8x8xbf16>, vector<2x8x8xbf16>, vector<2x8x8xf32> -> vector<2x8x8xf32>
    "tpu.trace_stop"() : () -> ()
    %cst_81 = arith.constant dense<0xFF800000> : vector<2x8xf32>
    %189 = vector.multi_reduction <maximumf>, %188, %cst_81 [2] : vector<2x8x8xf32> to vector<2x8xf32>
    %190 = vector.shape_cast %189 : vector<2x8xf32> to vector<2x8x1xf32>
    %191 = vector.broadcast %190 : vector<2x8x1xf32> to vector<2x8x8xf32>
    %192 = arith.subf %188, %191 : vector<2x8x8xf32>
    %193 = math.exp %192 : vector<2x8x8xf32>
    %cst_82 = arith.constant dense<0.000000e+00> : vector<2x8xf32>
    %194 = vector.multi_reduction <add>, %193, %cst_82 [2] : vector<2x8x8xf32> to vector<2x8xf32>
    %195 = vector.shape_cast %194 : vector<2x8xf32> to vector<2x8x1xf32>
    %196 = vector.broadcast %195 : vector<2x8x1xf32> to vector<2x8x8xf32>
    %197 = arith.divf %193, %196 : vector<2x8x8xf32>
    %198 = arith.truncf %197 : vector<2x8x8xf32> to vector<2x8x8xbf16>
    "tpu.trace_start"() <{level = 10 : i32, message = "bqk,bkd->bqd"}> : () -> ()
    %cst_83 = arith.constant dense<0.000000e+00> : vector<2x8x8xf32>
    %199 = tpu.matmul %198, %187, %cst_83 {dimension_numbers = #tpu.dot_dimension_numbers<[2], [1], [1], [2], [0, 0, 0, 1, 1, 2], [0], [0]>} : vector<2x8x8xbf16>, vector<2x8x8xbf16>, vector<2x8x8xf32> -> vector<2x8x8xf32>
    "tpu.trace_stop"() : () -> ()
    %200 = vector.shape_cast %199 : vector<2x8x8xf32> to vector<16x8xf32>
    %201 = vector.extract_strided_slice %149 {offsets = [0, 16], sizes = [16, 8], strides = [1, 1]} : vector<16x32xf32> to vector<16x8xf32>
    %202 = vector.shape_cast %201 : vector<16x8xf32> to vector<2x8x8xf32>
    %203 = arith.truncf %202 : vector<2x8x8xf32> to vector<2x8x8xbf16>
    %204 = vector.extract_strided_slice %156 {offsets = [0, 16], sizes = [16, 8], strides = [1, 1]} : vector<16x64xf32> to vector<16x8xf32>
    %205 = vector.shape_cast %204 : vector<16x8xf32> to vector<2x8x8xf32>
    %206 = arith.truncf %205 : vector<2x8x8xf32> to vector<2x8x8xbf16>
    %207 = vector.extract_strided_slice %156 {offsets = [0, 48], sizes = [16, 8], strides = [1, 1]} : vector<16x64xf32> to vector<16x8xf32>
    %208 = vector.shape_cast %207 : vector<16x8xf32> to vector<2x8x8xf32>
    %209 = arith.truncf %208 : vector<2x8x8xf32> to vector<2x8x8xbf16>
    "tpu.trace_start"() <{level = 10 : i32, message = "bqd,bkd->bqk"}> : () -> ()
    %cst_84 = arith.constant dense<0.000000e+00> : vector<2x8x8xf32>
    %210 = tpu.matmul %203, %206, %cst_84 {dimension_numbers = #tpu.dot_dimension_numbers<[2], [2], [1], [1], [0, 0, 0, 1, 1, 1], [0], [0]>} : vector<2x8x8xbf16>, vector<2x8x8xbf16>, vector<2x8x8xf32> -> vector<2x8x8xf32>
    "tpu.trace_stop"() : () -> ()
    %cst_85 = arith.constant dense<0xFF800000> : vector<2x8xf32>
    %211 = vector.multi_reduction <maximumf>, %210, %cst_85 [2] : vector<2x8x8xf32> to vector<2x8xf32>
    %212 = vector.shape_cast %211 : vector<2x8xf32> to vector<2x8x1xf32>
    %213 = vector.broadcast %212 : vector<2x8x1xf32> to vector<2x8x8xf32>
    %214 = arith.subf %210, %213 : vector<2x8x8xf32>
    %215 = math.exp %214 : vector<2x8x8xf32>
    %cst_86 = arith.constant dense<0.000000e+00> : vector<2x8xf32>
    %216 = vector.multi_reduction <add>, %215, %cst_86 [2] : vector<2x8x8xf32> to vector<2x8xf32>
    %217 = vector.shape_cast %216 : vector<2x8xf32> to vector<2x8x1xf32>
    %218 = vector.broadcast %217 : vector<2x8x1xf32> to vector<2x8x8xf32>
    %219 = arith.divf %215, %218 : vector<2x8x8xf32>
    %220 = arith.truncf %219 : vector<2x8x8xf32> to vector<2x8x8xbf16>
    "tpu.trace_start"() <{level = 10 : i32, message = "bqk,bkd->bqd"}> : () -> ()
    %cst_87 = arith.constant dense<0.000000e+00> : vector<2x8x8xf32>
    %221 = tpu.matmul %220, %209, %cst_87 {dimension_numbers = #tpu.dot_dimension_numbers<[2], [1], [1], [2], [0, 0, 0, 1, 1, 2], [0], [0]>} : vector<2x8x8xbf16>, vector<2x8x8xbf16>, vector<2x8x8xf32> -> vector<2x8x8xf32>
    "tpu.trace_stop"() : () -> ()
    %222 = vector.shape_cast %221 : vector<2x8x8xf32> to vector<16x8xf32>
    %223 = vector.extract_strided_slice %149 {offsets = [0, 24], sizes = [16, 8], strides = [1, 1]} : vector<16x32xf32> to vector<16x8xf32>
    %224 = vector.shape_cast %223 : vector<16x8xf32> to vector<2x8x8xf32>
    %225 = arith.truncf %224 : vector<2x8x8xf32> to vector<2x8x8xbf16>
    %226 = vector.extract_strided_slice %156 {offsets = [0, 24], sizes = [16, 8], strides = [1, 1]} : vector<16x64xf32> to vector<16x8xf32>
    %227 = vector.shape_cast %226 : vector<16x8xf32> to vector<2x8x8xf32>
    %228 = arith.truncf %227 : vector<2x8x8xf32> to vector<2x8x8xbf16>
    %229 = vector.extract_strided_slice %156 {offsets = [0, 56], sizes = [16, 8], strides = [1, 1]} : vector<16x64xf32> to vector<16x8xf32>
    %230 = vector.shape_cast %229 : vector<16x8xf32> to vector<2x8x8xf32>
    %231 = arith.truncf %230 : vector<2x8x8xf32> to vector<2x8x8xbf16>
    "tpu.trace_start"() <{level = 10 : i32, message = "bqd,bkd->bqk"}> : () -> ()
    %cst_88 = arith.constant dense<0.000000e+00> : vector<2x8x8xf32>
    %232 = tpu.matmul %225, %228, %cst_88 {dimension_numbers = #tpu.dot_dimension_numbers<[2], [2], [1], [1], [0, 0, 0, 1, 1, 1], [0], [0]>} : vector<2x8x8xbf16>, vector<2x8x8xbf16>, vector<2x8x8xf32> -> vector<2x8x8xf32>
    "tpu.trace_stop"() : () -> ()
    %cst_89 = arith.constant dense<0xFF800000> : vector<2x8xf32>
    %233 = vector.multi_reduction <maximumf>, %232, %cst_89 [2] : vector<2x8x8xf32> to vector<2x8xf32>
    %234 = vector.shape_cast %233 : vector<2x8xf32> to vector<2x8x1xf32>
    %235 = vector.broadcast %234 : vector<2x8x1xf32> to vector<2x8x8xf32>
    %236 = arith.subf %232, %235 : vector<2x8x8xf32>
    %237 = math.exp %236 : vector<2x8x8xf32>
    %cst_90 = arith.constant dense<0.000000e+00> : vector<2x8xf32>
    %238 = vector.multi_reduction <add>, %237, %cst_90 [2] : vector<2x8x8xf32> to vector<2x8xf32>
    %239 = vector.shape_cast %238 : vector<2x8xf32> to vector<2x8x1xf32>
    %240 = vector.broadcast %239 : vector<2x8x1xf32> to vector<2x8x8xf32>
    %241 = arith.divf %237, %240 : vector<2x8x8xf32>
    %242 = arith.truncf %241 : vector<2x8x8xf32> to vector<2x8x8xbf16>
    "tpu.trace_start"() <{level = 10 : i32, message = "bqk,bkd->bqd"}> : () -> ()
    %cst_91 = arith.constant dense<0.000000e+00> : vector<2x8x8xf32>
    %243 = tpu.matmul %242, %231, %cst_91 {dimension_numbers = #tpu.dot_dimension_numbers<[2], [1], [1], [2], [0, 0, 0, 1, 1, 2], [0], [0]>} : vector<2x8x8xbf16>, vector<2x8x8xbf16>, vector<2x8x8xf32> -> vector<2x8x8xf32>
    "tpu.trace_stop"() : () -> ()
    %244 = vector.shape_cast %243 : vector<2x8x8xf32> to vector<16x8xf32>
    %245 = tpu.concatenate %178, %200, %222, %244 in 1 : vector<16x8xf32>, vector<16x8xf32>, vector<16x8xf32>, vector<16x8xf32> -> vector<16x32xf32>
    %246 = arith.truncf %245 : vector<16x32xf32> to vector<16x32xbf16>
    %c0_92 = arith.constant 0 : index
    %c1_93 = arith.constant 1 : index
    %c0_94 = arith.constant 0 : index
    %c0_95 = arith.constant 0 : index
    %247 = vector.load %arg8[%c0_92, %c1_93, %c0_94, %c0_95] : memref<1x2x32x32xbf16, #tpu.memory_space<vmem>>, vector<1x1x32x32xbf16>
    %248 = vector.shape_cast %247 : vector<1x1x32x32xbf16> to vector<32x32xbf16>
    %cst_96 = arith.constant dense<0.000000e+00> : vector<16x32xf32>
    %249 = tpu.matmul %246, %248, %cst_96 {dimension_numbers = #tpu.dot_dimension_numbers<[1], [0], [0], [1], [0, 0, 1, 1], [], []>} : vector<16x32xbf16>, vector<32x32xbf16>, vector<16x32xf32> -> vector<16x32xf32>
    %c0_97 = arith.constant 0 : index
    %c1_98 = arith.constant 1 : index
    %c0_99 = arith.constant 0 : index
    %c0_100 = arith.constant 0 : index
    %250 = vector.load %arg9[%c0_97, %c1_98, %c0_99, %c0_100] : memref<1x2x1x32xf32, #tpu.memory_space<vmem>>, vector<1x1x1x32xf32>
    %251 = vector.shape_cast %250 : vector<1x1x1x32xf32> to vector<1x32xf32>
    %252 = vector.broadcast %251 : vector<1x32xf32> to vector<16x32xf32>
    %253 = arith.addf %249, %252 : vector<16x32xf32>
    %254 = arith.addf %140, %253 : vector<16x32xf32>
    %c0_101 = arith.constant 0 : index
    %c1_102 = arith.constant 1 : index
    %c0_103 = arith.constant 0 : index
    %c0_104 = arith.constant 0 : index
    %255 = vector.load %arg14[%c0_101, %c1_102, %c0_103, %c0_104] : memref<1x3x1x32xf32, #tpu.memory_space<vmem>>, vector<1x1x1x32xf32>
    %256 = vector.shape_cast %255 : vector<1x1x1x32xf32> to vector<1x32xf32>
    %c0_105 = arith.constant 0 : index
    %c1_106 = arith.constant 1 : index
    %c0_107 = arith.constant 0 : index
    %c0_108 = arith.constant 0 : index
    %257 = vector.load %arg15[%c0_105, %c1_106, %c0_107, %c0_108] : memref<1x3x1x32xf32, #tpu.memory_space<vmem>>, vector<1x1x1x32xf32>
    %258 = vector.shape_cast %257 : vector<1x1x1x32xf32> to vector<1x32xf32>
    %cst_109 = arith.constant dense<0.000000e+00> : vector<16xf32>
    %259 = vector.multi_reduction <add>, %254, %cst_109 [1] : vector<16x32xf32> to vector<16xf32>
    %260 = vector.shape_cast %259 : vector<16xf32> to vector<16x1xf32>
    %cst_110 = arith.constant 3.200000e+01 : f32
    %261 = vector.broadcast %cst_110 : f32 to vector<16x1xf32>
    %262 = arith.divf %260, %261 : vector<16x1xf32>
    %263 = vector.broadcast %262 : vector<16x1xf32> to vector<16x32xf32>
    %264 = arith.subf %254, %263 : vector<16x32xf32>
    %265 = arith.mulf %264, %264 : vector<16x32xf32>
    %cst_111 = arith.constant dense<0.000000e+00> : vector<16xf32>
    %266 = vector.multi_reduction <add>, %265, %cst_111 [1] : vector<16x32xf32> to vector<16xf32>
    %267 = vector.shape_cast %266 : vector<16xf32> to vector<16x1xf32>
    %cst_112 = arith.constant 3.200000e+01 : f32
    %268 = vector.broadcast %cst_112 : f32 to vector<16x1xf32>
    %269 = arith.divf %267, %268 : vector<16x1xf32>
    %cst_113 = arith.constant 9.99999974E-6 : f32
    %270 = vector.broadcast %cst_113 : f32 to vector<16x1xf32>
    %271 = arith.addf %269, %270 : vector<16x1xf32>
    %272 = math.rsqrt %271 : vector<16x1xf32>
    %273 = vector.broadcast %272 : vector<16x1xf32> to vector<16x32xf32>
    %274 = arith.mulf %264, %273 : vector<16x32xf32>
    %275 = vector.broadcast %256 : vector<1x32xf32> to vector<16x32xf32>
    %276 = arith.mulf %274, %275 : vector<16x32xf32>
    %277 = vector.broadcast %258 : vector<1x32xf32> to vector<16x32xf32>
    %278 = arith.addf %276, %277 : vector<16x32xf32>
    %279 = arith.truncf %278 : vector<16x32xf32> to vector<16x32xbf16>
    %c0_114 = arith.constant 0 : index
    %c0_115 = arith.constant 0 : index
    %c0_116 = arith.constant 0 : index
    %280 = vector.load %arg10[%c0_114, %c0_115, %c0_116] : memref<1x32x64xbf16, #tpu.memory_space<vmem>>, vector<1x32x64xbf16>
    %281 = vector.shape_cast %280 : vector<1x32x64xbf16> to vector<32x64xbf16>
    %cst_117 = arith.constant dense<0.000000e+00> : vector<16x64xf32>
    %282 = tpu.matmul %279, %281, %cst_117 {dimension_numbers = #tpu.dot_dimension_numbers<[1], [0], [0], [1], [0, 0, 1, 1], [], []>} : vector<16x32xbf16>, vector<32x64xbf16>, vector<16x64xf32> -> vector<16x64xf32>
    %c0_118 = arith.constant 0 : index
    %c0_119 = arith.constant 0 : index
    %c0_120 = arith.constant 0 : index
    %283 = vector.load %arg11[%c0_118, %c0_119, %c0_120] : memref<1x1x64xf32, #tpu.memory_space<vmem>>, vector<1x1x64xf32>
    %284 = vector.shape_cast %283 : vector<1x1x64xf32> to vector<1x64xf32>
    %285 = vector.broadcast %284 : vector<1x64xf32> to vector<16x64xf32>
    %286 = arith.addf %282, %285 : vector<16x64xf32>
    %cst_121 = arith.constant 0.000000e+00 : f32
    %287 = vector.broadcast %cst_121 : f32 to vector<16x64xf32>
    %288 = arith.maximumf %286, %287 : vector<16x64xf32>
    %289 = arith.truncf %288 : vector<16x64xf32> to vector<16x64xbf16>
    %c0_122 = arith.constant 0 : index
    %c0_123 = arith.constant 0 : index
    %c0_124 = arith.constant 0 : index
    %290 = vector.load %arg12[%c0_122, %c0_123, %c0_124] : memref<1x64x32xbf16, #tpu.memory_space<vmem>>, vector<1x64x32xbf16>
    %291 = vector.shape_cast %290 : vector<1x64x32xbf16> to vector<64x32xbf16>
    %cst_125 = arith.constant dense<0.000000e+00> : vector<16x32xf32>
    %292 = tpu.matmul %289, %291, %cst_125 {dimension_numbers = #tpu.dot_dimension_numbers<[1], [0], [0], [1], [0, 0, 1, 1], [], []>} : vector<16x64xbf16>, vector<64x32xbf16>, vector<16x32xf32> -> vector<16x32xf32>
    %c0_126 = arith.constant 0 : index
    %c0_127 = arith.constant 0 : index
    %c0_128 = arith.constant 0 : index
    %293 = vector.load %arg13[%c0_126, %c0_127, %c0_128] : memref<1x1x32xf32, #tpu.memory_space<vmem>>, vector<1x1x32xf32>
    %294 = vector.shape_cast %293 : vector<1x1x32xf32> to vector<1x32xf32>
    %295 = vector.broadcast %294 : vector<1x32xf32> to vector<16x32xf32>
    %296 = arith.addf %292, %295 : vector<16x32xf32>
    %297 = arith.addf %278, %296 : vector<16x32xf32>
    %c0_129 = arith.constant 0 : index
    %c2 = arith.constant 2 : index
    %c0_130 = arith.constant 0 : index
    %c0_131 = arith.constant 0 : index
    %298 = vector.load %arg14[%c0_129, %c2, %c0_130, %c0_131] : memref<1x3x1x32xf32, #tpu.memory_space<vmem>>, vector<1x1x1x32xf32>
    %299 = vector.shape_cast %298 : vector<1x1x1x32xf32> to vector<1x32xf32>
    %c0_132 = arith.constant 0 : index
    %c2_133 = arith.constant 2 : index
    %c0_134 = arith.constant 0 : index
    %c0_135 = arith.constant 0 : index
    %300 = vector.load %arg15[%c0_132, %c2_133, %c0_134, %c0_135] : memref<1x3x1x32xf32, #tpu.memory_space<vmem>>, vector<1x1x1x32xf32>
    %301 = vector.shape_cast %300 : vector<1x1x1x32xf32> to vector<1x32xf32>
    %cst_136 = arith.constant dense<0.000000e+00> : vector<16xf32>
    %302 = vector.multi_reduction <add>, %297, %cst_136 [1] : vector<16x32xf32> to vector<16xf32>
    %303 = vector.shape_cast %302 : vector<16xf32> to vector<16x1xf32>
    %cst_137 = arith.constant 3.200000e+01 : f32
    %304 = vector.broadcast %cst_137 : f32 to vector<16x1xf32>
    %305 = arith.divf %303, %304 : vector<16x1xf32>
    %306 = vector.broadcast %305 : vector<16x1xf32> to vector<16x32xf32>
    %307 = arith.subf %297, %306 : vector<16x32xf32>
    %308 = arith.mulf %307, %307 : vector<16x32xf32>
    %cst_138 = arith.constant dense<0.000000e+00> : vector<16xf32>
    %309 = vector.multi_reduction <add>, %308, %cst_138 [1] : vector<16x32xf32> to vector<16xf32>
    %310 = vector.shape_cast %309 : vector<16xf32> to vector<16x1xf32>
    %cst_139 = arith.constant 3.200000e+01 : f32
    %311 = vector.broadcast %cst_139 : f32 to vector<16x1xf32>
    %312 = arith.divf %310, %311 : vector<16x1xf32>
    %cst_140 = arith.constant 9.99999974E-6 : f32
    %313 = vector.broadcast %cst_140 : f32 to vector<16x1xf32>
    %314 = arith.addf %312, %313 : vector<16x1xf32>
    %315 = math.rsqrt %314 : vector<16x1xf32>
    %316 = vector.broadcast %315 : vector<16x1xf32> to vector<16x32xf32>
    %317 = arith.mulf %307, %316 : vector<16x32xf32>
    %318 = vector.broadcast %299 : vector<1x32xf32> to vector<16x32xf32>
    %319 = arith.mulf %317, %318 : vector<16x32xf32>
    %320 = vector.broadcast %301 : vector<1x32xf32> to vector<16x32xf32>
    %321 = arith.addf %319, %320 : vector<16x32xf32>
    %c0_141 = arith.constant 0 : index
    %c0_142 = arith.constant 0 : index
    %322 = vector.load %arg17[%c0_141, %c0_142] : memref<16x32xf32, #tpu.memory_space<vmem>>, vector<16x32xf32>
    tpu.vector_store %arg17[%c0_141, %c0_142], %321 {strides = array<i32>} : memref<16x32xf32, #tpu.memory_space<vmem>>, vector<16x32xf32>,
    %c1_i32 = arith.constant 1 : i32
    %323 = arith.cmpi eq, %arg1, %c1_i32 : i32
    %324 = arith.extui %323 : i1 to i32
    %c0_i32_143 = arith.constant 0 : i32
    %325 = arith.cmpi ne, %324, %c0_i32_143 : i32
    scf.if %325 {
      %326 = vector.shape_cast %321 : vector<16x32xf32> to vector<2x8x32xf32>
      %c0_144 = arith.constant 0 : index
      %c0_145 = arith.constant 0 : index
      %c0_146 = arith.constant 0 : index
      %327 = vector.load %arg16[%c0_144, %c0_145, %c0_146] : memref<2x8x32xf32, #tpu.memory_space<vmem>>, vector<2x8x32xf32>
      tpu.vector_store %arg16[%c0_144, %c0_145, %c0_146], %326 {strides = array<i32>} : memref<2x8x32xf32, #tpu.memory_space<vmem>>, vector<2x8x32xf32>,
    } else {
    }
    return
  }
  func.func @transform_0(%arg0: i32, %arg1: i32) -> (i32, i32, i32) {
    %c0_i32 = arith.constant 0 : i32
    %c0_i32_0 = arith.constant 0 : i32
    %c0_i32_1 = arith.constant 0 : i32
    return %arg0, %c0_i32, %c0_i32_0 : i32, i32, i32
  }
  func.func @transform_1(%arg0: i32, %arg1: i32) -> (i32, i32) {
    %c0_i32 = arith.constant 0 : i32
    %c0_i32_0 = arith.constant 0 : i32
    %c0_i32_1 = arith.constant 0 : i32
    return %c0_i32, %c0_i32_0 : i32, i32
  }
  func.func @transform_2(%arg0: i32, %arg1: i32) -> (i32, i32, i32, i32) {
    %c0_i32 = arith.constant 0 : i32
    %c0_i32_0 = arith.constant 0 : i32
    %c0_i32_1 = arith.constant 0 : i32
    %c0_i32_2 = arith.constant 0 : i32
    return %arg1, %c0_i32, %c0_i32_0, %c0_i32_1 : i32, i32, i32, i32
  }
  func.func @transform_3(%arg0: i32, %arg1: i32) -> (i32, i32, i32, i32) {
    %c0_i32 = arith.constant 0 : i32
    %c0_i32_0 = arith.constant 0 : i32
    %c0_i32_1 = arith.constant 0 : i32
    %c0_i32_2 = arith.constant 0 : i32
    return %arg1, %c0_i32, %c0_i32_0, %c0_i32_1 : i32, i32, i32, i32
  }
  func.func @transform_4(%arg0: i32, %arg1: i32) -> (i32, i32, i32, i32) {
    %c0_i32 = arith.constant 0 : i32
    %c0_i32_0 = arith.constant 0 : i32
    %c0_i32_1 = arith.constant 0 : i32
    %c0_i32_2 = arith.constant 0 : i32
    return %arg1, %c0_i32, %c0_i32_0, %c0_i32_1 : i32, i32, i32, i32
  }
  func.func @transform_5(%arg0: i32, %arg1: i32) -> (i32, i32, i32, i32) {
    %c0_i32 = arith.constant 0 : i32
    %c0_i32_0 = arith.constant 0 : i32
    %c0_i32_1 = arith.constant 0 : i32
    %c0_i32_2 = arith.constant 0 : i32
    return %arg1, %c0_i32, %c0_i32_0, %c0_i32_1 : i32, i32, i32, i32
  }
  func.func @transform_6(%arg0: i32, %arg1: i32) -> (i32, i32, i32, i32) {
    %c0_i32 = arith.constant 0 : i32
    %c0_i32_0 = arith.constant 0 : i32
    %c0_i32_1 = arith.constant 0 : i32
    %c0_i32_2 = arith.constant 0 : i32
    return %arg1, %c0_i32, %c0_i32_0, %c0_i32_1 : i32, i32, i32, i32
  }
  func.func @transform_7(%arg0: i32, %arg1: i32) -> (i32, i32, i32, i32) {
    %c0_i32 = arith.constant 0 : i32
    %c0_i32_0 = arith.constant 0 : i32
    %c0_i32_1 = arith.constant 0 : i32
    %c0_i32_2 = arith.constant 0 : i32
    return %arg1, %c0_i32, %c0_i32_0, %c0_i32_1 : i32, i32, i32, i32
  }
  func.func @transform_8(%arg0: i32, %arg1: i32) -> (i32, i32, i32) {
    %c0_i32 = arith.constant 0 : i32
    %c0_i32_0 = arith.constant 0 : i32
    %c0_i32_1 = arith.constant 0 : i32
    return %arg1, %c0_i32, %c0_i32_0 : i32, i32, i32
  }
  func.func @transform_9(%arg0: i32, %arg1: i32) -> (i32, i32, i32) {
    %c0_i32 = arith.constant 0 : i32
    %c0_i32_0 = arith.constant 0 : i32
    %c0_i32_1 = arith.constant 0 : i32
    return %arg1, %c0_i32, %c0_i32_0 : i32, i32, i32
  }
  func.func @transform_10(%arg0: i32, %arg1: i32) -> (i32, i32, i32) {
    %c0_i32 = arith.constant 0 : i32
    %c0_i32_0 = arith.constant 0 : i32
    %c0_i32_1 = arith.constant 0 : i32
    return %arg1, %c0_i32, %c0_i32_0 : i32, i32, i32
  }
  func.func @transform_11(%arg0: i32, %arg1: i32) -> (i32, i32, i32) {
    %c0_i32 = arith.constant 0 : i32
    %c0_i32_0 = arith.constant 0 : i32
    %c0_i32_1 = arith.constant 0 : i32
    return %arg1, %c0_i32, %c0_i32_0 : i32, i32, i32
  }
  func.func @transform_12(%arg0: i32, %arg1: i32) -> (i32, i32, i32, i32) {
    %c0_i32 = arith.constant 0 : i32
    %c0_i32_0 = arith.constant 0 : i32
    %c0_i32_1 = arith.constant 0 : i32
    %c0_i32_2 = arith.constant 0 : i32
    return %arg1, %c0_i32, %c0_i32_0, %c0_i32_1 : i32, i32, i32, i32
  }
  func.func @transform_13(%arg0: i32, %arg1: i32) -> (i32, i32, i32, i32) {
    %c0_i32 = arith.constant 0 : i32
    %c0_i32_0 = arith.constant 0 : i32
    %c0_i32_1 = arith.constant 0 : i32
    %c0_i32_2 = arith.constant 0 : i32
    return %arg1, %c0_i32, %c0_i32_0, %c0_i32_1 : i32, i32, i32, i32
  }
  func.func @transform_14(%arg0: i32, %arg1: i32) -> (i32, i32, i32) {
    %c0_i32 = arith.constant 0 : i32
    %c0_i32_0 = arith.constant 0 : i32
    %c0_i32_1 = arith.constant 0 : i32
    return %arg0, %c0_i32, %c0_i32_0 : i32, i32, i32
  }
}

</mosaic_0001>

<llo_original>
// kernel: tpu_custom_call.1
$region0: #{tpu_custom_call.1}
  #allocation0 [shape = 'u32[]', space=smem, size = 0x4, offset = 0x4, fixed_abs, tag = 'smem constant byte address 0x4 - core index']
  #allocation1 [shape = 'u32[144,128]{1,0:T(1,128)}', space=vmem, size = 0x12000, scoped, tag = 'internal scratch']
  #allocation2 [shape = 'f32[16,32]{1,0:T(8,128)}', space=vmem, size = 0x2000, scoped, tag = 'scratch operand']
  #allocation3 [shape = 'bf16[16,32]{1,0:T(8,128)(2,1)}', space=vmem, size = 0x1000, scoped, tag = 'scratch operand']
  %s0 = inlined_call_operand.hbm [shape: f32[2,8,32], index: 0, kind: input, shape index: {}]
  %s1 = inlined_call_operand.hbm [shape: f32[8,32], index: 1, kind: input, shape index: {}]
  %s2 = inlined_call_operand.vmem [shape: bf16[2,2,32,32], index: 2, kind: input, shape index: {}]
  %s3 = inlined_call_operand.hbm [shape: f32[2,2,1,32], index: 3, kind: input, shape index: {}]
  %s4 = inlined_call_operand.hbm [shape: bf16[2,2,32,64], index: 4, kind: input, shape index: {}]
  %s5 = inlined_call_operand.hbm [shape: f32[2,2,1,64], index: 5, kind: input, shape index: {}]
  %s6 = inlined_call_operand.hbm [shape: bf16[2,2,32,32], index: 6, kind: input, shape index: {}]
  %s7 = inlined_call_operand.hbm [shape: f32[2,2,1,32], index: 7, kind: input, shape index: {}]
  %s8 = inlined_call_operand.vmem [shape: bf16[2,32,64], index: 8, kind: input, shape index: {}]
  %s9 = inlined_call_operand.vmem [shape: f32[2,1,64], index: 9, kind: input, shape index: {}]
  %s10 = inlined_call_operand.vmem [shape: bf16[2,64,32], index: 10, kind: input, shape index: {}]
  %s11 = inlined_call_operand.vmem [shape: f32[2,1,32], index: 11, kind: input, shape index: {}]
  %s12 = inlined_call_operand.vmem [shape: f32[2,3,1,32], index: 12, kind: input, shape index: {}]
  %s13 = inlined_call_operand.vmem [shape: f32[2,3,1,32], index: 13, kind: input, shape index: {}]
  %s14 = inlined_call_operand.hbm [shape: f32[2,8,32], index: 14, kind: output, shape index: {}]
  %s15 = sld [smem:[#allocation0]]
  $region125: #{tpu_custom_call.1} parent=0
    _
  %s17 = ssub.s32 1, %s15
  %s18 = scalar_select 0, %s17, %s15
  $region1: #{tpu_custom_call.1} parent=0
    #allocation4 [shape = 'u8[8192]{0}', space=vmem, size = 0x2000, scoped, tag = 'input window, operand 0, single buffered']
    #allocation5 [shape = 's32[2]{0}', space=sflag, size = 0x8, scoped, tag = 'scoped memory for tpu_custom_call.1']
    #allocation6 [shape = 's32[2]{0}', space=sflag, size = 0x8, scoped, tag = 'scoped memory for tpu_custom_call.1']
    #allocation7 [shape = 'u8[4096]{0}', space=vmem, size = 0x1000, scoped, tag = 'input window, operand 1, single buffered']
    #allocation8 [shape = 's32[1]{0}', space=sflag, size = 0x4, scoped, tag = 'scoped memory for tpu_custom_call.1']
    #allocation9 [shape = 'u8[2048]{0}', space=vmem, size = 0x800, scoped, tag = 'input window, operand 3']
    #allocation10 [shape = 'u8[32768]{0}', space=vmem, size = 0x8000, scoped, tag = 'input window, operand 4']
    #allocation11 [shape = 'u8[2048]{0}', space=vmem, size = 0x800, scoped, tag = 'input window, operand 5']
    #allocation12 [shape = 'u8[32768]{0}', space=vmem, size = 0x8000, scoped, tag = 'input window, operand 6']
    #allocation13 [shape = 'u8[2048]{0}', space=vmem, size = 0x800, scoped, tag = 'input window, operand 7']
    #allocation14 [shape = 'u8[8192]{0}', space=vmem, size = 0x2000, scoped, tag = 'output window, operand 0, single buffered']
    %19 = vsyncpa [#allocation5], 0
    %20 = vsyncpa [#allocation8], 0
    %21 = vsyncpa [#allocation6], 0
    loop: start=0, step=1, limit=4
    $region2: #{tpu_custom_call.1} parent=1 // loop_pre_header
      _
    $region3: #{tpu_custom_call.1} parent=1 // loop_header
      %s23 = sphi 0, %s27
      %p24 = scmp.ge.s32.totalorder %s23, 4
      %s30 = sphi 0, %s42
      %s31 = sphi 0, %s38
      %s32 = sphi 0, %s30
      %s33 = sphi 0, %s31
      %s34 = sphi 0, %s32
      %s35 = sphi 0, %s33
      %s45 = sphi 0, %s47
      %s48 = sphi 0, %s45
      %s49 = sphi 0, %s48
      %s65 = sphi 0, %s49
      %s69 = sphi 0, %s69
      %s71 = sphi 0, %s69
      %s72 = sphi 0, %s71
      %s86 = sphi 0, %s72
      %s92 = sphi 0, %s94
      %s95 = sphi 0, %s92
      %s96 = sphi 0, %s95
      %s112 = sphi 0, %s96
      %s118 = sphi 0, %s120
      %s121 = sphi 0, %s118
      %s122 = sphi 0, %s121
      %s138 = sphi 0, %s122
      %s144 = sphi 0, %s146
      %s147 = sphi 0, %s144
      %s148 = sphi 0, %s147
      %s164 = sphi 0, %s148
      %s170 = sphi 0, %s172
      %s173 = sphi 0, %s170
      %s174 = sphi 0, %s173
      %s190 = sphi 0, %s174
      %s196 = sphi 0, %s198
      %s199 = sphi 0, %s196
      %s200 = sphi 0, %s199
      %s216 = sphi 0, %s200
      %s222 = sphi 0, %s224
      %s225 = sphi 0, %s222
      %s226 = sphi 0, %s225
      %s242 = sphi 0, %s226
      %s248 = sphi 0, %s250
      %s251 = sphi 0, %s248
      %s252 = sphi 0, %s251
      %s268 = sphi 0, %s252
      %s274 = sphi 0, %s276
      %s277 = sphi 0, %s274
      %s278 = sphi 0, %s277
      %s294 = sphi 0, %s278
      %s300 = sphi 0, %s302
      %s303 = sphi 0, %s300
      %s304 = sphi 0, %s303
      %s320 = sphi 0, %s304
      %s326 = sphi 0, %s328
      %s329 = sphi 0, %s326
      %s330 = sphi 0, %s329
      %s346 = sphi 0, %s330
      %s352 = sphi 0, %s354
      %s355 = sphi 0, %s352
      %s356 = sphi 0, %s355
      %s372 = sphi 0, %s356
      %s378 = sphi 0, %s380
      %s381 = sphi 0, %s378
      %s382 = sphi 0, %s381
      %s398 = sphi 0, %s382
      %s404 = sphi 0, %s406
      %s407 = sphi 0, %s404
      %s408 = sphi 0, %s407
      %s424 = sphi 0, %s408
    $region4: #{tpu_custom_call.1} parent=1 // loop_header_branch
      %26 = sbr.rel (%p24) target = $region8
    $region5: #{tpu_custom_call.1} parent=1 // loop_body
      %s28 = ssub.s32 %s23, 1
      %s29 = ssub.s32 %s23, 2
      %s36 = sadd.s32 1, %s31
      %p37 = scmp.ge.s32.totalorder %s36, 2
      %s38 = scalar_select %p37, 0, %s36
      %s39 = sadd.s32 1, %s30
      %s40 = scalar_select %p37, %s39, %s30
      %p41 = scmp.ge.s32.totalorder %s40, 1
      %s42 = scalar_select %p41, 0, %s40
      %s43 = ssub.s32 %s30, %s42
      %p44 = scmp.eq.s32.totalorder %s43, 0
      %s46 = sadd.s32 %s45, 1
      %s47 = scalar_select %p44, %s45, %s46
      %p50 = pneg %p44
      %p51 = scmp.eq.s32.totalorder %s23, 1
      %p52 = por %p50, %p51
      %p53 = scmp.ne.s32.totalorder %s45, %s48
      %p54 = scmp.eq.s32.totalorder %s23, 0
      %p55 = por %p53, %p54
      %p56 = scmp.ne.s32.totalorder %s45, %s48
      %p57 = scmp.eq.s32.totalorder %s28, 1
      %p58 = por %p56, %p57
      %p59 = scmp.ne.s32.totalorder %s48, %s49
      %p60 = scmp.eq.s32.totalorder %s28, 0
      %p61 = por %p59, %p60
      %p62 = scmp.ne.s32.totalorder %s48, %s49
      %p63 = scmp.eq.s32.totalorder %s29, 1
      %p64 = por %p62, %p63
      %p66 = scmp.ne.s32.totalorder %s49, %s65
      %p67 = scmp.eq.s32.totalorder %s29, 0
      %p68 = por %p66, %p67
      %s70 = sadd.s32 %s69, 1
      %p73 = scmp.eq.s32.totalorder %s23, 1
      %p74 = scmp.ne.s32.totalorder %s69, %s71
      %p75 = scmp.eq.s32.totalorder %s23, 0
      %p76 = por %p74, %p75
      %p77 = scmp.ne.s32.totalorder %s69, %s71
      %p78 = scmp.eq.s32.totalorder %s28, 1
      %p79 = por %p77, %p78
      %p80 = scmp.ne.s32.totalorder %s71, %s72
      %p81 = scmp.eq.s32.totalorder %s28, 0
      %p82 = por %p80, %p81
      %p83 = scmp.ne.s32.totalorder %s71, %s72
      %p84 = scmp.eq.s32.totalorder %s29, 1
      %p85 = por %p83, %p84
      %p87 = scmp.ne.s32.totalorder %s72, %s86
      %p88 = scmp.eq.s32.totalorder %s29, 0
      %p89 = por %p87, %p88
      %s90 = ssub.s32 %s31, %s38
      %p91 = scmp.eq.s32.totalorder %s90, 0
      %s93 = sadd.s32 %s92, 1
      %s94 = scalar_select %p91, %s92, %s93
      %p97 = pneg %p91
      %p98 = scmp.eq.s32.totalorder %s23, 1
      %p99 = por %p97, %p98
      %p100 = scmp.ne.s32.totalorder %s92, %s95
      %p101 = scmp.eq.s32.totalorder %s23, 0
      %p102 = por %p100, %p101
      %p103 = scmp.ne.s32.totalorder %s92, %s95
      %p104 = scmp.eq.s32.totalorder %s28, 1
      %p105 = por %p103, %p104
      %p106 = scmp.ne.s32.totalorder %s95, %s96
      %p107 = scmp.eq.s32.totalorder %s28, 0
      %p108 = por %p106, %p107
      %p109 = scmp.ne.s32.totalorder %s95, %s96
      %p110 = scmp.eq.s32.totalorder %s29, 1
      %p111 = por %p109, %p110
      %p113 = scmp.ne.s32.totalorder %s96, %s112
      %p114 = scmp.eq.s32.totalorder %s29, 0
      %p115 = por %p113, %p114
      %s116 = ssub.s32 %s31, %s38
      %p117 = scmp.eq.s32.totalorder %s116, 0
      %s119 = sadd.s32 %s118, 1
      %s120 = scalar_select %p117, %s118, %s119
      %p123 = pneg %p117
      %p124 = scmp.eq.s32.totalorder %s23, 1
      %p125 = por %p123, %p124
      %p126 = scmp.ne.s32.totalorder %s118, %s121
      %p127 = scmp.eq.s32.totalorder %s23, 0
      %p128 = por %p126, %p127
      %p129 = scmp.ne.s32.totalorder %s118, %s121
      %p130 = scmp.eq.s32.totalorder %s28, 1
      %p131 = por %p129, %p130
      %p132 = scmp.ne.s32.totalorder %s121, %s122
      %p133 = scmp.eq.s32.totalorder %s28, 0
      %p134 = por %p132, %p133
      %p135 = scmp.ne.s32.totalorder %s121, %s122
      %p136 = scmp.eq.s32.totalorder %s29, 1
      %p137 = por %p135, %p136
      %p139 = scmp.ne.s32.totalorder %s122, %s138
      %p140 = scmp.eq.s32.totalorder %s29, 0
      %p141 = por %p139, %p140
      %s142 = ssub.s32 %s31, %s38
      %p143 = scmp.eq.s32.totalorder %s142, 0
      %s145 = sadd.s32 %s144, 1
      %s146 = scalar_select %p143, %s144, %s145
      %p149 = pneg %p143
      %p150 = scmp.eq.s32.totalorder %s23, 1
      %p151 = por %p149, %p150
      %p152 = scmp.ne.s32.totalorder %s144, %s147
      %p153 = scmp.eq.s32.totalorder %s23, 0
      %p154 = por %p152, %p153
      %p155 = scmp.ne.s32.totalorder %s144, %s147
      %p156 = scmp.eq.s32.totalorder %s28, 1
      %p157 = por %p155, %p156
      %p158 = scmp.ne.s32.totalorder %s147, %s148
      %p159 = scmp.eq.s32.totalorder %s28, 0
      %p160 = por %p158, %p159
      %p161 = scmp.ne.s32.totalorder %s147, %s148
      %p162 = scmp.eq.s32.totalorder %s29, 1
      %p163 = por %p161, %p162
      %p165 = scmp.ne.s32.totalorder %s148, %s164
      %p166 = scmp.eq.s32.totalorder %s29, 0
      %p167 = por %p165, %p166
      %s168 = ssub.s32 %s31, %s38
      %p169 = scmp.eq.s32.totalorder %s168, 0
      %s171 = sadd.s32 %s170, 1
      %s172 = scalar_select %p169, %s170, %s171
      %p175 = pneg %p169
      %p176 = scmp.eq.s32.totalorder %s23, 1
      %p177 = por %p175, %p176
      %p178 = scmp.ne.s32.totalorder %s170, %s173
      %p179 = scmp.eq.s32.totalorder %s23, 0
      %p180 = por %p178, %p179
      %p181 = scmp.ne.s32.totalorder %s170, %s173
      %p182 = scmp.eq.s32.totalorder %s28, 1
      %p183 = por %p181, %p182
      %p184 = scmp.ne.s32.totalorder %s173, %s174
      %p185 = scmp.eq.s32.totalorder %s28, 0
      %p186 = por %p184, %p185
      %p187 = scmp.ne.s32.totalorder %s173, %s174
      %p188 = scmp.eq.s32.totalorder %s29, 1
      %p189 = por %p187, %p188
      %p191 = scmp.ne.s32.totalorder %s174, %s190
      %p192 = scmp.eq.s32.totalorder %s29, 0
      %p193 = por %p191, %p192
      %s194 = ssub.s32 %s31, %s38
      %p195 = scmp.eq.s32.totalorder %s194, 0
      %s197 = sadd.s32 %s196, 1
      %s198 = scalar_select %p195, %s196, %s197
      %p201 = pneg %p195
      %p202 = scmp.eq.s32.totalorder %s23, 1
      %p203 = por %p201, %p202
      %p204 = scmp.ne.s32.totalorder %s196, %s199
      %p205 = scmp.eq.s32.totalorder %s23, 0
      %p206 = por %p204, %p205
      %p207 = scmp.ne.s32.totalorder %s196, %s199
      %p208 = scmp.eq.s32.totalorder %s28, 1
      %p209 = por %p207, %p208
      %p210 = scmp.ne.s32.totalorder %s199, %s200
      %p211 = scmp.eq.s32.totalorder %s28, 0
      %p212 = por %p210, %p211
      %p213 = scmp.ne.s32.totalorder %s199, %s200
      %p214 = scmp.eq.s32.totalorder %s29, 1
      %p215 = por %p213, %p214
      %p217 = scmp.ne.s32.totalorder %s200, %s216
      %p218 = scmp.eq.s32.totalorder %s29, 0
      %p219 = por %p217, %p218
      %s220 = ssub.s32 %s31, %s38
      %p221 = scmp.eq.s32.totalorder %s220, 0
      %s223 = sadd.s32 %s222, 1
      %s224 = scalar_select %p221, %s222, %s223
      %p227 = pneg %p221
      %p228 = scmp.eq.s32.totalorder %s23, 1
      %p229 = por %p227, %p228
      %p230 = scmp.ne.s32.totalorder %s222, %s225
      %p231 = scmp.eq.s32.totalorder %s23, 0
      %p232 = por %p230, %p231
      %p233 = scmp.ne.s32.totalorder %s222, %s225
      %p234 = scmp.eq.s32.totalorder %s28, 1
      %p235 = por %p233, %p234
      %p236 = scmp.ne.s32.totalorder %s225, %s226
      %p237 = scmp.eq.s32.totalorder %s28, 0
      %p238 = por %p236, %p237
      %p239 = scmp.ne.s32.totalorder %s225, %s226
      %p240 = scmp.eq.s32.totalorder %s29, 1
      %p241 = por %p239, %p240
      %p243 = scmp.ne.s32.totalorder %s226, %s242
      %p244 = scmp.eq.s32.totalorder %s29, 0
      %p245 = por %p243, %p244
      %s246 = ssub.s32 %s31, %s38
      %p247 = scmp.eq.s32.totalorder %s246, 0
      %s249 = sadd.s32 %s248, 1
      %s250 = scalar_select %p247, %s248, %s249
      %p253 = pneg %p247
      %p254 = scmp.eq.s32.totalorder %s23, 1
      %p255 = por %p253, %p254
      %p256 = scmp.ne.s32.totalorder %s248, %s251
      %p257 = scmp.eq.s32.totalorder %s23, 0
      %p258 = por %p256, %p257
      %p259 = scmp.ne.s32.totalorder %s248, %s251
      %p260 = scmp.eq.s32.totalorder %s28, 1
      %p261 = por %p259, %p260
      %p262 = scmp.ne.s32.totalorder %s251, %s252
      %p263 = scmp.eq.s32.totalorder %s28, 0
      %p264 = por %p262, %p263
      %p265 = scmp.ne.s32.totalorder %s251, %s252
      %p266 = scmp.eq.s32.totalorder %s29, 1
      %p267 = por %p265, %p266
      %p269 = scmp.ne.s32.totalorder %s252, %s268
      %p270 = scmp.eq.s32.totalorder %s29, 0
      %p271 = por %p269, %p270
      %s272 = ssub.s32 %s31, %s38
      %p273 = scmp.eq.s32.totalorder %s272, 0
      %s275 = sadd.s32 %s274, 1
      %s276 = scalar_select %p273, %s274, %s275
      %p279 = pneg %p273
      %p280 = scmp.eq.s32.totalorder %s23, 1
      %p281 = por %p279, %p280
      %p282 = scmp.ne.s32.totalorder %s274, %s277
      %p283 = scmp.eq.s32.totalorder %s23, 0
      %p284 = por %p282, %p283
      %p285 = scmp.ne.s32.totalorder %s274, %s277
      %p286 = scmp.eq.s32.totalorder %s28, 1
      %p287 = por %p285, %p286
      %p288 = scmp.ne.s32.totalorder %s277, %s278
      %p289 = scmp.eq.s32.totalorder %s28, 0
      %p290 = por %p288, %p289
      %p291 = scmp.ne.s32.totalorder %s277, %s278
      %p292 = scmp.eq.s32.totalorder %s29, 1
      %p293 = por %p291, %p292
      %p295 = scmp.ne.s32.totalorder %s278, %s294
      %p296 = scmp.eq.s32.totalorder %s29, 0
      %p297 = por %p295, %p296
      %s298 = ssub.s32 %s31, %s38
      %p299 = scmp.eq.s32.totalorder %s298, 0
      %s301 = sadd.s32 %s300, 1
      %s302 = scalar_select %p299, %s300, %s301
      %p305 = pneg %p299
      %p306 = scmp.eq.s32.totalorder %s23, 1
      %p307 = por %p305, %p306
      %p308 = scmp.ne.s32.totalorder %s300, %s303
      %p309 = scmp.eq.s32.totalorder %s23, 0
      %p310 = por %p308, %p309
      %p311 = scmp.ne.s32.totalorder %s300, %s303
      %p312 = scmp.eq.s32.totalorder %s28, 1
      %p313 = por %p311, %p312
      %p314 = scmp.ne.s32.totalorder %s303, %s304
      %p315 = scmp.eq.s32.totalorder %s28, 0
      %p316 = por %p314, %p315
      %p317 = scmp.ne.s32.totalorder %s303, %s304
      %p318 = scmp.eq.s32.totalorder %s29, 1
      %p319 = por %p317, %p318
      %p321 = scmp.ne.s32.totalorder %s304, %s320
      %p322 = scmp.eq.s32.totalorder %s29, 0
      %p323 = por %p321, %p322
      %s324 = ssub.s32 %s31, %s38
      %p325 = scmp.eq.s32.totalorder %s324, 0
      %s327 = sadd.s32 %s326, 1
      %s328 = scalar_select %p325, %s326, %s327
      %p331 = pneg %p325
      %p332 = scmp.eq.s32.totalorder %s23, 1
      %p333 = por %p331, %p332
      %p334 = scmp.ne.s32.totalorder %s326, %s329
      %p335 = scmp.eq.s32.totalorder %s23, 0
      %p336 = por %p334, %p335
      %p337 = scmp.ne.s32.totalorder %s326, %s329
      %p338 = scmp.eq.s32.totalorder %s28, 1
      %p339 = por %p337, %p338
      %p340 = scmp.ne.s32.totalorder %s329, %s330
      %p341 = scmp.eq.s32.totalorder %s28, 0
      %p342 = por %p340, %p341
      %p343 = scmp.ne.s32.totalorder %s329, %s330
      %p344 = scmp.eq.s32.totalorder %s29, 1
      %p345 = por %p343, %p344
      %p347 = scmp.ne.s32.totalorder %s330, %s346
      %p348 = scmp.eq.s32.totalorder %s29, 0
      %p349 = por %p347, %p348
      %s350 = ssub.s32 %s31, %s38
      %p351 = scmp.eq.s32.totalorder %s350, 0
      %s353 = sadd.s32 %s352, 1
      %s354 = scalar_select %p351, %s352, %s353
      %p357 = pneg %p351
      %p358 = scmp.eq.s32.totalorder %s23, 1
      %p359 = por %p357, %p358
      %p360 = scmp.ne.s32.totalorder %s352, %s355
      %p361 = scmp.eq.s32.totalorder %s23, 0
      %p362 = por %p360, %p361
      %p363 = scmp.ne.s32.totalorder %s352, %s355
      %p364 = scmp.eq.s32.totalorder %s28, 1
      %p365 = por %p363, %p364
      %p366 = scmp.ne.s32.totalorder %s355, %s356
      %p367 = scmp.eq.s32.totalorder %s28, 0
      %p368 = por %p366, %p367
      %p369 = scmp.ne.s32.totalorder %s355, %s356
      %p370 = scmp.eq.s32.totalorder %s29, 1
      %p371 = por %p369, %p370
      %p373 = scmp.ne.s32.totalorder %s356, %s372
      %p374 = scmp.eq.s32.totalorder %s29, 0
      %p375 = por %p373, %p374
      %s376 = ssub.s32 %s31, %s38
      %p377 = scmp.eq.s32.totalorder %s376, 0
      %s379 = sadd.s32 %s378, 1
      %s380 = scalar_select %p377, %s378, %s379
      %p383 = pneg %p377
      %p384 = scmp.eq.s32.totalorder %s23, 1
      %p385 = por %p383, %p384
      %p386 = scmp.ne.s32.totalorder %s378, %s381
      %p387 = scmp.eq.s32.totalorder %s23, 0
      %p388 = por %p386, %p387
      %p389 = scmp.ne.s32.totalorder %s378, %s381
      %p390 = scmp.eq.s32.totalorder %s28, 1
      %p391 = por %p389, %p390
      %p392 = scmp.ne.s32.totalorder %s381, %s382
      %p393 = scmp.eq.s32.totalorder %s28, 0
      %p394 = por %p392, %p393
      %p395 = scmp.ne.s32.totalorder %s381, %s382
      %p396 = scmp.eq.s32.totalorder %s29, 1
      %p397 = por %p395, %p396
      %p399 = scmp.ne.s32.totalorder %s382, %s398
      %p400 = scmp.eq.s32.totalorder %s29, 0
      %p401 = por %p399, %p400
      %s402 = ssub.s32 %s30, %s42
      %p403 = scmp.eq.s32.totalorder %s402, 0
      %s405 = sadd.s32 %s404, 1
      %s406 = scalar_select %p403, %s404, %s405
      %p409 = pneg %p403
      %p410 = scmp.eq.s32.totalorder %s23, 1
      %p411 = por %p409, %p410
      %p412 = scmp.ne.s32.totalorder %s404, %s407
      %p413 = scmp.eq.s32.totalorder %s23, 0
      %p414 = por %p412, %p413
      %p415 = scmp.ne.s32.totalorder %s404, %s407
      %p416 = scmp.eq.s32.totalorder %s28, 1
      %p417 = por %p415, %p416
      %p418 = scmp.ne.s32.totalorder %s407, %s408
      %p419 = scmp.eq.s32.totalorder %s28, 0
      %p420 = por %p418, %p419
      %p421 = scmp.ne.s32.totalorder %s407, %s408
      %p422 = scmp.eq.s32.totalorder %s29, 1
      %p423 = por %p421, %p422
      %p425 = scmp.ne.s32.totalorder %s408, %s424
      %p426 = scmp.eq.s32.totalorder %s29, 0
      %p427 = por %p425, %p426
      %p428 = scmp.le.s32.totalorder 1, %s23
      %p429 = scmp.lt.s32.totalorder %s23, 3
      %p430 = pnand %p428, %p429
      %p431 = pneg %p430
      // Predicated region
      $region9: #{tpu_custom_call.1} parent=5 // pred_check
        _
      $region10: #{tpu_custom_call.1} parent=5 // pred_check_branch
        %433 = sbr.rel (%p430) target = $region12
      $region11: #{tpu_custom_call.1} parent=5 // pred_region
        %s434 = ssub.s32 %s23, 1
        // Predicated region
        $region13: #{tpu_custom_call.1} parent=11 // pred_check
          %p435 = pneg %p61
        $region14: #{tpu_custom_call.1} parent=11 // pred_check_branch
          %437 = sbr.rel (%p435) target = $region16
        $region15: #{tpu_custom_call.1} parent=11 // pred_region
          %s438 = smul.u32 2, %s32
          %s440 = ssub.s32 256, 256
          %441 = vsyncadd [#allocation5], %s440
          %s442 = smul.addr %s438, 128
          %s443 = scalar_lea.hbm %s0, %s442
          %s444 = sshll.u32 [#allocation4], 4
          %s445 = int_to_ptr.vmem [resolvable:$true] %s444
          %450 = dma.hbm_to_vmem [thread:$0]  %s443, 256, %s445, [#allocation5], 128, 128, 8
        $region16: #{tpu_custom_call.1} parent=11 // pred_fallthru
          _
        // Predicated region
        $region17: #{tpu_custom_call.1} parent=11 // pred_check
          %p451 = pneg %p82
        $region18: #{tpu_custom_call.1} parent=11 // pred_check_branch
          %453 = sbr.rel (%p451) target = $region20
        $region19: #{tpu_custom_call.1} parent=11 // pred_region
          %s455 = ssub.s32 128, 128
          %456 = vsyncadd [#allocation8], %s455
          %s458 = sshll.u32 [#allocation7], 4
          %s459 = int_to_ptr.vmem [resolvable:$true] %s458
          %461 = dma.hbm_to_vmem [thread:$0]  %s1, 128, %s459, [#allocation8]
        $region20: #{tpu_custom_call.1} parent=11 // pred_fallthru
          _
      $region12: #{tpu_custom_call.1} parent=5 // pred_fallthru
        _
      %p462 = scmp.lt.s32.totalorder %s23, 2
      // Predicated region
      $region21: #{tpu_custom_call.1} parent=5 // pred_check
        %p463 = pneg %p462
      $region22: #{tpu_custom_call.1} parent=5 // pred_check_branch
        %465 = sbr.rel (%p463) target = $region24
      $region23: #{tpu_custom_call.1} parent=5 // pred_region
        // Predicated region
        $region25: #{tpu_custom_call.1} parent=23 // pred_check
          %p466 = pneg %p102
        $region26: #{tpu_custom_call.1} parent=23 // pred_check_branch
          %468 = sbr.rel (%p466) target = $region28
        $region27: #{tpu_custom_call.1} parent=23 // pred_region
          %p469 = scmp.lt.s32.totalorder %s31, 1
          %s470 = scalar_select %p469, %s31, 1
          %s471 = smul.addr %s470, 8
          %s472 = smul.addr %s471, 4
          %s473 = scalar_lea.vmem %s2, %s472
        $region28: #{tpu_custom_call.1} parent=23 // pred_fallthru
          _
        // Predicated region
        $region29: #{tpu_custom_call.1} parent=23 // pred_check
          %p474 = pneg %p128
        $region30: #{tpu_custom_call.1} parent=23 // pred_check_branch
          %476 = sbr.rel (%p474) target = $region32
        $region31: #{tpu_custom_call.1} parent=23 // pred_region
          %s477 = sand.u32 %s23, 1
          %s478 = scalar_lea.sflag [#allocation5], %s477
          %s479 = sand.u32 %s118, 1
          %s480 = smul.addr %s479, 2
          %s481 = scalar_lea.vmem [#allocation9], %s480
          %s483 = ssub.s32 32, 32
          %484 = vsyncadd %s478, %s483
          %s485 = smul.addr %s31, 2
          %s486 = smul.addr %s485, 16
          %s487 = scalar_lea.hbm %s3, %s486
          %s488 = sshll.u32 %s481, 4
          %s489 = int_to_ptr.vmem [resolvable:$true] %s488
          %494 = dma.hbm_to_vmem [thread:$0]  %s487, 32, %s489, %s478, 16, 16, 1
        $region32: #{tpu_custom_call.1} parent=23 // pred_fallthru
          _
        // Predicated region
        $region33: #{tpu_custom_call.1} parent=23 // pred_check
          %p495 = pneg %p154
        $region34: #{tpu_custom_call.1} parent=23 // pred_check_branch
          %497 = sbr.rel (%p495) target = $region36
        $region35: #{tpu_custom_call.1} parent=23 // pred_region
          %s498 = sand.u32 %s23, 1
          %s499 = scalar_lea.sflag [#allocation5], %s498
          %s500 = sand.u32 %s144, 1
          %s501 = smul.addr %s500, 32
          %s502 = scalar_lea.vmem [#allocation10], %s501
          %s504 = ssub.s32 512, 512
          %505 = vsyncadd %s499, %s504
          %s506 = smul.addr %s31, 8
          %s507 = smul.addr %s506, 64
          %s508 = scalar_lea.hbm %s4, %s507
          %s509 = sshll.u32 %s502, 4
          %s510 = int_to_ptr.vmem [resolvable:$true] %s509
          %515 = dma.hbm_to_vmem [thread:$0]  %s508, 512, %s510, %s499, 64, 64, 4
        $region36: #{tpu_custom_call.1} parent=23 // pred_fallthru
          _
        // Predicated region
        $region37: #{tpu_custom_call.1} parent=23 // pred_check
          %p516 = pneg %p180
        $region38: #{tpu_custom_call.1} parent=23 // pred_check_branch
          %518 = sbr.rel (%p516) target = $region40
        $region39: #{tpu_custom_call.1} parent=23 // pred_region
          %s519 = sand.u32 %s23, 1
          %s520 = scalar_lea.sflag [#allocation5], %s519
          %s521 = sand.u32 %s170, 1
          %s522 = smul.addr %s521, 2
          %s523 = scalar_lea.vmem [#allocation11], %s522
          %s525 = ssub.s32 32, 32
          %526 = vsyncadd %s520, %s525
          %s527 = smul.addr %s31, 2
          %s528 = smul.addr %s527, 16
          %s529 = scalar_lea.hbm %s5, %s528
          %s530 = sshll.u32 %s523, 4
          %s531 = int_to_ptr.vmem [resolvable:$true] %s530
          %536 = dma.hbm_to_vmem [thread:$0]  %s529, 32, %s531, %s520, 16, 16, 1
        $region40: #{tpu_custom_call.1} parent=23 // pred_fallthru
          _
        // Predicated region
        $region41: #{tpu_custom_call.1} parent=23 // pred_check
          %p537 = pneg %p206
        $region42: #{tpu_custom_call.1} parent=23 // pred_check_branch
          %539 = sbr.rel (%p537) target = $region44
        $region43: #{tpu_custom_call.1} parent=23 // pred_region
          %s540 = sand.u32 %s23, 1
          %s541 = scalar_lea.sflag [#allocation5], %s540
          %s542 = sand.u32 %s196, 1
          %s543 = smul.addr %s542, 32
          %s544 = scalar_lea.vmem [#allocation12], %s543
          %s546 = ssub.s32 512, 512
          %547 = vsyncadd %s541, %s546
          %s548 = smul.addr %s31, 8
          %s549 = smul.addr %s548, 64
          %s550 = scalar_lea.hbm %s6, %s549
          %s551 = sshll.u32 %s544, 4
          %s552 = int_to_ptr.vmem [resolvable:$true] %s551
          %557 = dma.hbm_to_vmem [thread:$0]  %s550, 512, %s552, %s541, 64, 64, 4
        $region44: #{tpu_custom_call.1} parent=23 // pred_fallthru
          _
        // Predicated region
        $region45: #{tpu_custom_call.1} parent=23 // pred_check
          %p558 = pneg %p232
        $region46: #{tpu_custom_call.1} parent=23 // pred_check_branch
          %560 = sbr.rel (%p558) target = $region48
        $region47: #{tpu_custom_call.1} parent=23 // pred_region
          %s561 = sand.u32 %s23, 1
          %s562 = scalar_lea.sflag [#allocation5], %s561
          %s563 = sand.u32 %s222, 1
          %s564 = smul.addr %s563, 2
          %s565 = scalar_lea.vmem [#allocation13], %s564
          %s567 = ssub.s32 32, 32
          %568 = vsyncadd %s562, %s567
          %s569 = smul.addr %s31, 2
          %s570 = smul.addr %s569, 16
          %s571 = scalar_lea.hbm %s7, %s570
          %s572 = sshll.u32 %s565, 4
          %s573 = int_to_ptr.vmem [resolvable:$true] %s572
          %578 = dma.hbm_to_vmem [thread:$0]  %s571, 32, %s573, %s562, 16, 16, 1
        $region48: #{tpu_custom_call.1} parent=23 // pred_fallthru
          _
        // Predicated region
        $region49: #{tpu_custom_call.1} parent=23 // pred_check
          %p579 = pneg %p258
        $region50: #{tpu_custom_call.1} parent=23 // pred_check_branch
          %581 = sbr.rel (%p579) target = $region52
        $region51: #{tpu_custom_call.1} parent=23 // pred_region
          %p582 = scmp.lt.s32.totalorder %s31, 1
          %s583 = scalar_select %p582, %s31, 1
          %s584 = smul.addr %s583, 4
          %s585 = smul.addr %s584, 4
          %s586 = scalar_lea.vmem %s8, %s585
        $region52: #{tpu_custom_call.1} parent=23 // pred_fallthru
          _
        // Predicated region
        $region53: #{tpu_custom_call.1} parent=23 // pred_check
          %p587 = pneg %p284
        $region54: #{tpu_custom_call.1} parent=23 // pred_check_branch
          %589 = sbr.rel (%p587) target = $region56
        $region55: #{tpu_custom_call.1} parent=23 // pred_region
          %p590 = scmp.lt.s32.totalorder %s31, 1
          %s591 = scalar_select %p590, %s31, 1
          %s592 = scalar_lea.vmem %s9, %s591
        $region56: #{tpu_custom_call.1} parent=23 // pred_fallthru
          _
        // Predicated region
        $region57: #{tpu_custom_call.1} parent=23 // pred_check
          %p593 = pneg %p310
        $region58: #{tpu_custom_call.1} parent=23 // pred_check_branch
          %595 = sbr.rel (%p593) target = $region60
        $region59: #{tpu_custom_call.1} parent=23 // pred_region
          %p596 = scmp.lt.s32.totalorder %s31, 1
          %s597 = scalar_select %p596, %s31, 1
          %s598 = smul.addr %s597, 8
          %s599 = smul.addr %s598, 4
          %s600 = scalar_lea.vmem %s10, %s599
        $region60: #{tpu_custom_call.1} parent=23 // pred_fallthru
          _
        // Predicated region
        $region61: #{tpu_custom_call.1} parent=23 // pred_check
          %p601 = pneg %p336
        $region62: #{tpu_custom_call.1} parent=23 // pred_check_branch
          %603 = sbr.rel (%p601) target = $region64
        $region63: #{tpu_custom_call.1} parent=23 // pred_region
          %p604 = scmp.lt.s32.totalorder %s31, 1
          %s605 = scalar_select %p604, %s31, 1
          %s606 = scalar_lea.vmem %s11, %s605
        $region64: #{tpu_custom_call.1} parent=23 // pred_fallthru
          _
        // Predicated region
        $region65: #{tpu_custom_call.1} parent=23 // pred_check
          %p607 = pneg %p362
        $region66: #{tpu_custom_call.1} parent=23 // pred_check_branch
          %609 = sbr.rel (%p607) target = $region68
        $region67: #{tpu_custom_call.1} parent=23 // pred_region
          %p610 = scmp.lt.s32.totalorder %s31, 1
          %s611 = scalar_select %p610, %s31, 1
          %s612 = smul.addr %s611, 3
          %s613 = scalar_lea.vmem %s12, %s612
        $region68: #{tpu_custom_call.1} parent=23 // pred_fallthru
          _
        // Predicated region
        $region69: #{tpu_custom_call.1} parent=23 // pred_check
          %p614 = pneg %p388
        $region70: #{tpu_custom_call.1} parent=23 // pred_check_branch
          %616 = sbr.rel (%p614) target = $region72
        $region71: #{tpu_custom_call.1} parent=23 // pred_region
          %p617 = scmp.lt.s32.totalorder %s31, 1
          %s618 = scalar_select %p617, %s31, 1
          %s619 = smul.addr %s618, 3
          %s620 = scalar_lea.vmem %s13, %s619
        $region72: #{tpu_custom_call.1} parent=23 // pred_fallthru
          _
      $region24: #{tpu_custom_call.1} parent=5 // pred_fallthru
        _
      %p621 = scmp.le.s32.totalorder 1, %s23
      %p622 = scmp.lt.s32.totalorder %s23, 3
      %p623 = pnand %p621, %p622
      %p624 = pneg %p623
      // Predicated region
      $region73: #{tpu_custom_call.1} parent=5 // pred_check
        _
      $region74: #{tpu_custom_call.1} parent=5 // pred_check_branch
        %626 = sbr.rel (%p623) target = $region76
      $region75: #{tpu_custom_call.1} parent=5 // pred_region
        %s627 = ssub.s32 %s23, 1
        // Predicated region
        $region77: #{tpu_custom_call.1} parent=75 // pred_check
          %p628 = pneg %p61
        $region78: #{tpu_custom_call.1} parent=75 // pred_check_branch
          %630 = sbr.rel (%p628) target = $region80
        $region79: #{tpu_custom_call.1} parent=75 // pred_region
          %631 = dma.done [#allocation5], 256
        $region80: #{tpu_custom_call.1} parent=75 // pred_fallthru
          _
        // Predicated region
        $region81: #{tpu_custom_call.1} parent=75 // pred_check
          %p632 = pneg %p82
        $region82: #{tpu_custom_call.1} parent=75 // pred_check_branch
          %634 = sbr.rel (%p632) target = $region84
        $region83: #{tpu_custom_call.1} parent=75 // pred_region
          %635 = dma.done [#allocation8], 128
        $region84: #{tpu_custom_call.1} parent=75 // pred_fallthru
          _
        %s636 = sand.u32 %s28, 1
        %s637 = scalar_lea.sflag [#allocation5], %s636
        %s638 = sand.u32 %s121, 1
        %s639 = smul.addr %s638, 2
        %s640 = scalar_lea.vmem [#allocation9], %s639
        // Predicated region
        $region85: #{tpu_custom_call.1} parent=75 // pred_check
          %p641 = pneg %p134
        $region86: #{tpu_custom_call.1} parent=75 // pred_check_branch
          %643 = sbr.rel (%p641) target = $region88
        $region87: #{tpu_custom_call.1} parent=75 // pred_region
          %644 = dma.done %s637, 32
        $region88: #{tpu_custom_call.1} parent=75 // pred_fallthru
          _
        %s645 = sand.u32 %s28, 1
        %s646 = scalar_lea.sflag [#allocation5], %s645
        %s647 = sand.u32 %s147, 1
        %s648 = smul.addr %s647, 32
        %s649 = scalar_lea.vmem [#allocation10], %s648
        // Predicated region
        $region89: #{tpu_custom_call.1} parent=75 // pred_check
          %p650 = pneg %p160
        $region90: #{tpu_custom_call.1} parent=75 // pred_check_branch
          %652 = sbr.rel (%p650) target = $region92
        $region91: #{tpu_custom_call.1} parent=75 // pred_region
          %653 = dma.done %s646, 512
        $region92: #{tpu_custom_call.1} parent=75 // pred_fallthru
          _
        %s654 = sand.u32 %s28, 1
        %s655 = scalar_lea.sflag [#allocation5], %s654
        %s656 = sand.u32 %s173, 1
        %s657 = smul.addr %s656, 2
        %s658 = scalar_lea.vmem [#allocation11], %s657
        // Predicated region
        $region93: #{tpu_custom_call.1} parent=75 // pred_check
          %p659 = pneg %p186
        $region94: #{tpu_custom_call.1} parent=75 // pred_check_branch
          %661 = sbr.rel (%p659) target = $region96
        $region95: #{tpu_custom_call.1} parent=75 // pred_region
          %662 = dma.done %s655, 32
        $region96: #{tpu_custom_call.1} parent=75 // pred_fallthru
          _
        %s663 = sand.u32 %s28, 1
        %s664 = scalar_lea.sflag [#allocation5], %s663
        %s665 = sand.u32 %s199, 1
        %s666 = smul.addr %s665, 32
        %s667 = scalar_lea.vmem [#allocation12], %s666
        // Predicated region
        $region97: #{tpu_custom_call.1} parent=75 // pred_check
          %p668 = pneg %p212
        $region98: #{tpu_custom_call.1} parent=75 // pred_check_branch
          %670 = sbr.rel (%p668) target = $region100
        $region99: #{tpu_custom_call.1} parent=75 // pred_region
          %671 = dma.done %s664, 512
        $region100: #{tpu_custom_call.1} parent=75 // pred_fallthru
          _
        %s672 = sand.u32 %s28, 1
        %s673 = scalar_lea.sflag [#allocation5], %s672
        %s674 = sand.u32 %s225, 1
        %s675 = smul.addr %s674, 2
        %s676 = scalar_lea.vmem [#allocation13], %s675
        // Predicated region
        $region101: #{tpu_custom_call.1} parent=75 // pred_check
          %p677 = pneg %p238
        $region102: #{tpu_custom_call.1} parent=75 // pred_check_branch
          %679 = sbr.rel (%p677) target = $region104
        $region103: #{tpu_custom_call.1} parent=75 // pred_region
          %680 = dma.done %s673, 32
        $region104: #{tpu_custom_call.1} parent=75 // pred_fallthru
          _
        %p681 = pneg %p61
        %p682 = pneg %p58
        %p683 = pneg %p82
        %p684 = pneg %p79
        %p685 = scmp.lt.s32.totalorder %s33, 1
        %s686 = scalar_select %p685, %s33, 1
        %s687 = smul.addr %s686, 8
        %s688 = smul.addr %s687, 4
        %s689 = scalar_lea.vmem %s2, %s688
        %p690 = pneg %p108
        %p691 = pneg %p105
        %s692 = sand.u32 %s28, 1
        %s693 = scalar_lea.sflag [#allocation5], %s692
        %s694 = sand.u32 %s121, 1
        %s695 = smul.addr %s694, 2
        %s696 = scalar_lea.vmem [#allocation9], %s695
        %p697 = pneg %p134
        %p698 = pneg %p131
        %s699 = sand.u32 %s28, 1
        %s700 = scalar_lea.sflag [#allocation5], %s699
        %s701 = sand.u32 %s147, 1
        %s702 = smul.addr %s701, 32
        %s703 = scalar_lea.vmem [#allocation10], %s702
        %p704 = pneg %p160
        %p705 = pneg %p157
        %s706 = sand.u32 %s28, 1
        %s707 = scalar_lea.sflag [#allocation5], %s706
        %s708 = sand.u32 %s173, 1
        %s709 = smul.addr %s708, 2
        %s710 = scalar_lea.vmem [#allocation11], %s709
        %p711 = pneg %p186
        %p712 = pneg %p183
        %s713 = sand.u32 %s28, 1
        %s714 = scalar_lea.sflag [#allocation5], %s713
        %s715 = sand.u32 %s199, 1
        %s716 = smul.addr %s715, 32
        %s717 = scalar_lea.vmem [#allocation12], %s716
        %p718 = pneg %p212
        %p719 = pneg %p209
        %s720 = sand.u32 %s28, 1
        %s721 = scalar_lea.sflag [#allocation5], %s720
        %s722 = sand.u32 %s225, 1
        %s723 = smul.addr %s722, 2
        %s724 = scalar_lea.vmem [#allocation13], %s723
        %p725 = pneg %p238
        %p726 = pneg %p235
        %p727 = scmp.lt.s32.totalorder %s33, 1
        %s728 = scalar_select %p727, %s33, 1
        %s729 = smul.addr %s728, 4
        %s730 = smul.addr %s729, 4
        %s731 = scalar_lea.vmem %s8, %s730
        %p732 = pneg %p264
        %p733 = pneg %p261
        %p734 = scmp.lt.s32.totalorder %s33, 1
        %s735 = scalar_select %p734, %s33, 1
        %s736 = scalar_lea.vmem %s9, %s735
        %p737 = pneg %p290
        %p738 = pneg %p287
        %p739 = scmp.lt.s32.totalorder %s33, 1
        %s740 = scalar_select %p739, %s33, 1
        %s741 = smul.addr %s740, 8
        %s742 = smul.addr %s741, 4
        %s743 = scalar_lea.vmem %s10, %s742
        %p744 = pneg %p316
        %p745 = pneg %p313
        %p746 = scmp.lt.s32.totalorder %s33, 1
        %s747 = scalar_select %p746, %s33, 1
        %s748 = scalar_lea.vmem %s11, %s747
        %p749 = pneg %p342
        %p750 = pneg %p339
        %p751 = scmp.lt.s32.totalorder %s33, 1
        %s752 = scalar_select %p751, %s33, 1
        %s753 = smul.addr %s752, 3
        %s754 = scalar_lea.vmem %s12, %s753
        %p755 = pneg %p368
        %p756 = pneg %p365
        %p757 = scmp.lt.s32.totalorder %s33, 1
        %s758 = scalar_select %p757, %s33, 1
        %s759 = smul.addr %s758, 3
        %s760 = scalar_lea.vmem %s13, %s759
        %p761 = pneg %p394
        %p762 = pneg %p391
        %p763 = pneg %p420
        %p764 = pneg %p417
        %s765 = smul.u32 2, %s32
        %p766 = scmp.lt.s32.totalorder %s33, 1
        %s767 = scalar_select %p766, %s33, 1
        %s768 = smul.addr %s767, 8
        %s769 = smul.addr %s768, 4
        %s770 = scalar_lea.vmem %s2, %s769
        %p771 = scmp.lt.s32.totalorder %s33, 1
        %s772 = scalar_select %p771, %s33, 1
        %s773 = smul.addr %s772, 4
        %s774 = smul.addr %s773, 4
        %s775 = scalar_lea.vmem %s8, %s774
        %p776 = scmp.lt.s32.totalorder %s33, 1
        %s777 = scalar_select %p776, %s33, 1
        %s778 = scalar_lea.vmem %s9, %s777
        %p779 = scmp.lt.s32.totalorder %s33, 1
        %s780 = scalar_select %p779, %s33, 1
        %s781 = smul.addr %s780, 8
        %s782 = smul.addr %s781, 4
        %s783 = scalar_lea.vmem %s10, %s782
        %p784 = scmp.lt.s32.totalorder %s33, 1
        %s785 = scalar_select %p784, %s33, 1
        %s786 = scalar_lea.vmem %s11, %s785
        %p787 = scmp.lt.s32.totalorder %s33, 1
        %s788 = scalar_select %p787, %s33, 1
        %s789 = smul.addr %s788, 3
        %s790 = scalar_lea.vmem %s12, %s789
        %p791 = scmp.lt.s32.totalorder %s33, 1
        %s792 = scalar_select %p791, %s33, 1
        %s793 = smul.addr %s792, 3
        %s794 = scalar_lea.vmem %s13, %s793
        %s795 = smul.u32 2, %s32
        %p797 = scmp.eq.s32.totalorder %s33, 0
        // Predicated region
        $region105: #{tpu_custom_call.1} parent=75 // pred_check
          %p798 = pneg %p797
        $region106: #{tpu_custom_call.1} parent=75 // pred_check_branch
          %800 = sbr.rel (%p798) target = $region108
        $region107: #{tpu_custom_call.1} parent=75 // pred_region
          %v801 = vld [vmem:[#allocation4] sm:$0xff]
          %v802 = vld [vmem:[#allocation4 + $0x8] sm:$0xff]
          %v803 = vld [vmem:[#allocation7] sm:$0xff]
          %v804 = vadd.f32 %v801, %v803
          %v805 = vadd.f32 %v802, %v803
          %vm806 = vcmask 261120
          %807 = vst.msk [vmem:[#allocation2] sm:$0xff] %vm806, %v804
          %808 = vst.msk [vmem:[#allocation2 + $0x8] sm:$0xff] %vm806, %v805
          %v809 = vpack.c.bf16 %v805, %v804
          %v811 = vunpack.c.l.b16 %v809
          %v812 = vunpack.c.h.b16 %v809
          %v813 = vpack.c.b16 %v811, %v811
          %v814 = vpack.c.b16 %v812, %v812
          %vm817 = vcmask 257024
          %818 = vst.msk [vmem:[#allocation3] sm:$0xf] %vm817, %v813
          %819 = vst.msk [vmem:[#allocation3 + $0x4] sm:$0xf] %vm817, %v814
        $region108: #{tpu_custom_call.1} parent=75 // pred_fallthru
          _
        %v820 = vld [vmem:[#allocation2] sm:$0xff]
        %v821 = vld [vmem:[#allocation2 + $0x8] sm:$0xff]
        %v822 = vpack.c.bf16 %v821, %v820
        %v823 = vld [vmem:[%s770] sm:$0xf]
        %v824 = vld [vmem:[%s770 + $0x4] sm:$0xf]
        %v825 = vld [vmem:[%s770 + $0x8] sm:$0xf]
        %v826 = vld [vmem:[%s770 + $0xc] sm:$0xf]
        %v827 = vld [vmem:[%s640] sm:$0x1]
        %v829 = vlaneseq
        %v830 = vshrl.u32 %v829, 7
        %v831 = vsub.s32 0, %v830
        %v832 = vrot.slane %v827, %v831
        %v838 = vunpack.c.l.b16 %v823
        %v839 = vunpack.c.l.b16 %v824
        %v840 = vunpack.c.l.b16 %v825
        %v841 = vunpack.c.l.b16 %v826
        %v842 = vpack.c.b16 %v839, %v838
        %v843 = vpack.c.b16 %v841, %v840
        %vm846 = vcmask 261120
        %v848 = vsel %vm846, %v822, 0
        %850 = vmatprep.subr.bf16.mxu0 0
        %851 = vmatpush1.bf16.msra.mxu0 0
        %852 = vmatprep.subr.bf16.mxu0 0
        %853 = vmatpush1.bf16.msra.mxu0 0
        %854 = vmatprep.subr.bf16.mxu0 0
        %855 = vmatpush1.bf16.msra.mxu0 0
        %856 = vmatprep.subr.bf16.mxu0 0
        %857 = vmatpush1.bf16.msra.mxu0 0
        %858 = vmatprep.subr.bf16.mxu0 0
        %859 = vmatpush1.bf16.msra.mxu0 0
        %860 = vmatprep.subr.bf16.mxu0 0
        %861 = vmatpush1.bf16.msra.mxu0 0
        %862 = vmatprep.subr.bf16.mxu0 0
        %863 = vmatpush1.bf16.msra.mxu0 %v843
        %864 = vmatprep.subr.bf16.mxu0 0
        %865 = vmatpush1.bf16.msra.mxu0 %v842
        %866 = vmatprep.subr.bf16.mxu0 0
        %867 = vmatpush2.bf16.msra.mxu0 0
        %868 = vmatprep.subr.bf16.mxu0 0
        %869 = vmatpush2.bf16.msra.mxu0 0
        %870 = vmatprep.subr.bf16.mxu0 0
        %871 = vmatpush2.bf16.msra.mxu0 0
        %872 = vmatprep.subr.bf16.mxu0 0
        %873 = vmatpush2.bf16.msra.mxu0 0
        %874 = vmatprep.subr.bf16.mxu0 0
        %875 = vmatpush2.bf16.msra.mxu0 0
        %876 = vmatprep.subr.bf16.mxu0 0
        %877 = vmatpush2.bf16.msra.mxu0 0
        %878 = vmatprep.subr.bf16.mxu0 0
        %879 = vmatpush2.bf16.msra.mxu0 0
        %880 = vmatprep.subr.bf16.mxu0 0
        %881 = vmatpush2.bf16.msra.mxu0 0
        %882 = vmatprep.mubr.bf16.mxu0 0
        %883 = vmatmul.mubr.bf16.gmra.mxu0 %v848
        %v884 = vpop.f32.mrf.mxu0
        %v885 = vadd.f32 %v832, %v884
        %v886 = vpop.f32.mrf.mxu0
        %v887 = vpop.f32.mrf.mxu0
        %v888 = vadd.f32 %v832, %v887
        %v889 = vpop.f32.mrf.mxu0
        %890 = vdwg.mxu0
        %v891 = vld [vmem:[%s649] sm:$0xf]
        %v892 = vld [vmem:[%s649 + $0x4] sm:$0xf]
        %v893 = vld [vmem:[%s649 + $0x8] sm:$0xf]
        %v894 = vld [vmem:[%s649 + $0xc] sm:$0xf]
        %v895 = vld [vmem:[%s658] sm:$0x1]
        %v897 = vlaneseq
        %v898 = vshrl.u32 %v897, 7
        %v899 = vsub.s32 0, %v898
        %v900 = vrot.slane %v895, %v899
        %v906 = vunpack.c.l.b16 %v891
        %v907 = vunpack.c.l.b16 %v892
        %v908 = vunpack.c.l.b16 %v893
        %v909 = vunpack.c.l.b16 %v894
        %v910 = vpack.c.b16 %v907, %v906
        %v911 = vpack.c.b16 %v909, %v908
        %914 = vmatprep.subr.bf16.mxu0 0
        %915 = vmatpush1.bf16.msra.mxu0 0
        %916 = vmatprep.subr.bf16.mxu0 0
        %917 = vmatpush1.bf16.msra.mxu0 0
        %918 = vmatprep.subr.bf16.mxu0 0
        %919 = vmatpush1.bf16.msra.mxu0 0
        %920 = vmatprep.subr.bf16.mxu0 0
        %921 = vmatpush1.bf16.msra.mxu0 0
        %922 = vmatprep.subr.bf16.mxu0 0
        %923 = vmatpush1.bf16.msra.mxu0 0
        %924 = vmatprep.subr.bf16.mxu0 0
        %925 = vmatpush1.bf16.msra.mxu0 0
        %926 = vmatprep.subr.bf16.mxu0 0
        %927 = vmatpush1.bf16.msra.mxu0 %v911
        %928 = vmatprep.subr.bf16.mxu0 0
        %929 = vmatpush1.bf16.msra.mxu0 %v910
        %930 = vmatprep.subr.bf16.mxu0 0
        %931 = vmatpush2.bf16.msra.mxu0 0
        %932 = vmatprep.subr.bf16.mxu0 0
        %933 = vmatpush2.bf16.msra.mxu0 0
        %934 = vmatprep.subr.bf16.mxu0 0
        %935 = vmatpush2.bf16.msra.mxu0 0
        %936 = vmatprep.subr.bf16.mxu0 0
        %937 = vmatpush2.bf16.msra.mxu0 0
        %938 = vmatprep.subr.bf16.mxu0 0
        %939 = vmatpush2.bf16.msra.mxu0 0
        %940 = vmatprep.subr.bf16.mxu0 0
        %941 = vmatpush2.bf16.msra.mxu0 0
        %942 = vmatprep.subr.bf16.mxu0 0
        %943 = vmatpush2.bf16.msra.mxu0 0
        %944 = vmatprep.subr.bf16.mxu0 0
        %945 = vmatpush2.bf16.msra.mxu0 0
        %946 = vmatprep.mubr.bf16.mxu0 0
        %947 = vmatmul.mubr.bf16.gmra.mxu0 %v848
        %v948 = vpop.f32.mrf.mxu0
        %v949 = vadd.f32 %v900, %v948
        %v950 = vpop.f32.mrf.mxu0
        %v951 = vpop.f32.mrf.mxu0
        %v952 = vadd.f32 %v900, %v951
        %v953 = vpop.f32.mrf.mxu0
        %954 = vdwg.mxu0
        %v955 = vpack.c.bf16 %v885, %v885
        %v956 = vpack.c.bf16 %v888, %v888
        %v957 = vpack.c.bf16 %v949, %v949
        %v958 = vpack.c.bf16 %v952, %v952
        %vm959 = vcmask 64512
        %v961 = vsel %vm959, %v955, 0
        %v964 = vsel %vm959, %v957, 0
        %966 = vmatprep.subr.bf16.mxu0 0
        %967 = vmatpush1.bf16.xpose.msra.mxu0 0
        %968 = vmatprep.subr.bf16.mxu0 0
        %969 = vmatpush1.bf16.xpose.msra.mxu0 0
        %970 = vmatprep.subr.bf16.mxu0 0
        %971 = vmatpush1.bf16.xpose.msra.mxu0 0
        %972 = vmatprep.subr.bf16.mxu0 0
        %973 = vmatpush1.bf16.xpose.msra.mxu0 0
        %974 = vmatprep.subr.bf16.mxu0 0
        %975 = vmatpush1.bf16.xpose.msra.mxu0 0
        %976 = vmatprep.subr.bf16.mxu0 0
        %977 = vmatpush1.bf16.xpose.msra.mxu0 0
        %978 = vmatprep.subr.bf16.mxu0 0
        %979 = vmatpush1.bf16.xpose.msra.mxu0 0
        %980 = vmatprep.subr.bf16.mxu0 0
        %981 = vmatpush1.bf16.xpose.msra.mxu0 %v964
        %982 = vmatprep.subr.bf16.mxu0 0
        %983 = vmatpush2.bf16.xpose.msra.mxu0 0
        %984 = vmatprep.subr.bf16.mxu0 0
        %985 = vmatpush2.bf16.xpose.msra.mxu0 0
        %986 = vmatprep.subr.bf16.mxu0 0
        %987 = vmatpush2.bf16.xpose.msra.mxu0 0
        %988 = vmatprep.subr.bf16.mxu0 0
        %989 = vmatpush2.bf16.xpose.msra.mxu0 0
        %990 = vmatprep.subr.bf16.mxu0 0
        %991 = vmatpush2.bf16.xpose.msra.mxu0 0
        %992 = vmatprep.subr.bf16.mxu0 0
        %993 = vmatpush2.bf16.xpose.msra.mxu0 0
        %994 = vmatprep.subr.bf16.mxu0 0
        %995 = vmatpush2.bf16.xpose.msra.mxu0 0
        %996 = vmatprep.subr.bf16.mxu0 0
        %997 = vmatpush2.bf16.xpose.msra.mxu0 0
        %998 = vmatprep.mubr.bf16.mxu0 0
        %999 = vmatmul.mubr.bf16.gmra.mxu0 %v961
        %v1000 = vpop.f32.mrf.mxu0
        %v1001 = vadd.f32 0.0, %v1000
        %v1002 = vpop.f32.mrf.mxu0
        %v1003 = vpop.f32.mrf.mxu0
        %v1004 = vpop.f32.mrf.mxu0
        %1005 = vdwg.mxu0
        %v1007 = vsel %vm959, %v956, 0
        %v1010 = vsel %vm959, %v958, 0
        %1012 = vmatprep.subr.bf16.mxu0 0
        %1013 = vmatpush1.bf16.xpose.msra.mxu0 0
        %1014 = vmatprep.subr.bf16.mxu0 0
        %1015 = vmatpush1.bf16.xpose.msra.mxu0 0
        %1016 = vmatprep.subr.bf16.mxu0 0
        %1017 = vmatpush1.bf16.xpose.msra.mxu0 0
        %1018 = vmatprep.subr.bf16.mxu0 0
        %1019 = vmatpush1.bf16.xpose.msra.mxu0 0
        %1020 = vmatprep.subr.bf16.mxu0 0
        %1021 = vmatpush1.bf16.xpose.msra.mxu0 0
        %1022 = vmatprep.subr.bf16.mxu0 0
        %1023 = vmatpush1.bf16.xpose.msra.mxu0 0
        %1024 = vmatprep.subr.bf16.mxu0 0
        %1025 = vmatpush1.bf16.xpose.msra.mxu0 0
        %1026 = vmatprep.subr.bf16.mxu0 0
        %1027 = vmatpush1.bf16.xpose.msra.mxu0 %v1010
        %1028 = vmatprep.subr.bf16.mxu0 0
        %1029 = vmatpush2.bf16.xpose.msra.mxu0 0
        %1030 = vmatprep.subr.bf16.mxu0 0
        %1031 = vmatpush2.bf16.xpose.msra.mxu0 0
        %1032 = vmatprep.subr.bf16.mxu0 0
        %1033 = vmatpush2.bf16.xpose.msra.mxu0 0
        %1034 = vmatprep.subr.bf16.mxu0 0
        %1035 = vmatpush2.bf16.xpose.msra.mxu0 0
        %1036 = vmatprep.subr.bf16.mxu0 0
        %1037 = vmatpush2.bf16.xpose.msra.mxu0 0
        %1038 = vmatprep.subr.bf16.mxu0 0
        %1039 = vmatpush2.bf16.xpose.msra.mxu0 0
        %1040 = vmatprep.subr.bf16.mxu0 0
        %1041 = vmatpush2.bf16.xpose.msra.mxu0 0
        %1042 = vmatprep.subr.bf16.mxu0 0
        %1043 = vmatpush2.bf16.xpose.msra.mxu0 0
        %1044 = vmatprep.mubr.bf16.mxu0 0
        %1045 = vmatmul.mubr.bf16.gmra.mxu0 %v1007
        %v1046 = vpop.f32.mrf.mxu0
        %v1047 = vadd.f32 0.0, %v1046
        %v1048 = vpop.f32.mrf.mxu0
        %v1049 = vpop.f32.mrf.mxu0
        %v1050 = vpop.f32.mrf.mxu0
        %1051 = vdwg.mxu0
        %v1052 = vsel %vm959, %v1001, -inf
        %1053 = vmax.xlane.f32.xlu0 %v1052
        %v1054 = vpop.xlane.xlu0 %1053
        %v1055 = vsel %vm959, %v1047, -inf
        %1056 = vmax.xlane.f32.xlu0 %v1055
        %v1057 = vpop.xlane.xlu0 %1056
        %v1058 = vsub.f32 %v1001, %v1054
        %v1059 = vsub.f32 %v1047, %v1057
        %v1060 = vmul.f32 %v1058, 1.442695
        %v1061 = vpow.pop %v1060
        %v1062 = vmul.f32 %v1059, 1.442695
        %v1063 = vpow.pop %v1062
        %v1064 = vsel %vm959, %v1061, 0.0
        %1065 = vadd.xlane.f32.xlu0 %v1064
        %v1066 = vpop.xlane.xlu0 %1065
        %v1067 = vsel %vm959, %v1063, 0.0
        %1068 = vadd.xlane.f32.xlu0 %v1067
        %v1069 = vpop.xlane.xlu0 %1068
        %v1070 = vrcp.pop %v1066
        %v1071 = vmul.f32 %v1061, %v1070
        %v1072 = vrcp.pop %v1069
        %v1073 = vmul.f32 %v1063, %v1072
        %v1074 = vpack.c.bf16 %v1071, %v1071
        %v1075 = vpack.c.bf16 %v1073, %v1073
        %1077 = vrot.lane.b32.xlu0 %v957, 96
        %v1078 = vpop.permute.xlu0 %1077
        %v1080 = vsel %vm959, %v1074, 0
        %vm1082 = vcmask 1043456
        %v1084 = vsel %vm1082, %v1078, 0
        %1086 = vmatprep.subr.bf16.mxu0 0
        %1087 = vmatpush1.bf16.msra.mxu0 0
        %1088 = vmatprep.subr.bf16.mxu0 0
        %1089 = vmatpush1.bf16.msra.mxu0 0
        %1090 = vmatprep.subr.bf16.mxu0 0
        %1091 = vmatpush1.bf16.msra.mxu0 0
        %1092 = vmatprep.subr.bf16.mxu0 0
        %1093 = vmatpush1.bf16.msra.mxu0 0
        %1094 = vmatprep.subr.bf16.mxu0 0
        %1095 = vmatpush1.bf16.msra.mxu0 0
        %1096 = vmatprep.subr.bf16.mxu0 0
        %1097 = vmatpush1.bf16.msra.mxu0 0
        %1098 = vmatprep.subr.bf16.mxu0 0
        %1099 = vmatpush1.bf16.msra.mxu0 0
        %1100 = vmatprep.subr.bf16.mxu0 0
        %1101 = vmatpush1.bf16.msra.mxu0 %v1084
        %1102 = vmatprep.subr.bf16.mxu0 0
        %1103 = vmatpush2.bf16.msra.mxu0 0
        %1104 = vmatprep.subr.bf16.mxu0 0
        %1105 = vmatpush2.bf16.msra.mxu0 0
        %1106 = vmatprep.subr.bf16.mxu0 0
        %1107 = vmatpush2.bf16.msra.mxu0 0
        %1108 = vmatprep.subr.bf16.mxu0 0
        %1109 = vmatpush2.bf16.msra.mxu0 0
        %1110 = vmatprep.subr.bf16.mxu0 0
        %1111 = vmatpush2.bf16.msra.mxu0 0
        %1112 = vmatprep.subr.bf16.mxu0 0
        %1113 = vmatpush2.bf16.msra.mxu0 0
        %1114 = vmatprep.subr.bf16.mxu0 0
        %1115 = vmatpush2.bf16.msra.mxu0 0
        %1116 = vmatprep.subr.bf16.mxu0 0
        %1117 = vmatpush2.bf16.msra.mxu0 0
        %1118 = vmatprep.mubr.bf16.mxu0 0
        %1119 = vmatmul.mubr.bf16.gmra.mxu0 %v1080
        %v1120 = vpop.f32.mrf.mxu0
        %v1121 = vadd.f32 0.0, %v1120
        %v1122 = vpop.f32.mrf.mxu0
        %v1123 = vpop.f32.mrf.mxu0
        %v1124 = vpop.f32.mrf.mxu0
        %1125 = vdwg.mxu0
        %1127 = vrot.lane.b32.xlu0 %v958, 96
        %v1128 = vpop.permute.xlu0 %1127
        %v1130 = vsel %vm959, %v1075, 0
        %v1133 = vsel %vm1082, %v1128, 0
        %1135 = vmatprep.subr.bf16.mxu0 0
        %1136 = vmatpush1.bf16.msra.mxu0 0
        %1137 = vmatprep.subr.bf16.mxu0 0
        %1138 = vmatpush1.bf16.msra.mxu0 0
        %1139 = vmatprep.subr.bf16.mxu0 0
        %1140 = vmatpush1.bf16.msra.mxu0 0
        %1141 = vmatprep.subr.bf16.mxu0 0
        %1142 = vmatpush1.bf16.msra.mxu0 0
        %1143 = vmatprep.subr.bf16.mxu0 0
        %1144 = vmatpush1.bf16.msra.mxu0 0
        %1145 = vmatprep.subr.bf16.mxu0 0
        %1146 = vmatpush1.bf16.msra.mxu0 0
        %1147 = vmatprep.subr.bf16.mxu0 0
        %1148 = vmatpush1.bf16.msra.mxu0 0
        %1149 = vmatprep.subr.bf16.mxu0 0
        %1150 = vmatpush1.bf16.msra.mxu0 %v1133
        %1151 = vmatprep.subr.bf16.mxu0 0
        %1152 = vmatpush2.bf16.msra.mxu0 0
        %1153 = vmatprep.subr.bf16.mxu0 0
        %1154 = vmatpush2.bf16.msra.mxu0 0
        %1155 = vmatprep.subr.bf16.mxu0 0
        %1156 = vmatpush2.bf16.msra.mxu0 0
        %1157 = vmatprep.subr.bf16.mxu0 0
        %1158 = vmatpush2.bf16.msra.mxu0 0
        %1159 = vmatprep.subr.bf16.mxu0 0
        %1160 = vmatpush2.bf16.msra.mxu0 0
        %1161 = vmatprep.subr.bf16.mxu0 0
        %1162 = vmatpush2.bf16.msra.mxu0 0
        %1163 = vmatprep.subr.bf16.mxu0 0
        %1164 = vmatpush2.bf16.msra.mxu0 0
        %1165 = vmatprep.subr.bf16.mxu0 0
        %1166 = vmatpush2.bf16.msra.mxu0 0
        %1167 = vmatprep.mubr.bf16.mxu0 0
        %1168 = vmatmul.mubr.bf16.gmra.mxu0 %v1130
        %v1169 = vpop.f32.mrf.mxu0
        %v1170 = vadd.f32 0.0, %v1169
        %v1171 = vpop.f32.mrf.mxu0
        %v1172 = vpop.f32.mrf.mxu0
        %v1173 = vpop.f32.mrf.mxu0
        %1174 = vdwg.mxu0
        %1176 = vrot.lane.b32.xlu0 %v955, 120
        %v1177 = vpop.permute.xlu0 %1176
        %1178 = vrot.lane.b32.xlu0 %v957, 120
        %v1179 = vpop.permute.xlu0 %1178
        %v1181 = vsel %vm959, %v1177, 0
        %v1184 = vsel %vm959, %v1179, 0
        %1186 = vmatprep.subr.bf16.mxu0 0
        %1187 = vmatpush1.bf16.xpose.msra.mxu0 0
        %1188 = vmatprep.subr.bf16.mxu0 0
        %1189 = vmatpush1.bf16.xpose.msra.mxu0 0
        %1190 = vmatprep.subr.bf16.mxu0 0
        %1191 = vmatpush1.bf16.xpose.msra.mxu0 0
        %1192 = vmatprep.subr.bf16.mxu0 0
        %1193 = vmatpush1.bf16.xpose.msra.mxu0 0
        %1194 = vmatprep.subr.bf16.mxu0 0
        %1195 = vmatpush1.bf16.xpose.msra.mxu0 0
        %1196 = vmatprep.subr.bf16.mxu0 0
        %1197 = vmatpush1.bf16.xpose.msra.mxu0 0
        %1198 = vmatprep.subr.bf16.mxu0 0
        %1199 = vmatpush1.bf16.xpose.msra.mxu0 0
        %1200 = vmatprep.subr.bf16.mxu0 0
        %1201 = vmatpush1.bf16.xpose.msra.mxu0 %v1184
        %1202 = vmatprep.subr.bf16.mxu0 0
        %1203 = vmatpush2.bf16.xpose.msra.mxu0 0
        %1204 = vmatprep.subr.bf16.mxu0 0
        %1205 = vmatpush2.bf16.xpose.msra.mxu0 0
        %1206 = vmatprep.subr.bf16.mxu0 0
        %1207 = vmatpush2.bf16.xpose.msra.mxu0 0
        %1208 = vmatprep.subr.bf16.mxu0 0
        %1209 = vmatpush2.bf16.xpose.msra.mxu0 0
        %1210 = vmatprep.subr.bf16.mxu0 0
        %1211 = vmatpush2.bf16.xpose.msra.mxu0 0
        %1212 = vmatprep.subr.bf16.mxu0 0
        %1213 = vmatpush2.bf16.xpose.msra.mxu0 0
        %1214 = vmatprep.subr.bf16.mxu0 0
        %1215 = vmatpush2.bf16.xpose.msra.mxu0 0
        %1216 = vmatprep.subr.bf16.mxu0 0
        %1217 = vmatpush2.bf16.xpose.msra.mxu0 0
        %1218 = vmatprep.mubr.bf16.mxu0 0
        %1219 = vmatmul.mubr.bf16.gmra.mxu0 %v1181
        %v1220 = vpop.f32.mrf.mxu0
        %v1221 = vadd.f32 0.0, %v1220
        %v1222 = vpop.f32.mrf.mxu0
        %v1223 = vpop.f32.mrf.mxu0
        %v1224 = vpop.f32.mrf.mxu0
        %1225 = vdwg.mxu0
        %1227 = vrot.lane.b32.xlu0 %v956, 120
        %v1228 = vpop.permute.xlu0 %1227
        %1229 = vrot.lane.b32.xlu0 %v958, 120
        %v1230 = vpop.permute.xlu0 %1229
        %v1232 = vsel %vm959, %v1228, 0
        %v1235 = vsel %vm959, %v1230, 0
        %1237 = vmatprep.subr.bf16.mxu0 0
        %1238 = vmatpush1.bf16.xpose.msra.mxu0 0
        %1239 = vmatprep.subr.bf16.mxu0 0
        %1240 = vmatpush1.bf16.xpose.msra.mxu0 0
        %1241 = vmatprep.subr.bf16.mxu0 0
        %1242 = vmatpush1.bf16.xpose.msra.mxu0 0
        %1243 = vmatprep.subr.bf16.mxu0 0
        %1244 = vmatpush1.bf16.xpose.msra.mxu0 0
        %1245 = vmatprep.subr.bf16.mxu0 0
        %1246 = vmatpush1.bf16.xpose.msra.mxu0 0
        %1247 = vmatprep.subr.bf16.mxu0 0
        %1248 = vmatpush1.bf16.xpose.msra.mxu0 0
        %1249 = vmatprep.subr.bf16.mxu0 0
        %1250 = vmatpush1.bf16.xpose.msra.mxu0 0
        %1251 = vmatprep.subr.bf16.mxu0 0
        %1252 = vmatpush1.bf16.xpose.msra.mxu0 %v1235
        %1253 = vmatprep.subr.bf16.mxu0 0
        %1254 = vmatpush2.bf16.xpose.msra.mxu0 0
        %1255 = vmatprep.subr.bf16.mxu0 0
        %1256 = vmatpush2.bf16.xpose.msra.mxu0 0
        %1257 = vmatprep.subr.bf16.mxu0 0
        %1258 = vmatpush2.bf16.xpose.msra.mxu0 0
        %1259 = vmatprep.subr.bf16.mxu0 0
        %1260 = vmatpush2.bf16.xpose.msra.mxu0 0
        %1261 = vmatprep.subr.bf16.mxu0 0
        %1262 = vmatpush2.bf16.xpose.msra.mxu0 0
        %1263 = vmatprep.subr.bf16.mxu0 0
        %1264 = vmatpush2.bf16.xpose.msra.mxu0 0
        %1265 = vmatprep.subr.bf16.mxu0 0
        %1266 = vmatpush2.bf16.xpose.msra.mxu0 0
        %1267 = vmatprep.subr.bf16.mxu0 0
        %1268 = vmatpush2.bf16.xpose.msra.mxu0 0
        %1269 = vmatprep.mubr.bf16.mxu0 0
        %1270 = vmatmul.mubr.bf16.gmra.mxu0 %v1232
        %v1271 = vpop.f32.mrf.mxu0
        %v1272 = vadd.f32 0.0, %v1271
        %v1273 = vpop.f32.mrf.mxu0
        %v1274 = vpop.f32.mrf.mxu0
        %v1275 = vpop.f32.mrf.mxu0
        %1276 = vdwg.mxu0
        %v1277 = vsel %vm959, %v1221, -inf
        %1278 = vmax.xlane.f32.xlu0 %v1277
        %v1279 = vpop.xlane.xlu0 %1278
        %v1280 = vsel %vm959, %v1272, -inf
        %1281 = vmax.xlane.f32.xlu0 %v1280
        %v1282 = vpop.xlane.xlu0 %1281
        %v1283 = vsub.f32 %v1221, %v1279
        %v1284 = vsub.f32 %v1272, %v1282
        %v1285 = vmul.f32 %v1283, 1.442695
        %v1286 = vpow.pop %v1285
        %v1287 = vmul.f32 %v1284, 1.442695
        %v1288 = vpow.pop %v1287
        %v1289 = vsel %vm959, %v1286, 0.0
        %1290 = vadd.xlane.f32.xlu0 %v1289
        %v1291 = vpop.xlane.xlu0 %1290
        %v1292 = vsel %vm959, %v1288, 0.0
        %1293 = vadd.xlane.f32.xlu0 %v1292
        %v1294 = vpop.xlane.xlu0 %1293
        %v1295 = vrcp.pop %v1291
        %v1296 = vmul.f32 %v1286, %v1295
        %v1297 = vrcp.pop %v1294
        %v1298 = vmul.f32 %v1288, %v1297
        %v1299 = vpack.c.bf16 %v1296, %v1296
        %v1300 = vpack.c.bf16 %v1298, %v1298
        %1301 = vrot.lane.b32.xlu0 %v957, 88
        %v1302 = vpop.permute.xlu0 %1301
        %v1304 = vsel %vm959, %v1299, 0
        %v1307 = vsel %vm1082, %v1302, 0
        %1309 = vmatprep.subr.bf16.mxu0 0
        %1310 = vmatpush1.bf16.msra.mxu0 0
        %1311 = vmatprep.subr.bf16.mxu0 0
        %1312 = vmatpush1.bf16.msra.mxu0 0
        %1313 = vmatprep.subr.bf16.mxu0 0
        %1314 = vmatpush1.bf16.msra.mxu0 0
        %1315 = vmatprep.subr.bf16.mxu0 0
        %1316 = vmatpush1.bf16.msra.mxu0 0
        %1317 = vmatprep.subr.bf16.mxu0 0
        %1318 = vmatpush1.bf16.msra.mxu0 0
        %1319 = vmatprep.subr.bf16.mxu0 0
        %1320 = vmatpush1.bf16.msra.mxu0 0
        %1321 = vmatprep.subr.bf16.mxu0 0
        %1322 = vmatpush1.bf16.msra.mxu0 0
        %1323 = vmatprep.subr.bf16.mxu0 0
        %1324 = vmatpush1.bf16.msra.mxu0 %v1307
        %1325 = vmatprep.subr.bf16.mxu0 0
        %1326 = vmatpush2.bf16.msra.mxu0 0
        %1327 = vmatprep.subr.bf16.mxu0 0
        %1328 = vmatpush2.bf16.msra.mxu0 0
        %1329 = vmatprep.subr.bf16.mxu0 0
        %1330 = vmatpush2.bf16.msra.mxu0 0
        %1331 = vmatprep.subr.bf16.mxu0 0
        %1332 = vmatpush2.bf16.msra.mxu0 0
        %1333 = vmatprep.subr.bf16.mxu0 0
        %1334 = vmatpush2.bf16.msra.mxu0 0
        %1335 = vmatprep.subr.bf16.mxu0 0
        %1336 = vmatpush2.bf16.msra.mxu0 0
        %1337 = vmatprep.subr.bf16.mxu0 0
        %1338 = vmatpush2.bf16.msra.mxu0 0
        %1339 = vmatprep.subr.bf16.mxu0 0
        %1340 = vmatpush2.bf16.msra.mxu0 0
        %1341 = vmatprep.mubr.bf16.mxu0 0
        %1342 = vmatmul.mubr.bf16.gmra.mxu0 %v1304
        %v1343 = vpop.f32.mrf.mxu0
        %v1344 = vadd.f32 0.0, %v1343
        %v1345 = vpop.f32.mrf.mxu0
        %v1346 = vpop.f32.mrf.mxu0
        %v1347 = vpop.f32.mrf.mxu0
        %1348 = vdwg.mxu0
        %1349 = vrot.lane.b32.xlu0 %v958, 88
        %v1350 = vpop.permute.xlu0 %1349
        %v1352 = vsel %vm959, %v1300, 0
        %v1355 = vsel %vm1082, %v1350, 0
        %1357 = vmatprep.subr.bf16.mxu0 0
        %1358 = vmatpush1.bf16.msra.mxu0 0
        %1359 = vmatprep.subr.bf16.mxu0 0
        %1360 = vmatpush1.bf16.msra.mxu0 0
        %1361 = vmatprep.subr.bf16.mxu0 0
        %1362 = vmatpush1.bf16.msra.mxu0 0
        %1363 = vmatprep.subr.bf16.mxu0 0
        %1364 = vmatpush1.bf16.msra.mxu0 0
        %1365 = vmatprep.subr.bf16.mxu0 0
        %1366 = vmatpush1.bf16.msra.mxu0 0
        %1367 = vmatprep.subr.bf16.mxu0 0
        %1368 = vmatpush1.bf16.msra.mxu0 0
        %1369 = vmatprep.subr.bf16.mxu0 0
        %1370 = vmatpush1.bf16.msra.mxu0 0
        %1371 = vmatprep.subr.bf16.mxu0 0
        %1372 = vmatpush1.bf16.msra.mxu0 %v1355
        %1373 = vmatprep.subr.bf16.mxu0 0
        %1374 = vmatpush2.bf16.msra.mxu0 0
        %1375 = vmatprep.subr.bf16.mxu0 0
        %1376 = vmatpush2.bf16.msra.mxu0 0
        %1377 = vmatprep.subr.bf16.mxu0 0
        %1378 = vmatpush2.bf16.msra.mxu0 0
        %1379 = vmatprep.subr.bf16.mxu0 0
        %1380 = vmatpush2.bf16.msra.mxu0 0
        %1381 = vmatprep.subr.bf16.mxu0 0
        %1382 = vmatpush2.bf16.msra.mxu0 0
        %1383 = vmatprep.subr.bf16.mxu0 0
        %1384 = vmatpush2.bf16.msra.mxu0 0
        %1385 = vmatprep.subr.bf16.mxu0 0
        %1386 = vmatpush2.bf16.msra.mxu0 0
        %1387 = vmatprep.subr.bf16.mxu0 0
        %1388 = vmatpush2.bf16.msra.mxu0 0
        %1389 = vmatprep.mubr.bf16.mxu0 0
        %1390 = vmatmul.mubr.bf16.gmra.mxu0 %v1352
        %v1391 = vpop.f32.mrf.mxu0
        %v1392 = vadd.f32 0.0, %v1391
        %v1393 = vpop.f32.mrf.mxu0
        %v1394 = vpop.f32.mrf.mxu0
        %v1395 = vpop.f32.mrf.mxu0
        %1396 = vdwg.mxu0
        %1397 = vrot.lane.b32.xlu0 %v955, 112
        %v1398 = vpop.permute.xlu0 %1397
        %1399 = vrot.lane.b32.xlu0 %v957, 112
        %v1400 = vpop.permute.xlu0 %1399
        %v1402 = vsel %vm959, %v1398, 0
        %v1405 = vsel %vm959, %v1400, 0
        %1407 = vmatprep.subr.bf16.mxu0 0
        %1408 = vmatpush1.bf16.xpose.msra.mxu0 0
        %1409 = vmatprep.subr.bf16.mxu0 0
        %1410 = vmatpush1.bf16.xpose.msra.mxu0 0
        %1411 = vmatprep.subr.bf16.mxu0 0
        %1412 = vmatpush1.bf16.xpose.msra.mxu0 0
        %1413 = vmatprep.subr.bf16.mxu0 0
        %1414 = vmatpush1.bf16.xpose.msra.mxu0 0
        %1415 = vmatprep.subr.bf16.mxu0 0
        %1416 = vmatpush1.bf16.xpose.msra.mxu0 0
        %1417 = vmatprep.subr.bf16.mxu0 0
        %1418 = vmatpush1.bf16.xpose.msra.mxu0 0
        %1419 = vmatprep.subr.bf16.mxu0 0
        %1420 = vmatpush1.bf16.xpose.msra.mxu0 0
        %1421 = vmatprep.subr.bf16.mxu0 0
        %1422 = vmatpush1.bf16.xpose.msra.mxu0 %v1405
        %1423 = vmatprep.subr.bf16.mxu0 0
        %1424 = vmatpush2.bf16.xpose.msra.mxu0 0
        %1425 = vmatprep.subr.bf16.mxu0 0
        %1426 = vmatpush2.bf16.xpose.msra.mxu0 0
        %1427 = vmatprep.subr.bf16.mxu0 0
        %1428 = vmatpush2.bf16.xpose.msra.mxu0 0
        %1429 = vmatprep.subr.bf16.mxu0 0
        %1430 = vmatpush2.bf16.xpose.msra.mxu0 0
        %1431 = vmatprep.subr.bf16.mxu0 0
        %1432 = vmatpush2.bf16.xpose.msra.mxu0 0
        %1433 = vmatprep.subr.bf16.mxu0 0
        %1434 = vmatpush2.bf16.xpose.msra.mxu0 0
        %1435 = vmatprep.subr.bf16.mxu0 0
        %1436 = vmatpush2.bf16.xpose.msra.mxu0 0
        %1437 = vmatprep.subr.bf16.mxu0 0
        %1438 = vmatpush2.bf16.xpose.msra.mxu0 0
        %1439 = vmatprep.mubr.bf16.mxu0 0
        %1440 = vmatmul.mubr.bf16.gmra.mxu0 %v1402
        %v1441 = vpop.f32.mrf.mxu0
        %v1442 = vadd.f32 0.0, %v1441
        %v1443 = vpop.f32.mrf.mxu0
        %v1444 = vpop.f32.mrf.mxu0
        %v1445 = vpop.f32.mrf.mxu0
        %1446 = vdwg.mxu0
        %1447 = vrot.lane.b32.xlu0 %v956, 112
        %v1448 = vpop.permute.xlu0 %1447
        %1449 = vrot.lane.b32.xlu0 %v958, 112
        %v1450 = vpop.permute.xlu0 %1449
        %v1452 = vsel %vm959, %v1448, 0
        %v1455 = vsel %vm959, %v1450, 0
        %1457 = vmatprep.subr.bf16.mxu0 0
        %1458 = vmatpush1.bf16.xpose.msra.mxu0 0
        %1459 = vmatprep.subr.bf16.mxu0 0
        %1460 = vmatpush1.bf16.xpose.msra.mxu0 0
        %1461 = vmatprep.subr.bf16.mxu0 0
        %1462 = vmatpush1.bf16.xpose.msra.mxu0 0
        %1463 = vmatprep.subr.bf16.mxu0 0
        %1464 = vmatpush1.bf16.xpose.msra.mxu0 0
        %1465 = vmatprep.subr.bf16.mxu0 0
        %1466 = vmatpush1.bf16.xpose.msra.mxu0 0
        %1467 = vmatprep.subr.bf16.mxu0 0
        %1468 = vmatpush1.bf16.xpose.msra.mxu0 0
        %1469 = vmatprep.subr.bf16.mxu0 0
        %1470 = vmatpush1.bf16.xpose.msra.mxu0 0
        %1471 = vmatprep.subr.bf16.mxu0 0
        %1472 = vmatpush1.bf16.xpose.msra.mxu0 %v1455
        %1473 = vmatprep.subr.bf16.mxu0 0
        %1474 = vmatpush2.bf16.xpose.msra.mxu0 0
        %1475 = vmatprep.subr.bf16.mxu0 0
        %1476 = vmatpush2.bf16.xpose.msra.mxu0 0
        %1477 = vmatprep.subr.bf16.mxu0 0
        %1478 = vmatpush2.bf16.xpose.msra.mxu0 0
        %1479 = vmatprep.subr.bf16.mxu0 0
        %1480 = vmatpush2.bf16.xpose.msra.mxu0 0
        %1481 = vmatprep.subr.bf16.mxu0 0
        %1482 = vmatpush2.bf16.xpose.msra.mxu0 0
        %1483 = vmatprep.subr.bf16.mxu0 0
        %1484 = vmatpush2.bf16.xpose.msra.mxu0 0
        %1485 = vmatprep.subr.bf16.mxu0 0
        %1486 = vmatpush2.bf16.xpose.msra.mxu0 0
        %1487 = vmatprep.subr.bf16.mxu0 0
        %1488 = vmatpush2.bf16.xpose.msra.mxu0 0
        %1489 = vmatprep.mubr.bf16.mxu0 0
        %1490 = vmatmul.mubr.bf16.gmra.mxu0 %v1452
        %v1491 = vpop.f32.mrf.mxu0
        %v1492 = vadd.f32 0.0, %v1491
        %v1493 = vpop.f32.mrf.mxu0
        %v1494 = vpop.f32.mrf.mxu0
        %v1495 = vpop.f32.mrf.mxu0
        %1496 = vdwg.mxu0
        %v1497 = vsel %vm959, %v1442, -inf
        %1498 = vmax.xlane.f32.xlu0 %v1497
        %v1499 = vpop.xlane.xlu0 %1498
        %v1500 = vsel %vm959, %v1492, -inf
        %1501 = vmax.xlane.f32.xlu0 %v1500
        %v1502 = vpop.xlane.xlu0 %1501
        %v1503 = vsub.f32 %v1442, %v1499
        %v1504 = vsub.f32 %v1492, %v1502
        %v1505 = vmul.f32 %v1503, 1.442695
        %v1506 = vpow.pop %v1505
        %v1507 = vmul.f32 %v1504, 1.442695
        %v1508 = vpow.pop %v1507
        %v1509 = vsel %vm959, %v1506, 0.0
        %1510 = vadd.xlane.f32.xlu0 %v1509
        %v1511 = vpop.xlane.xlu0 %1510
        %v1512 = vsel %vm959, %v1508, 0.0
        %1513 = vadd.xlane.f32.xlu0 %v1512
        %v1514 = vpop.xlane.xlu0 %1513
        %v1515 = vrcp.pop %v1511
        %v1516 = vmul.f32 %v1506, %v1515
        %v1517 = vrcp.pop %v1514
        %v1518 = vmul.f32 %v1508, %v1517
        %v1519 = vpack.c.bf16 %v1516, %v1516
        %v1520 = vpack.c.bf16 %v1518, %v1518
        %1521 = vrot.lane.b32.xlu0 %v957, 80
        %v1522 = vpop.permute.xlu0 %1521
        %v1524 = vsel %vm959, %v1519, 0
        %v1527 = vsel %vm1082, %v1522, 0
        %1529 = vmatprep.subr.bf16.mxu0 0
        %1530 = vmatpush1.bf16.msra.mxu0 0
        %1531 = vmatprep.subr.bf16.mxu0 0
        %1532 = vmatpush1.bf16.msra.mxu0 0
        %1533 = vmatprep.subr.bf16.mxu0 0
        %1534 = vmatpush1.bf16.msra.mxu0 0
        %1535 = vmatprep.subr.bf16.mxu0 0
        %1536 = vmatpush1.bf16.msra.mxu0 0
        %1537 = vmatprep.subr.bf16.mxu0 0
        %1538 = vmatpush1.bf16.msra.mxu0 0
        %1539 = vmatprep.subr.bf16.mxu0 0
        %1540 = vmatpush1.bf16.msra.mxu0 0
        %1541 = vmatprep.subr.bf16.mxu0 0
        %1542 = vmatpush1.bf16.msra.mxu0 0
        %1543 = vmatprep.subr.bf16.mxu0 0
        %1544 = vmatpush1.bf16.msra.mxu0 %v1527
        %1545 = vmatprep.subr.bf16.mxu0 0
        %1546 = vmatpush2.bf16.msra.mxu0 0
        %1547 = vmatprep.subr.bf16.mxu0 0
        %1548 = vmatpush2.bf16.msra.mxu0 0
        %1549 = vmatprep.subr.bf16.mxu0 0
        %1550 = vmatpush2.bf16.msra.mxu0 0
        %1551 = vmatprep.subr.bf16.mxu0 0
        %1552 = vmatpush2.bf16.msra.mxu0 0
        %1553 = vmatprep.subr.bf16.mxu0 0
        %1554 = vmatpush2.bf16.msra.mxu0 0
        %1555 = vmatprep.subr.bf16.mxu0 0
        %1556 = vmatpush2.bf16.msra.mxu0 0
        %1557 = vmatprep.subr.bf16.mxu0 0
        %1558 = vmatpush2.bf16.msra.mxu0 0
        %1559 = vmatprep.subr.bf16.mxu0 0
        %1560 = vmatpush2.bf16.msra.mxu0 0
        %1561 = vmatprep.mubr.bf16.mxu0 0
        %1562 = vmatmul.mubr.bf16.gmra.mxu0 %v1524
        %v1563 = vpop.f32.mrf.mxu0
        %v1564 = vadd.f32 0.0, %v1563
        %v1565 = vpop.f32.mrf.mxu0
        %v1566 = vpop.f32.mrf.mxu0
        %v1567 = vpop.f32.mrf.mxu0
        %1568 = vdwg.mxu0
        %1569 = vrot.lane.b32.xlu0 %v958, 80
        %v1570 = vpop.permute.xlu0 %1569
        %v1572 = vsel %vm959, %v1520, 0
        %v1575 = vsel %vm1082, %v1570, 0
        %1577 = vmatprep.subr.bf16.mxu0 0
        %1578 = vmatpush1.bf16.msra.mxu0 0
        %1579 = vmatprep.subr.bf16.mxu0 0
        %1580 = vmatpush1.bf16.msra.mxu0 0
        %1581 = vmatprep.subr.bf16.mxu0 0
        %1582 = vmatpush1.bf16.msra.mxu0 0
        %1583 = vmatprep.subr.bf16.mxu0 0
        %1584 = vmatpush1.bf16.msra.mxu0 0
        %1585 = vmatprep.subr.bf16.mxu0 0
        %1586 = vmatpush1.bf16.msra.mxu0 0
        %1587 = vmatprep.subr.bf16.mxu0 0
        %1588 = vmatpush1.bf16.msra.mxu0 0
        %1589 = vmatprep.subr.bf16.mxu0 0
        %1590 = vmatpush1.bf16.msra.mxu0 0
        %1591 = vmatprep.subr.bf16.mxu0 0
        %1592 = vmatpush1.bf16.msra.mxu0 %v1575
        %1593 = vmatprep.subr.bf16.mxu0 0
        %1594 = vmatpush2.bf16.msra.mxu0 0
        %1595 = vmatprep.subr.bf16.mxu0 0
        %1596 = vmatpush2.bf16.msra.mxu0 0
        %1597 = vmatprep.subr.bf16.mxu0 0
        %1598 = vmatpush2.bf16.msra.mxu0 0
        %1599 = vmatprep.subr.bf16.mxu0 0
        %1600 = vmatpush2.bf16.msra.mxu0 0
        %1601 = vmatprep.subr.bf16.mxu0 0
        %1602 = vmatpush2.bf16.msra.mxu0 0
        %1603 = vmatprep.subr.bf16.mxu0 0
        %1604 = vmatpush2.bf16.msra.mxu0 0
        %1605 = vmatprep.subr.bf16.mxu0 0
        %1606 = vmatpush2.bf16.msra.mxu0 0
        %1607 = vmatprep.subr.bf16.mxu0 0
        %1608 = vmatpush2.bf16.msra.mxu0 0
        %1609 = vmatprep.mubr.bf16.mxu0 0
        %1610 = vmatmul.mubr.bf16.gmra.mxu0 %v1572
        %v1611 = vpop.f32.mrf.mxu0
        %v1612 = vadd.f32 0.0, %v1611
        %v1613 = vpop.f32.mrf.mxu0
        %v1614 = vpop.f32.mrf.mxu0
        %v1615 = vpop.f32.mrf.mxu0
        %1616 = vdwg.mxu0
        %1617 = vrot.lane.b32.xlu0 %v955, 104
        %v1618 = vpop.permute.xlu0 %1617
        %1619 = vrot.lane.b32.xlu0 %v957, 104
        %v1620 = vpop.permute.xlu0 %1619
        %v1622 = vsel %vm959, %v1618, 0
        %v1625 = vsel %vm959, %v1620, 0
        %1627 = vmatprep.subr.bf16.mxu0 0
        %1628 = vmatpush1.bf16.xpose.msra.mxu0 0
        %1629 = vmatprep.subr.bf16.mxu0 0
        %1630 = vmatpush1.bf16.xpose.msra.mxu0 0
        %1631 = vmatprep.subr.bf16.mxu0 0
        %1632 = vmatpush1.bf16.xpose.msra.mxu0 0
        %1633 = vmatprep.subr.bf16.mxu0 0
        %1634 = vmatpush1.bf16.xpose.msra.mxu0 0
        %1635 = vmatprep.subr.bf16.mxu0 0
        %1636 = vmatpush1.bf16.xpose.msra.mxu0 0
        %1637 = vmatprep.subr.bf16.mxu0 0
        %1638 = vmatpush1.bf16.xpose.msra.mxu0 0
        %1639 = vmatprep.subr.bf16.mxu0 0
        %1640 = vmatpush1.bf16.xpose.msra.mxu0 0
        %1641 = vmatprep.subr.bf16.mxu0 0
        %1642 = vmatpush1.bf16.xpose.msra.mxu0 %v1625
        %1643 = vmatprep.subr.bf16.mxu0 0
        %1644 = vmatpush2.bf16.xpose.msra.mxu0 0
        %1645 = vmatprep.subr.bf16.mxu0 0
        %1646 = vmatpush2.bf16.xpose.msra.mxu0 0
        %1647 = vmatprep.subr.bf16.mxu0 0
        %1648 = vmatpush2.bf16.xpose.msra.mxu0 0
        %1649 = vmatprep.subr.bf16.mxu0 0
        %1650 = vmatpush2.bf16.xpose.msra.mxu0 0
        %1651 = vmatprep.subr.bf16.mxu0 0
        %1652 = vmatpush2.bf16.xpose.msra.mxu0 0
        %1653 = vmatprep.subr.bf16.mxu0 0
        %1654 = vmatpush2.bf16.xpose.msra.mxu0 0
        %1655 = vmatprep.subr.bf16.mxu0 0
        %1656 = vmatpush2.bf16.xpose.msra.mxu0 0
        %1657 = vmatprep.subr.bf16.mxu0 0
        %1658 = vmatpush2.bf16.xpose.msra.mxu0 0
        %1659 = vmatprep.mubr.bf16.mxu0 0
        %1660 = vmatmul.mubr.bf16.gmra.mxu0 %v1622
        %v1661 = vpop.f32.mrf.mxu0
        %v1662 = vadd.f32 0.0, %v1661
        %v1663 = vpop.f32.mrf.mxu0
        %v1664 = vpop.f32.mrf.mxu0
        %v1665 = vpop.f32.mrf.mxu0
        %1666 = vdwg.mxu0
        %1667 = vrot.lane.b32.xlu0 %v956, 104
        %v1668 = vpop.permute.xlu0 %1667
        %1669 = vrot.lane.b32.xlu0 %v958, 104
        %v1670 = vpop.permute.xlu0 %1669
        %v1672 = vsel %vm959, %v1668, 0
        %v1675 = vsel %vm959, %v1670, 0
        %1677 = vmatprep.subr.bf16.mxu0 0
        %1678 = vmatpush1.bf16.xpose.msra.mxu0 0
        %1679 = vmatprep.subr.bf16.mxu0 0
        %1680 = vmatpush1.bf16.xpose.msra.mxu0 0
        %1681 = vmatprep.subr.bf16.mxu0 0
        %1682 = vmatpush1.bf16.xpose.msra.mxu0 0
        %1683 = vmatprep.subr.bf16.mxu0 0
        %1684 = vmatpush1.bf16.xpose.msra.mxu0 0
        %1685 = vmatprep.subr.bf16.mxu0 0
        %1686 = vmatpush1.bf16.xpose.msra.mxu0 0
        %1687 = vmatprep.subr.bf16.mxu0 0
        %1688 = vmatpush1.bf16.xpose.msra.mxu0 0
        %1689 = vmatprep.subr.bf16.mxu0 0
        %1690 = vmatpush1.bf16.xpose.msra.mxu0 0
        %1691 = vmatprep.subr.bf16.mxu0 0
        %1692 = vmatpush1.bf16.xpose.msra.mxu0 %v1675
        %1693 = vmatprep.subr.bf16.mxu0 0
        %1694 = vmatpush2.bf16.xpose.msra.mxu0 0
        %1695 = vmatprep.subr.bf16.mxu0 0
        %1696 = vmatpush2.bf16.xpose.msra.mxu0 0
        %1697 = vmatprep.subr.bf16.mxu0 0
        %1698 = vmatpush2.bf16.xpose.msra.mxu0 0
        %1699 = vmatprep.subr.bf16.mxu0 0
        %1700 = vmatpush2.bf16.xpose.msra.mxu0 0
        %1701 = vmatprep.subr.bf16.mxu0 0
        %1702 = vmatpush2.bf16.xpose.msra.mxu0 0
        %1703 = vmatprep.subr.bf16.mxu0 0
        %1704 = vmatpush2.bf16.xpose.msra.mxu0 0
        %1705 = vmatprep.subr.bf16.mxu0 0
        %1706 = vmatpush2.bf16.xpose.msra.mxu0 0
        %1707 = vmatprep.subr.bf16.mxu0 0
        %1708 = vmatpush2.bf16.xpose.msra.mxu0 0
        %1709 = vmatprep.mubr.bf16.mxu0 0
        %1710 = vmatmul.mubr.bf16.gmra.mxu0 %v1672
        %v1711 = vpop.f32.mrf.mxu0
        %v1712 = vadd.f32 0.0, %v1711
        %v1713 = vpop.f32.mrf.mxu0
        %v1714 = vpop.f32.mrf.mxu0
        %v1715 = vpop.f32.mrf.mxu0
        %1716 = vdwg.mxu0
        %v1717 = vsel %vm959, %v1662, -inf
        %1718 = vmax.xlane.f32.xlu0 %v1717
        %v1719 = vpop.xlane.xlu0 %1718
        %v1720 = vsel %vm959, %v1712, -inf
        %1721 = vmax.xlane.f32.xlu0 %v1720
        %v1722 = vpop.xlane.xlu0 %1721
        %v1723 = vsub.f32 %v1662, %v1719
        %v1724 = vsub.f32 %v1712, %v1722
        %v1725 = vmul.f32 %v1723, 1.442695
        %v1726 = vpow.pop %v1725
        %v1727 = vmul.f32 %v1724, 1.442695
        %v1728 = vpow.pop %v1727
        %v1729 = vsel %vm959, %v1726, 0.0
        %1730 = vadd.xlane.f32.xlu0 %v1729
        %v1731 = vpop.xlane.xlu0 %1730
        %v1732 = vsel %vm959, %v1728, 0.0
        %1733 = vadd.xlane.f32.xlu0 %v1732
        %v1734 = vpop.xlane.xlu0 %1733
        %v1735 = vrcp.pop %v1731
        %v1736 = vmul.f32 %v1726, %v1735
        %v1737 = vrcp.pop %v1734
        %v1738 = vmul.f32 %v1728, %v1737
        %v1739 = vpack.c.bf16 %v1736, %v1736
        %v1740 = vpack.c.bf16 %v1738, %v1738
        %1741 = vrot.lane.b32.xlu0 %v957, 72
        %v1742 = vpop.permute.xlu0 %1741
        %v1744 = vsel %vm959, %v1739, 0
        %v1747 = vsel %vm1082, %v1742, 0
        %1749 = vmatprep.subr.bf16.mxu0 0
        %1750 = vmatpush1.bf16.msra.mxu0 0
        %1751 = vmatprep.subr.bf16.mxu0 0
        %1752 = vmatpush1.bf16.msra.mxu0 0
        %1753 = vmatprep.subr.bf16.mxu0 0
        %1754 = vmatpush1.bf16.msra.mxu0 0
        %1755 = vmatprep.subr.bf16.mxu0 0
        %1756 = vmatpush1.bf16.msra.mxu0 0
        %1757 = vmatprep.subr.bf16.mxu0 0
        %1758 = vmatpush1.bf16.msra.mxu0 0
        %1759 = vmatprep.subr.bf16.mxu0 0
        %1760 = vmatpush1.bf16.msra.mxu0 0
        %1761 = vmatprep.subr.bf16.mxu0 0
        %1762 = vmatpush1.bf16.msra.mxu0 0
        %1763 = vmatprep.subr.bf16.mxu0 0
        %1764 = vmatpush1.bf16.msra.mxu0 %v1747
        %1765 = vmatprep.subr.bf16.mxu0 0
        %1766 = vmatpush2.bf16.msra.mxu0 0
        %1767 = vmatprep.subr.bf16.mxu0 0
        %1768 = vmatpush2.bf16.msra.mxu0 0
        %1769 = vmatprep.subr.bf16.mxu0 0
        %1770 = vmatpush2.bf16.msra.mxu0 0
        %1771 = vmatprep.subr.bf16.mxu0 0
        %1772 = vmatpush2.bf16.msra.mxu0 0
        %1773 = vmatprep.subr.bf16.mxu0 0
        %1774 = vmatpush2.bf16.msra.mxu0 0
        %1775 = vmatprep.subr.bf16.mxu0 0
        %1776 = vmatpush2.bf16.msra.mxu0 0
        %1777 = vmatprep.subr.bf16.mxu0 0
        %1778 = vmatpush2.bf16.msra.mxu0 0
        %1779 = vmatprep.subr.bf16.mxu0 0
        %1780 = vmatpush2.bf16.msra.mxu0 0
        %1781 = vmatprep.mubr.bf16.mxu0 0
        %1782 = vmatmul.mubr.bf16.gmra.mxu0 %v1744
        %v1783 = vpop.f32.mrf.mxu0
        %v1784 = vadd.f32 0.0, %v1783
        %v1785 = vpop.f32.mrf.mxu0
        %v1786 = vpop.f32.mrf.mxu0
        %v1787 = vpop.f32.mrf.mxu0
        %1788 = vdwg.mxu0
        %1789 = vrot.lane.b32.xlu0 %v958, 72
        %v1790 = vpop.permute.xlu0 %1789
        %v1792 = vsel %vm959, %v1740, 0
        %v1795 = vsel %vm1082, %v1790, 0
        %1797 = vmatprep.subr.bf16.mxu0 0
        %1798 = vmatpush1.bf16.msra.mxu0 0
        %1799 = vmatprep.subr.bf16.mxu0 0
        %1800 = vmatpush1.bf16.msra.mxu0 0
        %1801 = vmatprep.subr.bf16.mxu0 0
        %1802 = vmatpush1.bf16.msra.mxu0 0
        %1803 = vmatprep.subr.bf16.mxu0 0
        %1804 = vmatpush1.bf16.msra.mxu0 0
        %1805 = vmatprep.subr.bf16.mxu0 0
        %1806 = vmatpush1.bf16.msra.mxu0 0
        %1807 = vmatprep.subr.bf16.mxu0 0
        %1808 = vmatpush1.bf16.msra.mxu0 0
        %1809 = vmatprep.subr.bf16.mxu0 0
        %1810 = vmatpush1.bf16.msra.mxu0 0
        %1811 = vmatprep.subr.bf16.mxu0 0
        %1812 = vmatpush1.bf16.msra.mxu0 %v1795
        %1813 = vmatprep.subr.bf16.mxu0 0
        %1814 = vmatpush2.bf16.msra.mxu0 0
        %1815 = vmatprep.subr.bf16.mxu0 0
        %1816 = vmatpush2.bf16.msra.mxu0 0
        %1817 = vmatprep.subr.bf16.mxu0 0
        %1818 = vmatpush2.bf16.msra.mxu0 0
        %1819 = vmatprep.subr.bf16.mxu0 0
        %1820 = vmatpush2.bf16.msra.mxu0 0
        %1821 = vmatprep.subr.bf16.mxu0 0
        %1822 = vmatpush2.bf16.msra.mxu0 0
        %1823 = vmatprep.subr.bf16.mxu0 0
        %1824 = vmatpush2.bf16.msra.mxu0 0
        %1825 = vmatprep.subr.bf16.mxu0 0
        %1826 = vmatpush2.bf16.msra.mxu0 0
        %1827 = vmatprep.subr.bf16.mxu0 0
        %1828 = vmatpush2.bf16.msra.mxu0 0
        %1829 = vmatprep.mubr.bf16.mxu0 0
        %1830 = vmatmul.mubr.bf16.gmra.mxu0 %v1792
        %v1831 = vpop.f32.mrf.mxu0
        %v1832 = vadd.f32 0.0, %v1831
        %v1833 = vpop.f32.mrf.mxu0
        %v1834 = vpop.f32.mrf.mxu0
        %v1835 = vpop.f32.mrf.mxu0
        %1836 = vdwg.mxu0
        %1839 = vrot.lane.b32.xlu0 %v1344, 8
        %v1840 = vpop.permute.xlu0 %1839
        %1841 = vrot.lane.b32.xlu0 %v1392, 8
        %v1842 = vpop.permute.xlu0 %1841
        %1847 = vrot.lane.b32.xlu0 %v1564, 16
        %v1848 = vpop.permute.xlu0 %1847
        %1849 = vrot.lane.b32.xlu0 %v1612, 16
        %v1850 = vpop.permute.xlu0 %1849
        %1855 = vrot.lane.b32.xlu0 %v1784, 24
        %v1856 = vpop.permute.xlu0 %1855
        %1857 = vrot.lane.b32.xlu0 %v1832, 24
        %v1858 = vpop.permute.xlu0 %1857
        %v1861 = vsel %vm959, %v1121, %v1840
        %v1862 = vsel %vm959, %v1170, %v1842
        %vm1863 = vcmask 130048
        %v1864 = vsel %vm1863, %v1861, %v1848
        %v1865 = vsel %vm1863, %v1862, %v1850
        %vm1866 = vcmask 195584
        %v1867 = vsel %vm1866, %v1864, %v1856
        %v1868 = vsel %vm1866, %v1865, %v1858
        %v1869 = vpack.c.bf16 %v1868, %v1867
        %v1870 = vld [vmem:[%s667] sm:$0xf]
        %v1871 = vld [vmem:[%s667 + $0x4] sm:$0xf]
        %v1872 = vld [vmem:[%s667 + $0x8] sm:$0xf]
        %v1873 = vld [vmem:[%s667 + $0xc] sm:$0xf]
        %v1874 = vld [vmem:[%s676] sm:$0x1]
        %v1876 = vlaneseq
        %v1877 = vshrl.u32 %v1876, 7
        %v1878 = vsub.s32 0, %v1877
        %v1879 = vrot.slane %v1874, %v1878
        %v1885 = vunpack.c.l.b16 %v1870
        %v1886 = vunpack.c.l.b16 %v1871
        %v1887 = vunpack.c.l.b16 %v1872
        %v1888 = vunpack.c.l.b16 %v1873
        %v1889 = vpack.c.b16 %v1886, %v1885
        %v1890 = vpack.c.b16 %v1888, %v1887
        %v1894 = vsel %vm846, %v1869, 0
        %1896 = vmatprep.subr.bf16.mxu0 0
        %1897 = vmatpush1.bf16.msra.mxu0 0
        %1898 = vmatprep.subr.bf16.mxu0 0
        %1899 = vmatpush1.bf16.msra.mxu0 0
        %1900 = vmatprep.subr.bf16.mxu0 0
        %1901 = vmatpush1.bf16.msra.mxu0 0
        %1902 = vmatprep.subr.bf16.mxu0 0
        %1903 = vmatpush1.bf16.msra.mxu0 0
        %1904 = vmatprep.subr.bf16.mxu0 0
        %1905 = vmatpush1.bf16.msra.mxu0 0
        %1906 = vmatprep.subr.bf16.mxu0 0
        %1907 = vmatpush1.bf16.msra.mxu0 0
        %1908 = vmatprep.subr.bf16.mxu0 0
        %1909 = vmatpush1.bf16.msra.mxu0 %v1890
        %1910 = vmatprep.subr.bf16.mxu0 0
        %1911 = vmatpush1.bf16.msra.mxu0 %v1889
        %1912 = vmatprep.subr.bf16.mxu0 0
        %1913 = vmatpush2.bf16.msra.mxu0 0
        %1914 = vmatprep.subr.bf16.mxu0 0
        %1915 = vmatpush2.bf16.msra.mxu0 0
        %1916 = vmatprep.subr.bf16.mxu0 0
        %1917 = vmatpush2.bf16.msra.mxu0 0
        %1918 = vmatprep.subr.bf16.mxu0 0
        %1919 = vmatpush2.bf16.msra.mxu0 0
        %1920 = vmatprep.subr.bf16.mxu0 0
        %1921 = vmatpush2.bf16.msra.mxu0 0
        %1922 = vmatprep.subr.bf16.mxu0 0
        %1923 = vmatpush2.bf16.msra.mxu0 0
        %1924 = vmatprep.subr.bf16.mxu0 0
        %1925 = vmatpush2.bf16.msra.mxu0 0
        %1926 = vmatprep.subr.bf16.mxu0 0
        %1927 = vmatpush2.bf16.msra.mxu0 0
        %1928 = vmatprep.mubr.bf16.mxu0 0
        %1929 = vmatmul.mubr.bf16.gmra.mxu0 %v1894
        %v1930 = vpop.f32.mrf.mxu0
        %v1931 = vadd.f32 %v1879, %v1930
        %v1932 = vpop.f32.mrf.mxu0
        %v1933 = vpop.f32.mrf.mxu0
        %v1934 = vadd.f32 %v1879, %v1933
        %v1935 = vpop.f32.mrf.mxu0
        %1936 = vdwg.mxu0
        %v1937 = vadd.f32 %v820, %v1931
        %v1938 = vadd.f32 %v821, %v1934
        %v1939 = vld [vmem:[%s790] sm:$0x1]
        %v1940 = vld [vmem:[%s794] sm:$0x1]
        %v1941 = vsel %vm846, %v1937, 0.0
        %1942 = vadd.xlane.f32.xlu0 %v1941
        %v1943 = vpop.xlane.xlu0 %1942
        %v1944 = vsel %vm846, %v1938, 0.0
        %1945 = vadd.xlane.f32.xlu0 %v1944
        %v1946 = vpop.xlane.xlu0 %1945
        %v1947 = vrcp.pop 32.0
        %v1948 = vmul.f32 %v1943, %v1947
        %v1949 = vmul.f32 %v1946, %v1947
        %v1950 = vsub.f32 %v1937, %v1948
        %v1951 = vsub.f32 %v1938, %v1949
        %v1952 = vmul.f32 %v1950, %v1950
        %v1953 = vmul.f32 %v1951, %v1951
        %v1954 = vsel %vm846, %v1952, 0.0
        %1955 = vadd.xlane.f32.xlu0 %v1954
        %v1956 = vpop.xlane.xlu0 %1955
        %v1957 = vsel %vm846, %v1953, 0.0
        %1958 = vadd.xlane.f32.xlu0 %v1957
        %v1959 = vpop.xlane.xlu0 %1958
        %v1960 = vmul.f32 %v1956, %v1947
        %v1961 = vmul.f32 %v1959, %v1947
        %v1962 = vadd.f32 %v1960, 1e-05
        %v1963 = vadd.f32 %v1961, 1e-05
        %v1964 = vrsqrt.pop %v1962
        %v1965 = vrsqrt.pop %v1963
        %v1966 = vmul.f32 %v1950, %v1964
        %v1967 = vmul.f32 %v1951, %v1965
        %v1969 = vlaneseq
        %v1970 = vshrl.u32 %v1969, 7
        %v1971 = vsub.s32 0, %v1970
        %v1972 = vrot.slane %v1939, %v1971
        %v1974 = vmul.f32 %v1966, %v1972
        %v1975 = vmul.f32 %v1967, %v1972
        %v1977 = vlaneseq
        %v1978 = vshrl.u32 %v1977, 7
        %v1979 = vsub.s32 0, %v1978
        %v1980 = vrot.slane %v1940, %v1979
        %v1982 = vadd.f32 %v1974, %v1980
        %v1983 = vadd.f32 %v1975, %v1980
        %v1984 = vpack.c.bf16 %v1983, %v1982
        %v1985 = vld [vmem:[#allocation3] sm:$0xf]
        %v1986 = vld [vmem:[#allocation3 + $0x4] sm:$0xf]
        %s1987 = scalar_lea.vmem %s770, 16
        %v1988 = vld [vmem:[%s1987] sm:$0xf]
        %v1989 = vld [vmem:[%s1987 + $0x4] sm:$0xf]
        %v1990 = vld [vmem:[%s1987 + $0x8] sm:$0xf]
        %v1991 = vld [vmem:[%s1987 + $0xc] sm:$0xf]
        %s1992 = scalar_lea.vmem %s640, 1 [#allocation9]
        %v1993 = vld [vmem:[%s1992] sm:$0x1]
        %v1995 = vlaneseq
        %v1996 = vshrl.u32 %v1995, 7
        %v1997 = vsub.s32 0, %v1996
        %v1998 = vrot.slane %v1993, %v1997
        %v2004 = vunpack.c.l.b16 %v1988
        %v2005 = vunpack.c.l.b16 %v1989
        %v2006 = vunpack.c.l.b16 %v1990
        %v2007 = vunpack.c.l.b16 %v1991
        %v2008 = vpack.c.b16 %v2005, %v2004
        %v2009 = vpack.c.b16 %v2007, %v2006
        %v2013 = vsel %vm846, %v1984, 0
        %2015 = vmatprep.subr.bf16.mxu0 0
        %2016 = vmatpush1.bf16.msra.mxu0 0
        %2017 = vmatprep.subr.bf16.mxu0 0
        %2018 = vmatpush1.bf16.msra.mxu0 0
        %2019 = vmatprep.subr.bf16.mxu0 0
        %2020 = vmatpush1.bf16.msra.mxu0 0
        %2021 = vmatprep.subr.bf16.mxu0 0
        %2022 = vmatpush1.bf16.msra.mxu0 0
        %2023 = vmatprep.subr.bf16.mxu0 0
        %2024 = vmatpush1.bf16.msra.mxu0 0
        %2025 = vmatprep.subr.bf16.mxu0 0
        %2026 = vmatpush1.bf16.msra.mxu0 0
        %2027 = vmatprep.subr.bf16.mxu0 0
        %2028 = vmatpush1.bf16.msra.mxu0 %v2009
        %2029 = vmatprep.subr.bf16.mxu0 0
        %2030 = vmatpush1.bf16.msra.mxu0 %v2008
        %2031 = vmatprep.subr.bf16.mxu0 0
        %2032 = vmatpush2.bf16.msra.mxu0 0
        %2033 = vmatprep.subr.bf16.mxu0 0
        %2034 = vmatpush2.bf16.msra.mxu0 0
        %2035 = vmatprep.subr.bf16.mxu0 0
        %2036 = vmatpush2.bf16.msra.mxu0 0
        %2037 = vmatprep.subr.bf16.mxu0 0
        %2038 = vmatpush2.bf16.msra.mxu0 0
        %2039 = vmatprep.subr.bf16.mxu0 0
        %2040 = vmatpush2.bf16.msra.mxu0 0
        %2041 = vmatprep.subr.bf16.mxu0 0
        %2042 = vmatpush2.bf16.msra.mxu0 0
        %2043 = vmatprep.subr.bf16.mxu0 0
        %2044 = vmatpush2.bf16.msra.mxu0 0
        %2045 = vmatprep.subr.bf16.mxu0 0
        %2046 = vmatpush2.bf16.msra.mxu0 0
        %2047 = vmatprep.mubr.bf16.mxu0 0
        %2048 = vmatmul.mubr.bf16.gmra.mxu0 %v2013
        %v2049 = vpop.f32.mrf.mxu0
        %v2050 = vadd.f32 %v1998, %v2049
        %v2051 = vpop.f32.mrf.mxu0
        %v2052 = vpop.f32.mrf.mxu0
        %v2053 = vadd.f32 %v1998, %v2052
        %v2054 = vpop.f32.mrf.mxu0
        %2055 = vdwg.mxu0
        %s2056 = scalar_lea.vmem %s649, 16 [#allocation10]
        %v2057 = vld [vmem:[%s2056] sm:$0xf]
        %v2058 = vld [vmem:[%s2056 + $0x4] sm:$0xf]
        %v2059 = vld [vmem:[%s2056 + $0x8] sm:$0xf]
        %v2060 = vld [vmem:[%s2056 + $0xc] sm:$0xf]
        %s2061 = scalar_lea.vmem %s658, 1 [#allocation11]
        %v2062 = vld [vmem:[%s2061] sm:$0x1]
        %v2064 = vlaneseq
        %v2065 = vshrl.u32 %v2064, 7
        %v2066 = vsub.s32 0, %v2065
        %v2067 = vrot.slane %v2062, %v2066
        %v2071 = vunpack.c.l.b16 %v1985
        %v2072 = vunpack.c.l.b16 %v1986
        %v2073 = vpack.c.b16 %v2072, %v2071
        %v2078 = vunpack.c.l.b16 %v2057
        %v2079 = vunpack.c.l.b16 %v2058
        %v2080 = vunpack.c.l.b16 %v2059
        %v2081 = vunpack.c.l.b16 %v2060
        %v2082 = vpack.c.b16 %v2079, %v2078
        %v2083 = vpack.c.b16 %v2081, %v2080
        %v2087 = vsel %vm846, %v2073, 0
        %2089 = vmatprep.subr.bf16.mxu0 0
        %2090 = vmatpush1.bf16.msra.mxu0 0
        %2091 = vmatprep.subr.bf16.mxu0 0
        %2092 = vmatpush1.bf16.msra.mxu0 0
        %2093 = vmatprep.subr.bf16.mxu0 0
        %2094 = vmatpush1.bf16.msra.mxu0 0
        %2095 = vmatprep.subr.bf16.mxu0 0
        %2096 = vmatpush1.bf16.msra.mxu0 0
        %2097 = vmatprep.subr.bf16.mxu0 0
        %2098 = vmatpush1.bf16.msra.mxu0 0
        %2099 = vmatprep.subr.bf16.mxu0 0
        %2100 = vmatpush1.bf16.msra.mxu0 0
        %2101 = vmatprep.subr.bf16.mxu0 0
        %2102 = vmatpush1.bf16.msra.mxu0 %v2083
        %2103 = vmatprep.subr.bf16.mxu0 0
        %2104 = vmatpush1.bf16.msra.mxu0 %v2082
        %2105 = vmatprep.subr.bf16.mxu0 0
        %2106 = vmatpush2.bf16.msra.mxu0 0
        %2107 = vmatprep.subr.bf16.mxu0 0
        %2108 = vmatpush2.bf16.msra.mxu0 0
        %2109 = vmatprep.subr.bf16.mxu0 0
        %2110 = vmatpush2.bf16.msra.mxu0 0
        %2111 = vmatprep.subr.bf16.mxu0 0
        %2112 = vmatpush2.bf16.msra.mxu0 0
        %2113 = vmatprep.subr.bf16.mxu0 0
        %2114 = vmatpush2.bf16.msra.mxu0 0
        %2115 = vmatprep.subr.bf16.mxu0 0
        %2116 = vmatpush2.bf16.msra.mxu0 0
        %2117 = vmatprep.subr.bf16.mxu0 0
        %2118 = vmatpush2.bf16.msra.mxu0 0
        %2119 = vmatprep.subr.bf16.mxu0 0
        %2120 = vmatpush2.bf16.msra.mxu0 0
        %2121 = vmatprep.mubr.bf16.mxu0 0
        %2122 = vmatmul.mubr.bf16.gmra.mxu0 %v2087
        %v2123 = vpop.f32.mrf.mxu0
        %v2124 = vadd.f32 %v2067, %v2123
        %v2125 = vpop.f32.mrf.mxu0
        %v2126 = vpop.f32.mrf.mxu0
        %v2127 = vadd.f32 %v2067, %v2126
        %v2128 = vpop.f32.mrf.mxu0
        %2129 = vdwg.mxu0
        %v2130 = vpack.c.bf16 %v2050, %v2050
        %v2131 = vpack.c.bf16 %v2053, %v2053
        %v2132 = vpack.c.bf16 %v2124, %v2124
        %v2133 = vpack.c.bf16 %v2127, %v2127
        %v2135 = vsel %vm959, %v2130, 0
        %v2138 = vsel %vm959, %v2132, 0
        %2140 = vmatprep.subr.bf16.mxu0 0
        %2141 = vmatpush1.bf16.xpose.msra.mxu0 0
        %2142 = vmatprep.subr.bf16.mxu0 0
        %2143 = vmatpush1.bf16.xpose.msra.mxu0 0
        %2144 = vmatprep.subr.bf16.mxu0 0
        %2145 = vmatpush1.bf16.xpose.msra.mxu0 0
        %2146 = vmatprep.subr.bf16.mxu0 0
        %2147 = vmatpush1.bf16.xpose.msra.mxu0 0
        %2148 = vmatprep.subr.bf16.mxu0 0
        %2149 = vmatpush1.bf16.xpose.msra.mxu0 0
        %2150 = vmatprep.subr.bf16.mxu0 0
        %2151 = vmatpush1.bf16.xpose.msra.mxu0 0
        %2152 = vmatprep.subr.bf16.mxu0 0
        %2153 = vmatpush1.bf16.xpose.msra.mxu0 0
        %2154 = vmatprep.subr.bf16.mxu0 0
        %2155 = vmatpush1.bf16.xpose.msra.mxu0 %v2138
        %2156 = vmatprep.subr.bf16.mxu0 0
        %2157 = vmatpush2.bf16.xpose.msra.mxu0 0
        %2158 = vmatprep.subr.bf16.mxu0 0
        %2159 = vmatpush2.bf16.xpose.msra.mxu0 0
        %2160 = vmatprep.subr.bf16.mxu0 0
        %2161 = vmatpush2.bf16.xpose.msra.mxu0 0
        %2162 = vmatprep.subr.bf16.mxu0 0
        %2163 = vmatpush2.bf16.xpose.msra.mxu0 0
        %2164 = vmatprep.subr.bf16.mxu0 0
        %2165 = vmatpush2.bf16.xpose.msra.mxu0 0
        %2166 = vmatprep.subr.bf16.mxu0 0
        %2167 = vmatpush2.bf16.xpose.msra.mxu0 0
        %2168 = vmatprep.subr.bf16.mxu0 0
        %2169 = vmatpush2.bf16.xpose.msra.mxu0 0
        %2170 = vmatprep.subr.bf16.mxu0 0
        %2171 = vmatpush2.bf16.xpose.msra.mxu0 0
        %2172 = vmatprep.mubr.bf16.mxu0 0
        %2173 = vmatmul.mubr.bf16.gmra.mxu0 %v2135
        %v2174 = vpop.f32.mrf.mxu0
        %v2175 = vadd.f32 0.0, %v2174
        %v2176 = vpop.f32.mrf.mxu0
        %v2177 = vpop.f32.mrf.mxu0
        %v2178 = vpop.f32.mrf.mxu0
        %2179 = vdwg.mxu0
        %v2181 = vsel %vm959, %v2131, 0
        %v2184 = vsel %vm959, %v2133, 0
        %2186 = vmatprep.subr.bf16.mxu0 0
        %2187 = vmatpush1.bf16.xpose.msra.mxu0 0
        %2188 = vmatprep.subr.bf16.mxu0 0
        %2189 = vmatpush1.bf16.xpose.msra.mxu0 0
        %2190 = vmatprep.subr.bf16.mxu0 0
        %2191 = vmatpush1.bf16.xpose.msra.mxu0 0
        %2192 = vmatprep.subr.bf16.mxu0 0
        %2193 = vmatpush1.bf16.xpose.msra.mxu0 0
        %2194 = vmatprep.subr.bf16.mxu0 0
        %2195 = vmatpush1.bf16.xpose.msra.mxu0 0
        %2196 = vmatprep.subr.bf16.mxu0 0
        %2197 = vmatpush1.bf16.xpose.msra.mxu0 0
        %2198 = vmatprep.subr.bf16.mxu0 0
        %2199 = vmatpush1.bf16.xpose.msra.mxu0 0
        %2200 = vmatprep.subr.bf16.mxu0 0
        %2201 = vmatpush1.bf16.xpose.msra.mxu0 %v2184
        %2202 = vmatprep.subr.bf16.mxu0 0
        %2203 = vmatpush2.bf16.xpose.msra.mxu0 0
        %2204 = vmatprep.subr.bf16.mxu0 0
        %2205 = vmatpush2.bf16.xpose.msra.mxu0 0
        %2206 = vmatprep.subr.bf16.mxu0 0
        %2207 = vmatpush2.bf16.xpose.msra.mxu0 0
        %2208 = vmatprep.subr.bf16.mxu0 0
        %2209 = vmatpush2.bf16.xpose.msra.mxu0 0
        %2210 = vmatprep.subr.bf16.mxu0 0
        %2211 = vmatpush2.bf16.xpose.msra.mxu0 0
        %2212 = vmatprep.subr.bf16.mxu0 0
        %2213 = vmatpush2.bf16.xpose.msra.mxu0 0
        %2214 = vmatprep.subr.bf16.mxu0 0
        %2215 = vmatpush2.bf16.xpose.msra.mxu0 0
        %2216 = vmatprep.subr.bf16.mxu0 0
        %2217 = vmatpush2.bf16.xpose.msra.mxu0 0
        %2218 = vmatprep.mubr.bf16.mxu0 0
        %2219 = vmatmul.mubr.bf16.gmra.mxu0 %v2181
        %v2220 = vpop.f32.mrf.mxu0
        %v2221 = vadd.f32 0.0, %v2220
        %v2222 = vpop.f32.mrf.mxu0
        %v2223 = vpop.f32.mrf.mxu0
        %v2224 = vpop.f32.mrf.mxu0
        %2225 = vdwg.mxu0
        %v2226 = vsel %vm959, %v2175, -inf
        %2227 = vmax.xlane.f32.xlu0 %v2226
        %v2228 = vpop.xlane.xlu0 %2227
        %v2229 = vsel %vm959, %v2221, -inf
        %2230 = vmax.xlane.f32.xlu0 %v2229
        %v2231 = vpop.xlane.xlu0 %2230
        %v2232 = vsub.f32 %v2175, %v2228
        %v2233 = vsub.f32 %v2221, %v2231
        %v2234 = vmul.f32 %v2232, 1.442695
        %v2235 = vpow.pop %v2234
        %v2236 = vmul.f32 %v2233, 1.442695
        %v2237 = vpow.pop %v2236
        %v2238 = vsel %vm959, %v2235, 0.0
        %2239 = vadd.xlane.f32.xlu0 %v2238
        %v2240 = vpop.xlane.xlu0 %2239
        %v2241 = vsel %vm959, %v2237, 0.0
        %2242 = vadd.xlane.f32.xlu0 %v2241
        %v2243 = vpop.xlane.xlu0 %2242
        %v2244 = vrcp.pop %v2240
        %v2245 = vmul.f32 %v2235, %v2244
        %v2246 = vrcp.pop %v2243
        %v2247 = vmul.f32 %v2237, %v2246
        %v2248 = vpack.c.bf16 %v2245, %v2245
        %v2249 = vpack.c.bf16 %v2247, %v2247
        %2251 = vrot.lane.b32.xlu0 %v2132, 96
        %v2252 = vpop.permute.xlu0 %2251
        %v2254 = vsel %vm959, %v2248, 0
        %v2257 = vsel %vm1082, %v2252, 0
        %2259 = vmatprep.subr.bf16.mxu0 0
        %2260 = vmatpush1.bf16.msra.mxu0 0
        %2261 = vmatprep.subr.bf16.mxu0 0
        %2262 = vmatpush1.bf16.msra.mxu0 0
        %2263 = vmatprep.subr.bf16.mxu0 0
        %2264 = vmatpush1.bf16.msra.mxu0 0
        %2265 = vmatprep.subr.bf16.mxu0 0
        %2266 = vmatpush1.bf16.msra.mxu0 0
        %2267 = vmatprep.subr.bf16.mxu0 0
        %2268 = vmatpush1.bf16.msra.mxu0 0
        %2269 = vmatprep.subr.bf16.mxu0 0
        %2270 = vmatpush1.bf16.msra.mxu0 0
        %2271 = vmatprep.subr.bf16.mxu0 0
        %2272 = vmatpush1.bf16.msra.mxu0 0
        %2273 = vmatprep.subr.bf16.mxu0 0
        %2274 = vmatpush1.bf16.msra.mxu0 %v2257
        %2275 = vmatprep.subr.bf16.mxu0 0
        %2276 = vmatpush2.bf16.msra.mxu0 0
        %2277 = vmatprep.subr.bf16.mxu0 0
        %2278 = vmatpush2.bf16.msra.mxu0 0
        %2279 = vmatprep.subr.bf16.mxu0 0
        %2280 = vmatpush2.bf16.msra.mxu0 0
        %2281 = vmatprep.subr.bf16.mxu0 0
        %2282 = vmatpush2.bf16.msra.mxu0 0
        %2283 = vmatprep.subr.bf16.mxu0 0
        %2284 = vmatpush2.bf16.msra.mxu0 0
        %2285 = vmatprep.subr.bf16.mxu0 0
        %2286 = vmatpush2.bf16.msra.mxu0 0
        %2287 = vmatprep.subr.bf16.mxu0 0
        %2288 = vmatpush2.bf16.msra.mxu0 0
        %2289 = vmatprep.subr.bf16.mxu0 0
        %2290 = vmatpush2.bf16.msra.mxu0 0
        %2291 = vmatprep.mubr.bf16.mxu0 0
        %2292 = vmatmul.mubr.bf16.gmra.mxu0 %v2254
        %v2293 = vpop.f32.mrf.mxu0
        %v2294 = vadd.f32 0.0, %v2293
        %v2295 = vpop.f32.mrf.mxu0
        %v2296 = vpop.f32.mrf.mxu0
        %v2297 = vpop.f32.mrf.mxu0
        %2298 = vdwg.mxu0
        %2300 = vrot.lane.b32.xlu0 %v2133, 96
        %v2301 = vpop.permute.xlu0 %2300
        %v2303 = vsel %vm959, %v2249, 0
        %v2306 = vsel %vm1082, %v2301, 0
        %2308 = vmatprep.subr.bf16.mxu0 0
        %2309 = vmatpush1.bf16.msra.mxu0 0
        %2310 = vmatprep.subr.bf16.mxu0 0
        %2311 = vmatpush1.bf16.msra.mxu0 0
        %2312 = vmatprep.subr.bf16.mxu0 0
        %2313 = vmatpush1.bf16.msra.mxu0 0
        %2314 = vmatprep.subr.bf16.mxu0 0
        %2315 = vmatpush1.bf16.msra.mxu0 0
        %2316 = vmatprep.subr.bf16.mxu0 0
        %2317 = vmatpush1.bf16.msra.mxu0 0
        %2318 = vmatprep.subr.bf16.mxu0 0
        %2319 = vmatpush1.bf16.msra.mxu0 0
        %2320 = vmatprep.subr.bf16.mxu0 0
        %2321 = vmatpush1.bf16.msra.mxu0 0
        %2322 = vmatprep.subr.bf16.mxu0 0
        %2323 = vmatpush1.bf16.msra.mxu0 %v2306
        %2324 = vmatprep.subr.bf16.mxu0 0
        %2325 = vmatpush2.bf16.msra.mxu0 0
        %2326 = vmatprep.subr.bf16.mxu0 0
        %2327 = vmatpush2.bf16.msra.mxu0 0
        %2328 = vmatprep.subr.bf16.mxu0 0
        %2329 = vmatpush2.bf16.msra.mxu0 0
        %2330 = vmatprep.subr.bf16.mxu0 0
        %2331 = vmatpush2.bf16.msra.mxu0 0
        %2332 = vmatprep.subr.bf16.mxu0 0
        %2333 = vmatpush2.bf16.msra.mxu0 0
        %2334 = vmatprep.subr.bf16.mxu0 0
        %2335 = vmatpush2.bf16.msra.mxu0 0
        %2336 = vmatprep.subr.bf16.mxu0 0
        %2337 = vmatpush2.bf16.msra.mxu0 0
        %2338 = vmatprep.subr.bf16.mxu0 0
        %2339 = vmatpush2.bf16.msra.mxu0 0
        %2340 = vmatprep.mubr.bf16.mxu0 0
        %2341 = vmatmul.mubr.bf16.gmra.mxu0 %v2303
        %v2342 = vpop.f32.mrf.mxu0
        %v2343 = vadd.f32 0.0, %v2342
        %v2344 = vpop.f32.mrf.mxu0
        %v2345 = vpop.f32.mrf.mxu0
        %v2346 = vpop.f32.mrf.mxu0
        %2347 = vdwg.mxu0
        %2349 = vrot.lane.b32.xlu0 %v2130, 120
        %v2350 = vpop.permute.xlu0 %2349
        %2351 = vrot.lane.b32.xlu0 %v2132, 120
        %v2352 = vpop.permute.xlu0 %2351
        %v2354 = vsel %vm959, %v2350, 0
        %v2357 = vsel %vm959, %v2352, 0
        %2359 = vmatprep.subr.bf16.mxu0 0
        %2360 = vmatpush1.bf16.xpose.msra.mxu0 0
        %2361 = vmatprep.subr.bf16.mxu0 0
        %2362 = vmatpush1.bf16.xpose.msra.mxu0 0
        %2363 = vmatprep.subr.bf16.mxu0 0
        %2364 = vmatpush1.bf16.xpose.msra.mxu0 0
        %2365 = vmatprep.subr.bf16.mxu0 0
        %2366 = vmatpush1.bf16.xpose.msra.mxu0 0
        %2367 = vmatprep.subr.bf16.mxu0 0
        %2368 = vmatpush1.bf16.xpose.msra.mxu0 0
        %2369 = vmatprep.subr.bf16.mxu0 0
        %2370 = vmatpush1.bf16.xpose.msra.mxu0 0
        %2371 = vmatprep.subr.bf16.mxu0 0
        %2372 = vmatpush1.bf16.xpose.msra.mxu0 0
        %2373 = vmatprep.subr.bf16.mxu0 0
        %2374 = vmatpush1.bf16.xpose.msra.mxu0 %v2357
        %2375 = vmatprep.subr.bf16.mxu0 0
        %2376 = vmatpush2.bf16.xpose.msra.mxu0 0
        %2377 = vmatprep.subr.bf16.mxu0 0
        %2378 = vmatpush2.bf16.xpose.msra.mxu0 0
        %2379 = vmatprep.subr.bf16.mxu0 0
        %2380 = vmatpush2.bf16.xpose.msra.mxu0 0
        %2381 = vmatprep.subr.bf16.mxu0 0
        %2382 = vmatpush2.bf16.xpose.msra.mxu0 0
        %2383 = vmatprep.subr.bf16.mxu0 0
        %2384 = vmatpush2.bf16.xpose.msra.mxu0 0
        %2385 = vmatprep.subr.bf16.mxu0 0
        %2386 = vmatpush2.bf16.xpose.msra.mxu0 0
        %2387 = vmatprep.subr.bf16.mxu0 0
        %2388 = vmatpush2.bf16.xpose.msra.mxu0 0
        %2389 = vmatprep.subr.bf16.mxu0 0
        %2390 = vmatpush2.bf16.xpose.msra.mxu0 0
        %2391 = vmatprep.mubr.bf16.mxu0 0
        %2392 = vmatmul.mubr.bf16.gmra.mxu0 %v2354
        %v2393 = vpop.f32.mrf.mxu0
        %v2394 = vadd.f32 0.0, %v2393
        %v2395 = vpop.f32.mrf.mxu0
        %v2396 = vpop.f32.mrf.mxu0
        %v2397 = vpop.f32.mrf.mxu0
        %2398 = vdwg.mxu0
        %2400 = vrot.lane.b32.xlu0 %v2131, 120
        %v2401 = vpop.permute.xlu0 %2400
        %2402 = vrot.lane.b32.xlu0 %v2133, 120
        %v2403 = vpop.permute.xlu0 %2402
        %v2405 = vsel %vm959, %v2401, 0
        %v2408 = vsel %vm959, %v2403, 0
        %2410 = vmatprep.subr.bf16.mxu0 0
        %2411 = vmatpush1.bf16.xpose.msra.mxu0 0
        %2412 = vmatprep.subr.bf16.mxu0 0
        %2413 = vmatpush1.bf16.xpose.msra.mxu0 0
        %2414 = vmatprep.subr.bf16.mxu0 0
        %2415 = vmatpush1.bf16.xpose.msra.mxu0 0
        %2416 = vmatprep.subr.bf16.mxu0 0
        %2417 = vmatpush1.bf16.xpose.msra.mxu0 0
        %2418 = vmatprep.subr.bf16.mxu0 0
        %2419 = vmatpush1.bf16.xpose.msra.mxu0 0
        %2420 = vmatprep.subr.bf16.mxu0 0
        %2421 = vmatpush1.bf16.xpose.msra.mxu0 0
        %2422 = vmatprep.subr.bf16.mxu0 0
        %2423 = vmatpush1.bf16.xpose.msra.mxu0 0
        %2424 = vmatprep.subr.bf16.mxu0 0
        %2425 = vmatpush1.bf16.xpose.msra.mxu0 %v2408
        %2426 = vmatprep.subr.bf16.mxu0 0
        %2427 = vmatpush2.bf16.xpose.msra.mxu0 0
        %2428 = vmatprep.subr.bf16.mxu0 0
        %2429 = vmatpush2.bf16.xpose.msra.mxu0 0
        %2430 = vmatprep.subr.bf16.mxu0 0
        %2431 = vmatpush2.bf16.xpose.msra.mxu0 0
        %2432 = vmatprep.subr.bf16.mxu0 0
        %2433 = vmatpush2.bf16.xpose.msra.mxu0 0
        %2434 = vmatprep.subr.bf16.mxu0 0
        %2435 = vmatpush2.bf16.xpose.msra.mxu0 0
        %2436 = vmatprep.subr.bf16.mxu0 0
        %2437 = vmatpush2.bf16.xpose.msra.mxu0 0
        %2438 = vmatprep.subr.bf16.mxu0 0
        %2439 = vmatpush2.bf16.xpose.msra.mxu0 0
        %2440 = vmatprep.subr.bf16.mxu0 0
        %2441 = vmatpush2.bf16.xpose.msra.mxu0 0
        %2442 = vmatprep.mubr.bf16.mxu0 0
        %2443 = vmatmul.mubr.bf16.gmra.mxu0 %v2405
        %v2444 = vpop.f32.mrf.mxu0
        %v2445 = vadd.f32 0.0, %v2444
        %v2446 = vpop.f32.mrf.mxu0
        %v2447 = vpop.f32.mrf.mxu0
        %v2448 = vpop.f32.mrf.mxu0
        %2449 = vdwg.mxu0
        %v2450 = vsel %vm959, %v2394, -inf
        %2451 = vmax.xlane.f32.xlu0 %v2450
        %v2452 = vpop.xlane.xlu0 %2451
        %v2453 = vsel %vm959, %v2445, -inf
        %2454 = vmax.xlane.f32.xlu0 %v2453
        %v2455 = vpop.xlane.xlu0 %2454
        %v2456 = vsub.f32 %v2394, %v2452
        %v2457 = vsub.f32 %v2445, %v2455
        %v2458 = vmul.f32 %v2456, 1.442695
        %v2459 = vpow.pop %v2458
        %v2460 = vmul.f32 %v2457, 1.442695
        %v2461 = vpow.pop %v2460
        %v2462 = vsel %vm959, %v2459, 0.0
        %2463 = vadd.xlane.f32.xlu0 %v2462
        %v2464 = vpop.xlane.xlu0 %2463
        %v2465 = vsel %vm959, %v2461, 0.0
        %2466 = vadd.xlane.f32.xlu0 %v2465
        %v2467 = vpop.xlane.xlu0 %2466
        %v2468 = vrcp.pop %v2464
        %v2469 = vmul.f32 %v2459, %v2468
        %v2470 = vrcp.pop %v2467
        %v2471 = vmul.f32 %v2461, %v2470
        %v2472 = vpack.c.bf16 %v2469, %v2469
        %v2473 = vpack.c.bf16 %v2471, %v2471
        %2474 = vrot.lane.b32.xlu0 %v2132, 88
        %v2475 = vpop.permute.xlu0 %2474
        %v2477 = vsel %vm959, %v2472, 0
        %v2480 = vsel %vm1082, %v2475, 0
        %2482 = vmatprep.subr.bf16.mxu0 0
        %2483 = vmatpush1.bf16.msra.mxu0 0
        %2484 = vmatprep.subr.bf16.mxu0 0
        %2485 = vmatpush1.bf16.msra.mxu0 0
        %2486 = vmatprep.subr.bf16.mxu0 0
        %2487 = vmatpush1.bf16.msra.mxu0 0
        %2488 = vmatprep.subr.bf16.mxu0 0
        %2489 = vmatpush1.bf16.msra.mxu0 0
        %2490 = vmatprep.subr.bf16.mxu0 0
        %2491 = vmatpush1.bf16.msra.mxu0 0
        %2492 = vmatprep.subr.bf16.mxu0 0
        %2493 = vmatpush1.bf16.msra.mxu0 0
        %2494 = vmatprep.subr.bf16.mxu0 0
        %2495 = vmatpush1.bf16.msra.mxu0 0
        %2496 = vmatprep.subr.bf16.mxu0 0
        %2497 = vmatpush1.bf16.msra.mxu0 %v2480
        %2498 = vmatprep.subr.bf16.mxu0 0
        %2499 = vmatpush2.bf16.msra.mxu0 0
        %2500 = vmatprep.subr.bf16.mxu0 0
        %2501 = vmatpush2.bf16.msra.mxu0 0
        %2502 = vmatprep.subr.bf16.mxu0 0
        %2503 = vmatpush2.bf16.msra.mxu0 0
        %2504 = vmatprep.subr.bf16.mxu0 0
        %2505 = vmatpush2.bf16.msra.mxu0 0
        %2506 = vmatprep.subr.bf16.mxu0 0
        %2507 = vmatpush2.bf16.msra.mxu0 0
        %2508 = vmatprep.subr.bf16.mxu0 0
        %2509 = vmatpush2.bf16.msra.mxu0 0
        %2510 = vmatprep.subr.bf16.mxu0 0
        %2511 = vmatpush2.bf16.msra.mxu0 0
        %2512 = vmatprep.subr.bf16.mxu0 0
        %2513 = vmatpush2.bf16.msra.mxu0 0
        %2514 = vmatprep.mubr.bf16.mxu0 0
        %2515 = vmatmul.mubr.bf16.gmra.mxu0 %v2477
        %v2516 = vpop.f32.mrf.mxu0
        %v2517 = vadd.f32 0.0, %v2516
        %v2518 = vpop.f32.mrf.mxu0
        %v2519 = vpop.f32.mrf.mxu0
        %v2520 = vpop.f32.mrf.mxu0
        %2521 = vdwg.mxu0
        %2522 = vrot.lane.b32.xlu0 %v2133, 88
        %v2523 = vpop.permute.xlu0 %2522
        %v2525 = vsel %vm959, %v2473, 0
        %v2528 = vsel %vm1082, %v2523, 0
        %2530 = vmatprep.subr.bf16.mxu0 0
        %2531 = vmatpush1.bf16.msra.mxu0 0
        %2532 = vmatprep.subr.bf16.mxu0 0
        %2533 = vmatpush1.bf16.msra.mxu0 0
        %2534 = vmatprep.subr.bf16.mxu0 0
        %2535 = vmatpush1.bf16.msra.mxu0 0
        %2536 = vmatprep.subr.bf16.mxu0 0
        %2537 = vmatpush1.bf16.msra.mxu0 0
        %2538 = vmatprep.subr.bf16.mxu0 0
        %2539 = vmatpush1.bf16.msra.mxu0 0
        %2540 = vmatprep.subr.bf16.mxu0 0
        %2541 = vmatpush1.bf16.msra.mxu0 0
        %2542 = vmatprep.subr.bf16.mxu0 0
        %2543 = vmatpush1.bf16.msra.mxu0 0
        %2544 = vmatprep.subr.bf16.mxu0 0
        %2545 = vmatpush1.bf16.msra.mxu0 %v2528
        %2546 = vmatprep.subr.bf16.mxu0 0
        %2547 = vmatpush2.bf16.msra.mxu0 0
        %2548 = vmatprep.subr.bf16.mxu0 0
        %2549 = vmatpush2.bf16.msra.mxu0 0
        %2550 = vmatprep.subr.bf16.mxu0 0
        %2551 = vmatpush2.bf16.msra.mxu0 0
        %2552 = vmatprep.subr.bf16.mxu0 0
        %2553 = vmatpush2.bf16.msra.mxu0 0
        %2554 = vmatprep.subr.bf16.mxu0 0
        %2555 = vmatpush2.bf16.msra.mxu0 0
        %2556 = vmatprep.subr.bf16.mxu0 0
        %2557 = vmatpush2.bf16.msra.mxu0 0
        %2558 = vmatprep.subr.bf16.mxu0 0
        %2559 = vmatpush2.bf16.msra.mxu0 0
        %2560 = vmatprep.subr.bf16.mxu0 0
        %2561 = vmatpush2.bf16.msra.mxu0 0
        %2562 = vmatprep.mubr.bf16.mxu0 0
        %2563 = vmatmul.mubr.bf16.gmra.mxu0 %v2525
        %v2564 = vpop.f32.mrf.mxu0
        %v2565 = vadd.f32 0.0, %v2564
        %v2566 = vpop.f32.mrf.mxu0
        %v2567 = vpop.f32.mrf.mxu0
        %v2568 = vpop.f32.mrf.mxu0
        %2569 = vdwg.mxu0
        %2570 = vrot.lane.b32.xlu0 %v2130, 112
        %v2571 = vpop.permute.xlu0 %2570
        %2572 = vrot.lane.b32.xlu0 %v2132, 112
        %v2573 = vpop.permute.xlu0 %2572
        %v2575 = vsel %vm959, %v2571, 0
        %v2578 = vsel %vm959, %v2573, 0
        %2580 = vmatprep.subr.bf16.mxu0 0
        %2581 = vmatpush1.bf16.xpose.msra.mxu0 0
        %2582 = vmatprep.subr.bf16.mxu0 0
        %2583 = vmatpush1.bf16.xpose.msra.mxu0 0
        %2584 = vmatprep.subr.bf16.mxu0 0
        %2585 = vmatpush1.bf16.xpose.msra.mxu0 0
        %2586 = vmatprep.subr.bf16.mxu0 0
        %2587 = vmatpush1.bf16.xpose.msra.mxu0 0
        %2588 = vmatprep.subr.bf16.mxu0 0
        %2589 = vmatpush1.bf16.xpose.msra.mxu0 0
        %2590 = vmatprep.subr.bf16.mxu0 0
        %2591 = vmatpush1.bf16.xpose.msra.mxu0 0
        %2592 = vmatprep.subr.bf16.mxu0 0
        %2593 = vmatpush1.bf16.xpose.msra.mxu0 0
        %2594 = vmatprep.subr.bf16.mxu0 0
        %2595 = vmatpush1.bf16.xpose.msra.mxu0 %v2578
        %2596 = vmatprep.subr.bf16.mxu0 0
        %2597 = vmatpush2.bf16.xpose.msra.mxu0 0
        %2598 = vmatprep.subr.bf16.mxu0 0
        %2599 = vmatpush2.bf16.xpose.msra.mxu0 0
        %2600 = vmatprep.subr.bf16.mxu0 0
        %2601 = vmatpush2.bf16.xpose.msra.mxu0 0
        %2602 = vmatprep.subr.bf16.mxu0 0
        %2603 = vmatpush2.bf16.xpose.msra.mxu0 0
        %2604 = vmatprep.subr.bf16.mxu0 0
        %2605 = vmatpush2.bf16.xpose.msra.mxu0 0
        %2606 = vmatprep.subr.bf16.mxu0 0
        %2607 = vmatpush2.bf16.xpose.msra.mxu0 0
        %2608 = vmatprep.subr.bf16.mxu0 0
        %2609 = vmatpush2.bf16.xpose.msra.mxu0 0
        %2610 = vmatprep.subr.bf16.mxu0 0
        %2611 = vmatpush2.bf16.xpose.msra.mxu0 0
        %2612 = vmatprep.mubr.bf16.mxu0 0
        %2613 = vmatmul.mubr.bf16.gmra.mxu0 %v2575
        %v2614 = vpop.f32.mrf.mxu0
        %v2615 = vadd.f32 0.0, %v2614
        %v2616 = vpop.f32.mrf.mxu0
        %v2617 = vpop.f32.mrf.mxu0
        %v2618 = vpop.f32.mrf.mxu0
        %2619 = vdwg.mxu0
        %2620 = vrot.lane.b32.xlu0 %v2131, 112
        %v2621 = vpop.permute.xlu0 %2620
        %2622 = vrot.lane.b32.xlu0 %v2133, 112
        %v2623 = vpop.permute.xlu0 %2622
        %v2625 = vsel %vm959, %v2621, 0
        %v2628 = vsel %vm959, %v2623, 0
        %2630 = vmatprep.subr.bf16.mxu0 0
        %2631 = vmatpush1.bf16.xpose.msra.mxu0 0
        %2632 = vmatprep.subr.bf16.mxu0 0
        %2633 = vmatpush1.bf16.xpose.msra.mxu0 0
        %2634 = vmatprep.subr.bf16.mxu0 0
        %2635 = vmatpush1.bf16.xpose.msra.mxu0 0
        %2636 = vmatprep.subr.bf16.mxu0 0
        %2637 = vmatpush1.bf16.xpose.msra.mxu0 0
        %2638 = vmatprep.subr.bf16.mxu0 0
        %2639 = vmatpush1.bf16.xpose.msra.mxu0 0
        %2640 = vmatprep.subr.bf16.mxu0 0
        %2641 = vmatpush1.bf16.xpose.msra.mxu0 0
        %2642 = vmatprep.subr.bf16.mxu0 0
        %2643 = vmatpush1.bf16.xpose.msra.mxu0 0
        %2644 = vmatprep.subr.bf16.mxu0 0
        %2645 = vmatpush1.bf16.xpose.msra.mxu0 %v2628
        %2646 = vmatprep.subr.bf16.mxu0 0
        %2647 = vmatpush2.bf16.xpose.msra.mxu0 0
        %2648 = vmatprep.subr.bf16.mxu0 0
        %2649 = vmatpush2.bf16.xpose.msra.mxu0 0
        %2650 = vmatprep.subr.bf16.mxu0 0
        %2651 = vmatpush2.bf16.xpose.msra.mxu0 0
        %2652 = vmatprep.subr.bf16.mxu0 0
        %2653 = vmatpush2.bf16.xpose.msra.mxu0 0
        %2654 = vmatprep.subr.bf16.mxu0 0
        %2655 = vmatpush2.bf16.xpose.msra.mxu0 0
        %2656 = vmatprep.subr.bf16.mxu0 0
        %2657 = vmatpush2.bf16.xpose.msra.mxu0 0
        %2658 = vmatprep.subr.bf16.mxu0 0
        %2659 = vmatpush2.bf16.xpose.msra.mxu0 0
        %2660 = vmatprep.subr.bf16.mxu0 0
        %2661 = vmatpush2.bf16.xpose.msra.mxu0 0
        %2662 = vmatprep.mubr.bf16.mxu0 0
        %2663 = vmatmul.mubr.bf16.gmra.mxu0 %v2625
        %v2664 = vpop.f32.mrf.mxu0
        %v2665 = vadd.f32 0.0, %v2664
        %v2666 = vpop.f32.mrf.mxu0
        %v2667 = vpop.f32.mrf.mxu0
        %v2668 = vpop.f32.mrf.mxu0
        %2669 = vdwg.mxu0
        %v2670 = vsel %vm959, %v2615, -inf
        %2671 = vmax.xlane.f32.xlu0 %v2670
        %v2672 = vpop.xlane.xlu0 %2671
        %v2673 = vsel %vm959, %v2665, -inf
        %2674 = vmax.xlane.f32.xlu0 %v2673
        %v2675 = vpop.xlane.xlu0 %2674
        %v2676 = vsub.f32 %v2615, %v2672
        %v2677 = vsub.f32 %v2665, %v2675
        %v2678 = vmul.f32 %v2676, 1.442695
        %v2679 = vpow.pop %v2678
        %v2680 = vmul.f32 %v2677, 1.442695
        %v2681 = vpow.pop %v2680
        %v2682 = vsel %vm959, %v2679, 0.0
        %2683 = vadd.xlane.f32.xlu0 %v2682
        %v2684 = vpop.xlane.xlu0 %2683
        %v2685 = vsel %vm959, %v2681, 0.0
        %2686 = vadd.xlane.f32.xlu0 %v2685
        %v2687 = vpop.xlane.xlu0 %2686
        %v2688 = vrcp.pop %v2684
        %v2689 = vmul.f32 %v2679, %v2688
        %v2690 = vrcp.pop %v2687
        %v2691 = vmul.f32 %v2681, %v2690
        %v2692 = vpack.c.bf16 %v2689, %v2689
        %v2693 = vpack.c.bf16 %v2691, %v2691
        %2694 = vrot.lane.b32.xlu0 %v2132, 80
        %v2695 = vpop.permute.xlu0 %2694
        %v2697 = vsel %vm959, %v2692, 0
        %v2700 = vsel %vm1082, %v2695, 0
        %2702 = vmatprep.subr.bf16.mxu0 0
        %2703 = vmatpush1.bf16.msra.mxu0 0
        %2704 = vmatprep.subr.bf16.mxu0 0
        %2705 = vmatpush1.bf16.msra.mxu0 0
        %2706 = vmatprep.subr.bf16.mxu0 0
        %2707 = vmatpush1.bf16.msra.mxu0 0
        %2708 = vmatprep.subr.bf16.mxu0 0
        %2709 = vmatpush1.bf16.msra.mxu0 0
        %2710 = vmatprep.subr.bf16.mxu0 0
        %2711 = vmatpush1.bf16.msra.mxu0 0
        %2712 = vmatprep.subr.bf16.mxu0 0
        %2713 = vmatpush1.bf16.msra.mxu0 0
        %2714 = vmatprep.subr.bf16.mxu0 0
        %2715 = vmatpush1.bf16.msra.mxu0 0
        %2716 = vmatprep.subr.bf16.mxu0 0
        %2717 = vmatpush1.bf16.msra.mxu0 %v2700
        %2718 = vmatprep.subr.bf16.mxu0 0
        %2719 = vmatpush2.bf16.msra.mxu0 0
        %2720 = vmatprep.subr.bf16.mxu0 0
        %2721 = vmatpush2.bf16.msra.mxu0 0
        %2722 = vmatprep.subr.bf16.mxu0 0
        %2723 = vmatpush2.bf16.msra.mxu0 0
        %2724 = vmatprep.subr.bf16.mxu0 0
        %2725 = vmatpush2.bf16.msra.mxu0 0
        %2726 = vmatprep.subr.bf16.mxu0 0
        %2727 = vmatpush2.bf16.msra.mxu0 0
        %2728 = vmatprep.subr.bf16.mxu0 0
        %2729 = vmatpush2.bf16.msra.mxu0 0
        %2730 = vmatprep.subr.bf16.mxu0 0
        %2731 = vmatpush2.bf16.msra.mxu0 0
        %2732 = vmatprep.subr.bf16.mxu0 0
        %2733 = vmatpush2.bf16.msra.mxu0 0
        %2734 = vmatprep.mubr.bf16.mxu0 0
        %2735 = vmatmul.mubr.bf16.gmra.mxu0 %v2697
        %v2736 = vpop.f32.mrf.mxu0
        %v2737 = vadd.f32 0.0, %v2736
        %v2738 = vpop.f32.mrf.mxu0
        %v2739 = vpop.f32.mrf.mxu0
        %v2740 = vpop.f32.mrf.mxu0
        %2741 = vdwg.mxu0
        %2742 = vrot.lane.b32.xlu0 %v2133, 80
        %v2743 = vpop.permute.xlu0 %2742
        %v2745 = vsel %vm959, %v2693, 0
        %v2748 = vsel %vm1082, %v2743, 0
        %2750 = vmatprep.subr.bf16.mxu0 0
        %2751 = vmatpush1.bf16.msra.mxu0 0
        %2752 = vmatprep.subr.bf16.mxu0 0
        %2753 = vmatpush1.bf16.msra.mxu0 0
        %2754 = vmatprep.subr.bf16.mxu0 0
        %2755 = vmatpush1.bf16.msra.mxu0 0
        %2756 = vmatprep.subr.bf16.mxu0 0
        %2757 = vmatpush1.bf16.msra.mxu0 0
        %2758 = vmatprep.subr.bf16.mxu0 0
        %2759 = vmatpush1.bf16.msra.mxu0 0
        %2760 = vmatprep.subr.bf16.mxu0 0
        %2761 = vmatpush1.bf16.msra.mxu0 0
        %2762 = vmatprep.subr.bf16.mxu0 0
        %2763 = vmatpush1.bf16.msra.mxu0 0
        %2764 = vmatprep.subr.bf16.mxu0 0
        %2765 = vmatpush1.bf16.msra.mxu0 %v2748
        %2766 = vmatprep.subr.bf16.mxu0 0
        %2767 = vmatpush2.bf16.msra.mxu0 0
        %2768 = vmatprep.subr.bf16.mxu0 0
        %2769 = vmatpush2.bf16.msra.mxu0 0
        %2770 = vmatprep.subr.bf16.mxu0 0
        %2771 = vmatpush2.bf16.msra.mxu0 0
        %2772 = vmatprep.subr.bf16.mxu0 0
        %2773 = vmatpush2.bf16.msra.mxu0 0
        %2774 = vmatprep.subr.bf16.mxu0 0
        %2775 = vmatpush2.bf16.msra.mxu0 0
        %2776 = vmatprep.subr.bf16.mxu0 0
        %2777 = vmatpush2.bf16.msra.mxu0 0
        %2778 = vmatprep.subr.bf16.mxu0 0
        %2779 = vmatpush2.bf16.msra.mxu0 0
        %2780 = vmatprep.subr.bf16.mxu0 0
        %2781 = vmatpush2.bf16.msra.mxu0 0
        %2782 = vmatprep.mubr.bf16.mxu0 0
        %2783 = vmatmul.mubr.bf16.gmra.mxu0 %v2745
        %v2784 = vpop.f32.mrf.mxu0
        %v2785 = vadd.f32 0.0, %v2784
        %v2786 = vpop.f32.mrf.mxu0
        %v2787 = vpop.f32.mrf.mxu0
        %v2788 = vpop.f32.mrf.mxu0
        %2789 = vdwg.mxu0
        %2790 = vrot.lane.b32.xlu0 %v2130, 104
        %v2791 = vpop.permute.xlu0 %2790
        %2792 = vrot.lane.b32.xlu0 %v2132, 104
        %v2793 = vpop.permute.xlu0 %2792
        %v2795 = vsel %vm959, %v2791, 0
        %v2798 = vsel %vm959, %v2793, 0
        %2800 = vmatprep.subr.bf16.mxu0 0
        %2801 = vmatpush1.bf16.xpose.msra.mxu0 0
        %2802 = vmatprep.subr.bf16.mxu0 0
        %2803 = vmatpush1.bf16.xpose.msra.mxu0 0
        %2804 = vmatprep.subr.bf16.mxu0 0
        %2805 = vmatpush1.bf16.xpose.msra.mxu0 0
        %2806 = vmatprep.subr.bf16.mxu0 0
        %2807 = vmatpush1.bf16.xpose.msra.mxu0 0
        %2808 = vmatprep.subr.bf16.mxu0 0
        %2809 = vmatpush1.bf16.xpose.msra.mxu0 0
        %2810 = vmatprep.subr.bf16.mxu0 0
        %2811 = vmatpush1.bf16.xpose.msra.mxu0 0
        %2812 = vmatprep.subr.bf16.mxu0 0
        %2813 = vmatpush1.bf16.xpose.msra.mxu0 0
        %2814 = vmatprep.subr.bf16.mxu0 0
        %2815 = vmatpush1.bf16.xpose.msra.mxu0 %v2798
        %2816 = vmatprep.subr.bf16.mxu0 0
        %2817 = vmatpush2.bf16.xpose.msra.mxu0 0
        %2818 = vmatprep.subr.bf16.mxu0 0
        %2819 = vmatpush2.bf16.xpose.msra.mxu0 0
        %2820 = vmatprep.subr.bf16.mxu0 0
        %2821 = vmatpush2.bf16.xpose.msra.mxu0 0
        %2822 = vmatprep.subr.bf16.mxu0 0
        %2823 = vmatpush2.bf16.xpose.msra.mxu0 0
        %2824 = vmatprep.subr.bf16.mxu0 0
        %2825 = vmatpush2.bf16.xpose.msra.mxu0 0
        %2826 = vmatprep.subr.bf16.mxu0 0
        %2827 = vmatpush2.bf16.xpose.msra.mxu0 0
        %2828 = vmatprep.subr.bf16.mxu0 0
        %2829 = vmatpush2.bf16.xpose.msra.mxu0 0
        %2830 = vmatprep.subr.bf16.mxu0 0
        %2831 = vmatpush2.bf16.xpose.msra.mxu0 0
        %2832 = vmatprep.mubr.bf16.mxu0 0
        %2833 = vmatmul.mubr.bf16.gmra.mxu0 %v2795
        %v2834 = vpop.f32.mrf.mxu0
        %v2835 = vadd.f32 0.0, %v2834
        %v2836 = vpop.f32.mrf.mxu0
        %v2837 = vpop.f32.mrf.mxu0
        %v2838 = vpop.f32.mrf.mxu0
        %2839 = vdwg.mxu0
        %2840 = vrot.lane.b32.xlu0 %v2131, 104
        %v2841 = vpop.permute.xlu0 %2840
        %2842 = vrot.lane.b32.xlu0 %v2133, 104
        %v2843 = vpop.permute.xlu0 %2842
        %v2845 = vsel %vm959, %v2841, 0
        %v2848 = vsel %vm959, %v2843, 0
        %2850 = vmatprep.subr.bf16.mxu0 0
        %2851 = vmatpush1.bf16.xpose.msra.mxu0 0
        %2852 = vmatprep.subr.bf16.mxu0 0
        %2853 = vmatpush1.bf16.xpose.msra.mxu0 0
        %2854 = vmatprep.subr.bf16.mxu0 0
        %2855 = vmatpush1.bf16.xpose.msra.mxu0 0
        %2856 = vmatprep.subr.bf16.mxu0 0
        %2857 = vmatpush1.bf16.xpose.msra.mxu0 0
        %2858 = vmatprep.subr.bf16.mxu0 0
        %2859 = vmatpush1.bf16.xpose.msra.mxu0 0
        %2860 = vmatprep.subr.bf16.mxu0 0
        %2861 = vmatpush1.bf16.xpose.msra.mxu0 0
        %2862 = vmatprep.subr.bf16.mxu0 0
        %2863 = vmatpush1.bf16.xpose.msra.mxu0 0
        %2864 = vmatprep.subr.bf16.mxu0 0
        %2865 = vmatpush1.bf16.xpose.msra.mxu0 %v2848
        %2866 = vmatprep.subr.bf16.mxu0 0
        %2867 = vmatpush2.bf16.xpose.msra.mxu0 0
        %2868 = vmatprep.subr.bf16.mxu0 0
        %2869 = vmatpush2.bf16.xpose.msra.mxu0 0
        %2870 = vmatprep.subr.bf16.mxu0 0
        %2871 = vmatpush2.bf16.xpose.msra.mxu0 0
        %2872 = vmatprep.subr.bf16.mxu0 0
        %2873 = vmatpush2.bf16.xpose.msra.mxu0 0
        %2874 = vmatprep.subr.bf16.mxu0 0
        %2875 = vmatpush2.bf16.xpose.msra.mxu0 0
        %2876 = vmatprep.subr.bf16.mxu0 0
        %2877 = vmatpush2.bf16.xpose.msra.mxu0 0
        %2878 = vmatprep.subr.bf16.mxu0 0
        %2879 = vmatpush2.bf16.xpose.msra.mxu0 0
        %2880 = vmatprep.subr.bf16.mxu0 0
        %2881 = vmatpush2.bf16.xpose.msra.mxu0 0
        %2882 = vmatprep.mubr.bf16.mxu0 0
        %2883 = vmatmul.mubr.bf16.gmra.mxu0 %v2845
        %v2884 = vpop.f32.mrf.mxu0
        %v2885 = vadd.f32 0.0, %v2884
        %v2886 = vpop.f32.mrf.mxu0
        %v2887 = vpop.f32.mrf.mxu0
        %v2888 = vpop.f32.mrf.mxu0
        %2889 = vdwg.mxu0
        %v2890 = vsel %vm959, %v2835, -inf
        %2891 = vmax.xlane.f32.xlu0 %v2890
        %v2892 = vpop.xlane.xlu0 %2891
        %v2893 = vsel %vm959, %v2885, -inf
        %2894 = vmax.xlane.f32.xlu0 %v2893
        %v2895 = vpop.xlane.xlu0 %2894
        %v2896 = vsub.f32 %v2835, %v2892
        %v2897 = vsub.f32 %v2885, %v2895
        %v2898 = vmul.f32 %v2896, 1.442695
        %v2899 = vpow.pop %v2898
        %v2900 = vmul.f32 %v2897, 1.442695
        %v2901 = vpow.pop %v2900
        %v2902 = vsel %vm959, %v2899, 0.0
        %2903 = vadd.xlane.f32.xlu0 %v2902
        %v2904 = vpop.xlane.xlu0 %2903
        %v2905 = vsel %vm959, %v2901, 0.0
        %2906 = vadd.xlane.f32.xlu0 %v2905
        %v2907 = vpop.xlane.xlu0 %2906
        %v2908 = vrcp.pop %v2904
        %v2909 = vmul.f32 %v2899, %v2908
        %v2910 = vrcp.pop %v2907
        %v2911 = vmul.f32 %v2901, %v2910
        %v2912 = vpack.c.bf16 %v2909, %v2909
        %v2913 = vpack.c.bf16 %v2911, %v2911
        %2914 = vrot.lane.b32.xlu0 %v2132, 72
        %v2915 = vpop.permute.xlu0 %2914
        %v2917 = vsel %vm959, %v2912, 0
        %v2920 = vsel %vm1082, %v2915, 0
        %2922 = vmatprep.subr.bf16.mxu0 0
        %2923 = vmatpush1.bf16.msra.mxu0 0
        %2924 = vmatprep.subr.bf16.mxu0 0
        %2925 = vmatpush1.bf16.msra.mxu0 0
        %2926 = vmatprep.subr.bf16.mxu0 0
        %2927 = vmatpush1.bf16.msra.mxu0 0
        %2928 = vmatprep.subr.bf16.mxu0 0
        %2929 = vmatpush1.bf16.msra.mxu0 0
        %2930 = vmatprep.subr.bf16.mxu0 0
        %2931 = vmatpush1.bf16.msra.mxu0 0
        %2932 = vmatprep.subr.bf16.mxu0 0
        %2933 = vmatpush1.bf16.msra.mxu0 0
        %2934 = vmatprep.subr.bf16.mxu0 0
        %2935 = vmatpush1.bf16.msra.mxu0 0
        %2936 = vmatprep.subr.bf16.mxu0 0
        %2937 = vmatpush1.bf16.msra.mxu0 %v2920
        %2938 = vmatprep.subr.bf16.mxu0 0
        %2939 = vmatpush2.bf16.msra.mxu0 0
        %2940 = vmatprep.subr.bf16.mxu0 0
        %2941 = vmatpush2.bf16.msra.mxu0 0
        %2942 = vmatprep.subr.bf16.mxu0 0
        %2943 = vmatpush2.bf16.msra.mxu0 0
        %2944 = vmatprep.subr.bf16.mxu0 0
        %2945 = vmatpush2.bf16.msra.mxu0 0
        %2946 = vmatprep.subr.bf16.mxu0 0
        %2947 = vmatpush2.bf16.msra.mxu0 0
        %2948 = vmatprep.subr.bf16.mxu0 0
        %2949 = vmatpush2.bf16.msra.mxu0 0
        %2950 = vmatprep.subr.bf16.mxu0 0
        %2951 = vmatpush2.bf16.msra.mxu0 0
        %2952 = vmatprep.subr.bf16.mxu0 0
        %2953 = vmatpush2.bf16.msra.mxu0 0
        %2954 = vmatprep.mubr.bf16.mxu0 0
        %2955 = vmatmul.mubr.bf16.gmra.mxu0 %v2917
        %v2956 = vpop.f32.mrf.mxu0
        %v2957 = vadd.f32 0.0, %v2956
        %v2958 = vpop.f32.mrf.mxu0
        %v2959 = vpop.f32.mrf.mxu0
        %v2960 = vpop.f32.mrf.mxu0
        %2961 = vdwg.mxu0
        %2962 = vrot.lane.b32.xlu0 %v2133, 72
        %v2963 = vpop.permute.xlu0 %2962
        %v2965 = vsel %vm959, %v2913, 0
        %v2968 = vsel %vm1082, %v2963, 0
        %2970 = vmatprep.subr.bf16.mxu0 0
        %2971 = vmatpush1.bf16.msra.mxu0 0
        %2972 = vmatprep.subr.bf16.mxu0 0
        %2973 = vmatpush1.bf16.msra.mxu0 0
        %2974 = vmatprep.subr.bf16.mxu0 0
        %2975 = vmatpush1.bf16.msra.mxu0 0
        %2976 = vmatprep.subr.bf16.mxu0 0
        %2977 = vmatpush1.bf16.msra.mxu0 0
        %2978 = vmatprep.subr.bf16.mxu0 0
        %2979 = vmatpush1.bf16.msra.mxu0 0
        %2980 = vmatprep.subr.bf16.mxu0 0
        %2981 = vmatpush1.bf16.msra.mxu0 0
        %2982 = vmatprep.subr.bf16.mxu0 0
        %2983 = vmatpush1.bf16.msra.mxu0 0
        %2984 = vmatprep.subr.bf16.mxu0 0
        %2985 = vmatpush1.bf16.msra.mxu0 %v2968
        %2986 = vmatprep.subr.bf16.mxu0 0
        %2987 = vmatpush2.bf16.msra.mxu0 0
        %2988 = vmatprep.subr.bf16.mxu0 0
        %2989 = vmatpush2.bf16.msra.mxu0 0
        %2990 = vmatprep.subr.bf16.mxu0 0
        %2991 = vmatpush2.bf16.msra.mxu0 0
        %2992 = vmatprep.subr.bf16.mxu0 0
        %2993 = vmatpush2.bf16.msra.mxu0 0
        %2994 = vmatprep.subr.bf16.mxu0 0
        %2995 = vmatpush2.bf16.msra.mxu0 0
        %2996 = vmatprep.subr.bf16.mxu0 0
        %2997 = vmatpush2.bf16.msra.mxu0 0
        %2998 = vmatprep.subr.bf16.mxu0 0
        %2999 = vmatpush2.bf16.msra.mxu0 0
        %3000 = vmatprep.subr.bf16.mxu0 0
        %3001 = vmatpush2.bf16.msra.mxu0 0
        %3002 = vmatprep.mubr.bf16.mxu0 0
        %3003 = vmatmul.mubr.bf16.gmra.mxu0 %v2965
        %v3004 = vpop.f32.mrf.mxu0
        %v3005 = vadd.f32 0.0, %v3004
        %v3006 = vpop.f32.mrf.mxu0
        %v3007 = vpop.f32.mrf.mxu0
        %v3008 = vpop.f32.mrf.mxu0
        %3009 = vdwg.mxu0
        %3012 = vrot.lane.b32.xlu0 %v2517, 8
        %v3013 = vpop.permute.xlu0 %3012
        %3014 = vrot.lane.b32.xlu0 %v2565, 8
        %v3015 = vpop.permute.xlu0 %3014
        %3020 = vrot.lane.b32.xlu0 %v2737, 16
        %v3021 = vpop.permute.xlu0 %3020
        %3022 = vrot.lane.b32.xlu0 %v2785, 16
        %v3023 = vpop.permute.xlu0 %3022
        %3028 = vrot.lane.b32.xlu0 %v2957, 24
        %v3029 = vpop.permute.xlu0 %3028
        %3030 = vrot.lane.b32.xlu0 %v3005, 24
        %v3031 = vpop.permute.xlu0 %3030
        %v3034 = vsel %vm959, %v2294, %v3013
        %v3035 = vsel %vm959, %v2343, %v3015
        %v3036 = vsel %vm1863, %v3034, %v3021
        %v3037 = vsel %vm1863, %v3035, %v3023
        %v3038 = vsel %vm1866, %v3036, %v3029
        %v3039 = vsel %vm1866, %v3037, %v3031
        %v3040 = vpack.c.bf16 %v3039, %v3038
        %s3041 = scalar_lea.vmem %s667, 16 [#allocation12]
        %v3042 = vld [vmem:[%s3041] sm:$0xf]
        %v3043 = vld [vmem:[%s3041 + $0x4] sm:$0xf]
        %v3044 = vld [vmem:[%s3041 + $0x8] sm:$0xf]
        %v3045 = vld [vmem:[%s3041 + $0xc] sm:$0xf]
        %s3046 = scalar_lea.vmem %s676, 1 [#allocation13]
        %v3047 = vld [vmem:[%s3046] sm:$0x1]
        %v3049 = vlaneseq
        %v3050 = vshrl.u32 %v3049, 7
        %v3051 = vsub.s32 0, %v3050
        %v3052 = vrot.slane %v3047, %v3051
        %v3058 = vunpack.c.l.b16 %v3042
        %v3059 = vunpack.c.l.b16 %v3043
        %v3060 = vunpack.c.l.b16 %v3044
        %v3061 = vunpack.c.l.b16 %v3045
        %v3062 = vpack.c.b16 %v3059, %v3058
        %v3063 = vpack.c.b16 %v3061, %v3060
        %v3067 = vsel %vm846, %v3040, 0
        %3069 = vmatprep.subr.bf16.mxu0 0
        %3070 = vmatpush1.bf16.msra.mxu0 0
        %3071 = vmatprep.subr.bf16.mxu0 0
        %3072 = vmatpush1.bf16.msra.mxu0 0
        %3073 = vmatprep.subr.bf16.mxu0 0
        %3074 = vmatpush1.bf16.msra.mxu0 0
        %3075 = vmatprep.subr.bf16.mxu0 0
        %3076 = vmatpush1.bf16.msra.mxu0 0
        %3077 = vmatprep.subr.bf16.mxu0 0
        %3078 = vmatpush1.bf16.msra.mxu0 0
        %3079 = vmatprep.subr.bf16.mxu0 0
        %3080 = vmatpush1.bf16.msra.mxu0 0
        %3081 = vmatprep.subr.bf16.mxu0 0
        %3082 = vmatpush1.bf16.msra.mxu0 %v3063
        %3083 = vmatprep.subr.bf16.mxu0 0
        %3084 = vmatpush1.bf16.msra.mxu0 %v3062
        %3085 = vmatprep.subr.bf16.mxu0 0
        %3086 = vmatpush2.bf16.msra.mxu0 0
        %3087 = vmatprep.subr.bf16.mxu0 0
        %3088 = vmatpush2.bf16.msra.mxu0 0
        %3089 = vmatprep.subr.bf16.mxu0 0
        %3090 = vmatpush2.bf16.msra.mxu0 0
        %3091 = vmatprep.subr.bf16.mxu0 0
        %3092 = vmatpush2.bf16.msra.mxu0 0
        %3093 = vmatprep.subr.bf16.mxu0 0
        %3094 = vmatpush2.bf16.msra.mxu0 0
        %3095 = vmatprep.subr.bf16.mxu0 0
        %3096 = vmatpush2.bf16.msra.mxu0 0
        %3097 = vmatprep.subr.bf16.mxu0 0
        %3098 = vmatpush2.bf16.msra.mxu0 0
        %3099 = vmatprep.subr.bf16.mxu0 0
        %3100 = vmatpush2.bf16.msra.mxu0 0
        %3101 = vmatprep.mubr.bf16.mxu0 0
        %3102 = vmatmul.mubr.bf16.gmra.mxu0 %v3067
        %v3103 = vpop.f32.mrf.mxu0
        %v3104 = vadd.f32 %v3052, %v3103
        %v3105 = vpop.f32.mrf.mxu0
        %v3106 = vpop.f32.mrf.mxu0
        %v3107 = vadd.f32 %v3052, %v3106
        %v3108 = vpop.f32.mrf.mxu0
        %3109 = vdwg.mxu0
        %v3110 = vadd.f32 %v1982, %v3104
        %v3111 = vadd.f32 %v1983, %v3107
        %s3112 = scalar_lea.vmem %s790, 1
        %v3113 = vld [vmem:[%s3112] sm:$0x1]
        %s3114 = scalar_lea.vmem %s794, 1
        %v3115 = vld [vmem:[%s3114] sm:$0x1]
        %v3116 = vsel %vm846, %v3110, 0.0
        %3117 = vadd.xlane.f32.xlu0 %v3116
        %v3118 = vpop.xlane.xlu0 %3117
        %v3119 = vsel %vm846, %v3111, 0.0
        %3120 = vadd.xlane.f32.xlu0 %v3119
        %v3121 = vpop.xlane.xlu0 %3120
        %v3122 = vmul.f32 %v3118, %v1947
        %v3123 = vmul.f32 %v3121, %v1947
        %v3124 = vsub.f32 %v3110, %v3122
        %v3125 = vsub.f32 %v3111, %v3123
        %v3126 = vmul.f32 %v3124, %v3124
        %v3127 = vmul.f32 %v3125, %v3125
        %v3128 = vsel %vm846, %v3126, 0.0
        %3129 = vadd.xlane.f32.xlu0 %v3128
        %v3130 = vpop.xlane.xlu0 %3129
        %v3131 = vsel %vm846, %v3127, 0.0
        %3132 = vadd.xlane.f32.xlu0 %v3131
        %v3133 = vpop.xlane.xlu0 %3132
        %v3134 = vmul.f32 %v3130, %v1947
        %v3135 = vmul.f32 %v3133, %v1947
        %v3136 = vadd.f32 %v3134, 1e-05
        %v3137 = vadd.f32 %v3135, 1e-05
        %v3138 = vrsqrt.pop %v3136
        %v3139 = vrsqrt.pop %v3137
        %v3140 = vmul.f32 %v3124, %v3138
        %v3141 = vmul.f32 %v3125, %v3139
        %v3143 = vlaneseq
        %v3144 = vshrl.u32 %v3143, 7
        %v3145 = vsub.s32 0, %v3144
        %v3146 = vrot.slane %v3113, %v3145
        %v3148 = vmul.f32 %v3140, %v3146
        %v3149 = vmul.f32 %v3141, %v3146
        %v3151 = vlaneseq
        %v3152 = vshrl.u32 %v3151, 7
        %v3153 = vsub.s32 0, %v3152
        %v3154 = vrot.slane %v3115, %v3153
        %v3156 = vadd.f32 %v3148, %v3154
        %v3157 = vadd.f32 %v3149, %v3154
        %v3158 = vpack.c.bf16 %v3157, %v3156
        %v3159 = vld [vmem:[%s775] sm:$0xf]
        %v3160 = vld [vmem:[%s775 + $0x4] sm:$0xf]
        %v3161 = vld [vmem:[%s775 + $0x8] sm:$0xf]
        %v3162 = vld [vmem:[%s775 + $0xc] sm:$0xf]
        %v3163 = vld [vmem:[%s778] sm:$0x1]
        %v3165 = vlaneseq
        %v3166 = vshrl.u32 %v3165, 7
        %v3167 = vsub.s32 0, %v3166
        %v3168 = vrot.slane %v3163, %v3167
        %v3174 = vunpack.c.l.b16 %v3159
        %v3175 = vunpack.c.l.b16 %v3160
        %v3176 = vunpack.c.l.b16 %v3161
        %v3177 = vunpack.c.l.b16 %v3162
        %v3178 = vpack.c.b16 %v3175, %v3174
        %v3179 = vpack.c.b16 %v3177, %v3176
        %v3183 = vsel %vm846, %v3158, 0
        %3185 = vmatprep.subr.bf16.mxu0 0
        %3186 = vmatpush1.bf16.msra.mxu0 0
        %3187 = vmatprep.subr.bf16.mxu0 0
        %3188 = vmatpush1.bf16.msra.mxu0 0
        %3189 = vmatprep.subr.bf16.mxu0 0
        %3190 = vmatpush1.bf16.msra.mxu0 0
        %3191 = vmatprep.subr.bf16.mxu0 0
        %3192 = vmatpush1.bf16.msra.mxu0 0
        %3193 = vmatprep.subr.bf16.mxu0 0
        %3194 = vmatpush1.bf16.msra.mxu0 0
        %3195 = vmatprep.subr.bf16.mxu0 0
        %3196 = vmatpush1.bf16.msra.mxu0 0
        %3197 = vmatprep.subr.bf16.mxu0 0
        %3198 = vmatpush1.bf16.msra.mxu0 %v3179
        %3199 = vmatprep.subr.bf16.mxu0 0
        %3200 = vmatpush1.bf16.msra.mxu0 %v3178
        %3201 = vmatprep.subr.bf16.mxu0 0
        %3202 = vmatpush2.bf16.msra.mxu0 0
        %3203 = vmatprep.subr.bf16.mxu0 0
        %3204 = vmatpush2.bf16.msra.mxu0 0
        %3205 = vmatprep.subr.bf16.mxu0 0
        %3206 = vmatpush2.bf16.msra.mxu0 0
        %3207 = vmatprep.subr.bf16.mxu0 0
        %3208 = vmatpush2.bf16.msra.mxu0 0
        %3209 = vmatprep.subr.bf16.mxu0 0
        %3210 = vmatpush2.bf16.msra.mxu0 0
        %3211 = vmatprep.subr.bf16.mxu0 0
        %3212 = vmatpush2.bf16.msra.mxu0 0
        %3213 = vmatprep.subr.bf16.mxu0 0
        %3214 = vmatpush2.bf16.msra.mxu0 0
        %3215 = vmatprep.subr.bf16.mxu0 0
        %3216 = vmatpush2.bf16.msra.mxu0 0
        %3217 = vmatprep.mubr.bf16.mxu0 0
        %3218 = vmatmul.mubr.bf16.gmra.mxu0 %v3183
        %v3219 = vpop.f32.mrf.mxu0
        %v3220 = vadd.f32 %v3168, %v3219
        %v3221 = vpop.f32.mrf.mxu0
        %v3222 = vpop.f32.mrf.mxu0
        %v3223 = vadd.f32 %v3168, %v3222
        %v3224 = vpop.f32.mrf.mxu0
        %3225 = vdwg.mxu0
        %v3226 = vmax.f32 %v3220, 0.0
        %v3227 = vmax.f32 %v3223, 0.0
        %v3228 = vpack.c.bf16 %v3227, %v3226
        %v3229 = vld [vmem:[%s783] sm:$0xf]
        %v3230 = vld [vmem:[%s783 + $0x4] sm:$0xf]
        %v3231 = vld [vmem:[%s783 + $0x8] sm:$0xf]
        %v3232 = vld [vmem:[%s783 + $0xc] sm:$0xf]
        %v3233 = vld [vmem:[%s783 + $0x10] sm:$0xf]
        %v3234 = vld [vmem:[%s783 + $0x14] sm:$0xf]
        %v3235 = vld [vmem:[%s783 + $0x18] sm:$0xf]
        %v3236 = vld [vmem:[%s783 + $0x1c] sm:$0xf]
        %v3237 = vld [vmem:[%s786] sm:$0x1]
        %v3239 = vlaneseq
        %v3240 = vshrl.u32 %v3239, 7
        %v3241 = vsub.s32 0, %v3240
        %v3242 = vrot.slane %v3237, %v3241
        %v3252 = vunpack.c.l.b16 %v3229
        %v3253 = vunpack.c.l.b16 %v3230
        %v3254 = vunpack.c.l.b16 %v3231
        %v3255 = vunpack.c.l.b16 %v3232
        %v3256 = vunpack.c.l.b16 %v3233
        %v3257 = vunpack.c.l.b16 %v3234
        %v3258 = vunpack.c.l.b16 %v3235
        %v3259 = vunpack.c.l.b16 %v3236
        %v3260 = vpack.c.b16 %v3253, %v3252
        %v3261 = vpack.c.b16 %v3255, %v3254
        %v3262 = vpack.c.b16 %v3257, %v3256
        %v3263 = vpack.c.b16 %v3259, %v3258
        %vm3268 = vcmask 523264
        %v3270 = vsel %vm3268, %v3228, 0
        %3272 = vmatprep.subr.bf16.mxu0 0
        %3273 = vmatpush1.bf16.msra.mxu0 0
        %3274 = vmatprep.subr.bf16.mxu0 0
        %3275 = vmatpush1.bf16.msra.mxu0 0
        %3276 = vmatprep.subr.bf16.mxu0 0
        %3277 = vmatpush1.bf16.msra.mxu0 0
        %3278 = vmatprep.subr.bf16.mxu0 0
        %3279 = vmatpush1.bf16.msra.mxu0 0
        %3280 = vmatprep.subr.bf16.mxu0 0
        %3281 = vmatpush1.bf16.msra.mxu0 %v3263
        %3282 = vmatprep.subr.bf16.mxu0 0
        %3283 = vmatpush1.bf16.msra.mxu0 %v3262
        %3284 = vmatprep.subr.bf16.mxu0 0
        %3285 = vmatpush1.bf16.msra.mxu0 %v3261
        %3286 = vmatprep.subr.bf16.mxu0 0
        %3287 = vmatpush1.bf16.msra.mxu0 %v3260
        %3288 = vmatprep.subr.bf16.mxu0 0
        %3289 = vmatpush2.bf16.msra.mxu0 0
        %3290 = vmatprep.subr.bf16.mxu0 0
        %3291 = vmatpush2.bf16.msra.mxu0 0
        %3292 = vmatprep.subr.bf16.mxu0 0
        %3293 = vmatpush2.bf16.msra.mxu0 0
        %3294 = vmatprep.subr.bf16.mxu0 0
        %3295 = vmatpush2.bf16.msra.mxu0 0
        %3296 = vmatprep.subr.bf16.mxu0 0
        %3297 = vmatpush2.bf16.msra.mxu0 0
        %3298 = vmatprep.subr.bf16.mxu0 0
        %3299 = vmatpush2.bf16.msra.mxu0 0
        %3300 = vmatprep.subr.bf16.mxu0 0
        %3301 = vmatpush2.bf16.msra.mxu0 0
        %3302 = vmatprep.subr.bf16.mxu0 0
        %3303 = vmatpush2.bf16.msra.mxu0 0
        %3304 = vmatprep.mubr.bf16.mxu0 0
        %3305 = vmatmul.mubr.bf16.gmra.mxu0 %v3270
        %v3306 = vpop.f32.mrf.mxu0
        %v3307 = vadd.f32 %v3242, %v3306
        %v3308 = vpop.f32.mrf.mxu0
        %v3309 = vpop.f32.mrf.mxu0
        %v3310 = vadd.f32 %v3242, %v3309
        %v3311 = vpop.f32.mrf.mxu0
        %3312 = vdwg.mxu0
        %v3313 = vadd.f32 %v3156, %v3307
        %v3314 = vadd.f32 %v3157, %v3310
        %s3315 = scalar_lea.vmem %s790, 2
        %v3316 = vld [vmem:[%s3315] sm:$0x1]
        %s3317 = scalar_lea.vmem %s794, 2
        %v3318 = vld [vmem:[%s3317] sm:$0x1]
        %v3319 = vsel %vm846, %v3313, 0.0
        %3320 = vadd.xlane.f32.xlu0 %v3319
        %v3321 = vpop.xlane.xlu0 %3320
        %v3322 = vsel %vm846, %v3314, 0.0
        %3323 = vadd.xlane.f32.xlu0 %v3322
        %v3324 = vpop.xlane.xlu0 %3323
        %v3325 = vmul.f32 %v3321, %v1947
        %v3326 = vmul.f32 %v3324, %v1947
        %v3327 = vsub.f32 %v3313, %v3325
        %v3328 = vsub.f32 %v3314, %v3326
        %v3329 = vmul.f32 %v3327, %v3327
        %v3330 = vmul.f32 %v3328, %v3328
        %v3331 = vsel %vm846, %v3329, 0.0
        %3332 = vadd.xlane.f32.xlu0 %v3331
        %v3333 = vpop.xlane.xlu0 %3332
        %v3334 = vsel %vm846, %v3330, 0.0
        %3335 = vadd.xlane.f32.xlu0 %v3334
        %v3336 = vpop.xlane.xlu0 %3335
        %v3337 = vmul.f32 %v3333, %v1947
        %v3338 = vmul.f32 %v3336, %v1947
        %v3339 = vadd.f32 %v3337, 1e-05
        %v3340 = vadd.f32 %v3338, 1e-05
        %v3341 = vrsqrt.pop %v3339
        %v3342 = vrsqrt.pop %v3340
        %v3343 = vmul.f32 %v3327, %v3341
        %v3344 = vmul.f32 %v3328, %v3342
        %v3346 = vlaneseq
        %v3347 = vshrl.u32 %v3346, 7
        %v3348 = vsub.s32 0, %v3347
        %v3349 = vrot.slane %v3316, %v3348
        %v3351 = vmul.f32 %v3343, %v3349
        %v3352 = vmul.f32 %v3344, %v3349
        %v3354 = vlaneseq
        %v3355 = vshrl.u32 %v3354, 7
        %v3356 = vsub.s32 0, %v3355
        %v3357 = vrot.slane %v3318, %v3356
        %v3359 = vadd.f32 %v3351, %v3357
        %v3360 = vadd.f32 %v3352, %v3357
        %3361 = vst.msk [vmem:[#allocation2] sm:$0xff] %vm846, %v3359
        %3362 = vst.msk [vmem:[#allocation2 + $0x8] sm:$0xff] %vm846, %v3360
        %p3363 = scmp.eq.s32.totalorder %s33, 1
        // Predicated region
        $region109: #{tpu_custom_call.1} parent=75 // pred_check
          %p3364 = pneg %p3363
        $region110: #{tpu_custom_call.1} parent=75 // pred_check_branch
          %3366 = sbr.rel (%p3364) target = $region112
        $region111: #{tpu_custom_call.1} parent=75 // pred_region
          %3367 = vst.msk [vmem:[#allocation14] sm:$0xff] %vm846, %v3359
          %3368 = vst.msk [vmem:[#allocation14 + $0x8] sm:$0xff] %vm846, %v3360
        $region112: #{tpu_custom_call.1} parent=75 // pred_fallthru
          _
        // Predicated region
        $region113: #{tpu_custom_call.1} parent=75 // pred_check
          %p3369 = pneg %p417
        $region114: #{tpu_custom_call.1} parent=75 // pred_check_branch
          %3371 = sbr.rel (%p3369) target = $region116
        $region115: #{tpu_custom_call.1} parent=75 // pred_region
          %s3372 = smul.u32 2, %s32
          %s3374 = ssub.s32 256, 256
          %3375 = vsyncadd [#allocation6], %s3374
          %s3376 = smul.addr %s3372, 128
          %s3377 = scalar_lea.hbm %s14, %s3376
          %s3378 = sshll.u32 [#allocation14], 4
          %s3379 = int_to_ptr.vmem [resolvable:$true] %s3378
          %3384 = dma.vmem_to_hbm [thread:$0]  %s3379, 256, %s3377, [#allocation6], 128, 128, 8
        $region116: #{tpu_custom_call.1} parent=75 // pred_fallthru
          _
        // Predicated region
        $region117: #{tpu_custom_call.1} parent=75 // pred_check
          %p3385 = pneg %p417
        $region118: #{tpu_custom_call.1} parent=75 // pred_check_branch
          %3387 = sbr.rel (%p3385) target = $region120
        $region119: #{tpu_custom_call.1} parent=75 // pred_region
          %3388 = dma.done [#allocation6], 256
        $region120: #{tpu_custom_call.1} parent=75 // pred_fallthru
          _
      $region76: #{tpu_custom_call.1} parent=5 // pred_fallthru
        _
      %p3389 = scmp.le.s32.totalorder 2, %s23
      // Predicated region
      $region121: #{tpu_custom_call.1} parent=5 // pred_check
        %p3390 = pneg %p3389
      $region122: #{tpu_custom_call.1} parent=5 // pred_check_branch
        %3392 = sbr.rel (%p3390) target = $region124
      $region123: #{tpu_custom_call.1} parent=5 // pred_region
        %s3393 = ssub.s32 %s23, 2
      $region124: #{tpu_custom_call.1} parent=5 // pred_fallthru
        _
    $region6: #{tpu_custom_call.1} parent=1 // loop_footer
      %s27 = sadd.s32 1, %s23
    $region7: #{tpu_custom_call.1} parent=1 // loop_footer_branch
      %22 = sbr.rel target = $region3
    $region8: #{tpu_custom_call.1} parent=1 // loop_exit
      _
    %3394 = vsyncpa [#allocation5], 1
    %s3395 = scalar_lea.sflag [#allocation5], 1
    %3396 = vsyncpa %s3395, 1
    %3397 = vsyncpa [#allocation8], 1
    %3398 = vsyncpa [#allocation6], 1
    %s3399 = scalar_lea.sflag [#allocation6], 1
    %3400 = vsyncpa %s3399, 1

</llo_original>
